<compile_context>
chip_gen: v6e
topology: v6e:2x2x1
jax: 0.10.0
libtpu: 0.0.40
codegen_flags: <defaults>
</compile_context>

<pallas_src>
import functools

import jax
import jax.numpy as jnp
from jax.experimental import pallas as pl
from jax.experimental.pallas import tpu as pltpu


# ----------------------------------------------------------------------------
# Fused kernel: one batch element per grid step
# ----------------------------------------------------------------------------
def _decoder_layer_kernel(
    dec_ref, enc_ref, smask_ref, emask_ref,
    # self-attention params (per-head weights)
    s_wq, s_wk, s_wv, s_wo, s_g, s_b,
    # encoder-decoder attention params (per-head weights)
    e_wq, e_wk, e_wv, e_wo, e_g, e_b,
    # position-wise FFN params
    w1_ref, b1_ref, w2_ref, b2_ref, f_g, f_b,
    out_ref,
    *, n_head, d_k):
    x = dec_ref[0].astype(jnp.float32)      # (Ld, D)
    enc = enc_ref[0].astype(jnp.float32)    # (Le, D)
    inv_temp = 1.0 / (d_k ** 0.5)

    def layer_norm(y, g_ref, b_ref):
        d = y.shape[-1]
        mean = jnp.sum(y, axis=-1, keepdims=True) * (1.0 / d)
        yc = y - mean
        var = jnp.sum(yc * yc, axis=-1, keepdims=True) * (1.0 / d)
        return yc * jax.lax.rsqrt(var + 1e-6) * g_ref[...] + b_ref[...]

    def mha(x_q, x_kv, mask, wq_ref, wk_ref, wv_ref, wo_ref, g_ref, b_ref):
        lq, d_model = x_q.shape
        lk = x_kv.shape[0]
        # mask comparison hoisted out of any per-head work.  0 => masked out.
        masked = (mask == 0.0)[None, :, :]                    # (1, Lq, Lk)

        # Head-batched projections: broadcast the activation over the (small)
        # head axis and contract D once per head in a single batched matmul.
        xq_b = jnp.broadcast_to(x_q[None], (n_head, lq, d_model))
        xk_b = jnp.broadcast_to(x_kv[None], (n_head, lk, d_model))

        qh = jnp.einsum('hqd,hde->hqe', xq_b, wq_ref[...],
                        preferred_element_type=jnp.float32) * inv_temp
        kh = jnp.einsum('hkd,hde->hke', xk_b, wk_ref[...],
                        preferred_element_type=jnp.float32)
        vh = jnp.einsum('hkd,hde->hke', xk_b, wv_ref[...],
                        preferred_element_type=jnp.float32)

        # Batched attention scores / softmax over all heads at once.
        scores = jnp.einsum('hqe,hke->hqk', qh, kh,
                            preferred_element_type=jnp.float32)
        scores = jnp.where(masked, -1.0e9, scores)
        scores = scores - jnp.max(scores, axis=-1, keepdims=True)
        p = jnp.exp(scores)
        p = p * pl.reciprocal(jnp.sum(p, axis=-1, keepdims=True), approx=True)
        # TODO(synk): attention dropout skipped (eval mode / identity).

        ctx = jnp.einsum('hqk,hke->hqe', p, vh,
                         preferred_element_type=jnp.float32)   # (H, Lq, d_v)
        # Output projection: concat(ctx_h) @ Wo == sum_h ctx_h @ Wo_h.
        proj = jnp.sum(
            jnp.einsum('hqe,hed->hqd', ctx, wo_ref[...],
                       preferred_element_type=jnp.float32),
            axis=0)                                            # (Lq, D)
        # TODO(synk): post-projection dropout skipped (eval mode / identity).
        return layer_norm(proj + x_q, g_ref, b_ref)

    # 1) masked self-attention over the decoder input
    y = mha(x, x, smask_ref[0], s_wq, s_wk, s_wv, s_wo, s_g, s_b)
    # 2) encoder-decoder cross attention
    y = mha(y, enc, emask_ref[0], e_wq, e_wk, e_wv, e_wo, e_g, e_b)
    # 3) position-wise feed forward + residual + LayerNorm
    h = jnp.maximum(
        jnp.dot(y, w1_ref[...], preferred_element_type=jnp.float32) + b1_ref[...],
        0.0)
    z = jnp.dot(h, w2_ref[...], preferred_element_type=jnp.float32) + b2_ref[...]
    # TODO(synk): FFN dropout skipped (eval mode / identity).
    out = layer_norm(z + y, f_g, f_b)
    out_ref[0] = out.astype(out_ref.dtype)


# ----------------------------------------------------------------------------
# Wrapper
# ----------------------------------------------------------------------------
def decoder_layer(dec_input, enc_output, slf_attn_mask, dec_enc_attn_mask,
                  params, *, n_head):
    B, Ld, D = dec_input.shape
    Le = enc_output.shape[1]
    d_k = D // n_head
    d_v = D // n_head
    d_inner = params["pos_ffn"]["w1"].shape[1]

    # Pre-split projection weights per head on the host (plain JAX) so the
    # kernel only does head-leading batched contractions (no in-kernel
    # reshape/transpose/concat of activations).
    def per_head(p):
        return {
            "wq": p["wq"].reshape(D, n_head, d_k).transpose(1, 0, 2),   # (H, D, dk)
            "wk": p["wk"].reshape(D, n_head, d_k).transpose(1, 0, 2),   # (H, D, dk)
            "wv": p["wv"].reshape(D, n_head, d_v).transpose(1, 0, 2),   # (H, D, dv)
            "wo": p["wo"].reshape(n_head, d_v, D),                      # (H, dv, D)
            "ln_g": p["ln_g"], "ln_b": p["ln_b"],
        }

    sp = per_head(params["slf_attn"])
    ep = per_head(params["enc_attn"])
    fp = params["pos_ffn"]

    kernel = functools.partial(_decoder_layer_kernel, n_head=n_head, d_k=d_k)

    full2 = lambda b: (0, 0)
    full3 = lambda b: (0, 0, 0)

    attn_param_specs = [
        pl.BlockSpec((n_head, D, d_k), full3),     # Wq per head
        pl.BlockSpec((n_head, D, d_k), full3),     # Wk per head
        pl.BlockSpec((n_head, D, d_v), full3),     # Wv per head
        pl.BlockSpec((n_head, d_v, D), full3),     # Wo per head
        pl.BlockSpec((1, D), full2),               # ln gamma
        pl.BlockSpec((1, D), full2),               # ln beta
    ]

    in_specs = (
        [
            pl.BlockSpec((1, Ld, D), lambda b: (b, 0, 0)),    # dec_input
            pl.BlockSpec((1, Le, D), lambda b: (b, 0, 0)),    # enc_output
            pl.BlockSpec((1, Ld, Ld), lambda b: (b, 0, 0)),   # self-attn mask
            pl.BlockSpec((1, Ld, Le), lambda b: (b, 0, 0)),   # cross-attn mask
        ]
        + attn_param_specs                                    # self-attn params
        + attn_param_specs                                    # enc-attn params
        + [
            pl.BlockSpec((D, d_inner), full2),                # W1
            pl.BlockSpec((1, d_inner), full2),                # b1
            pl.BlockSpec((d_inner, D), full2),                # W2
            pl.BlockSpec((1, D), full2),                      # b2
            pl.BlockSpec((1, D), full2),                      # ln gamma
            pl.BlockSpec((1, D), full2),                      # ln beta
        ]
    )

    return pl.pallas_call(
        kernel,
        out_shape=jax.ShapeDtypeStruct((B, Ld, D), dec_input.dtype),
        grid_spec=pltpu.PrefetchScalarGridSpec(
            num_scalar_prefetch=0,
            grid=(B,),                      # one batch element per grid step
            in_specs=in_specs,
            out_specs=pl.BlockSpec((1, Ld, D), lambda b: (b, 0, 0)),
        ),
        compiler_params=pltpu.CompilerParams(
            dimension_semantics=("parallel",),   # shards across v7x's 2 TCs
            vmem_limit_bytes=32 * 1024 * 1024,
        ),
    )(dec_input, enc_output, slf_attn_mask, dec_enc_attn_mask,
      sp["wq"], sp["wk"], sp["wv"], sp["wo"], sp["ln_g"], sp["ln_b"],
      ep["wq"], ep["wk"], ep["wv"], ep["wo"], ep["ln_g"], ep["ln_b"],
      fp["w1"], fp["b1"], fp["w2"], fp["b2"], fp["ln_g"], fp["ln_b"])


# ----------------------------------------------------------------------------
# Pure-JAX reference (mirrors the PyTorch module, eval mode)
# ----------------------------------------------------------------------------
def _reference_decoder_layer(dec_input, enc_output, slf_mask, enc_mask,
                             params, *, n_head):
    def ln(x, g, b):
        m = jnp.mean(x, axis=-1, keepdims=True)
        v = jnp.mean((x - m) ** 2, axis=-1, keepdims=True)
        return (x - m) / jnp.sqrt(v + 1e-6) * g + b

    def mha(q_in, kv_in, mask, p):
        B, Lq, D = q_in.shape
        Lk = kv_in.shape[1]
        dk = D // n_head
        Q = (q_in @ p["wq"]).reshape(B, Lq, n_head, dk).transpose(0, 2, 1, 3)
        K = (kv_in @ p["wk"]).reshape(B, Lk, n_head, dk).transpose(0, 2, 1, 3)
        V = (kv_in @ p["wv"]).reshape(B, Lk, n_head, dk).transpose(0, 2, 1, 3)
        attn = (Q / (dk ** 0.5)) @ jnp.swapaxes(K, -1, -2)
        attn = jnp.where(mask[:, None, :, :] == 0, -1.0e9, attn)
        attn = jax.nn.softmax(attn, axis=-1)
        ctx = (attn @ V).transpose(0, 2, 1, 3).reshape(B, Lq, D)
        return ln(ctx @ p["wo"] + q_in, p["ln_g"], p["ln_b"])

    y = mha(dec_input, dec_input, slf_mask, params["slf_attn"])
    y = mha(y, enc_output, enc_mask, params["enc_attn"])
    fp = params["pos_ffn"]
    h = jax.nn.relu(y @ fp["w1"] + fp["b1"])
    z = h @ fp["w2"] + fp["b2"]
    return ln(z + y, fp["ln_g"], fp["ln_b"])


# ----------------------------------------------------------------------------
# Deterministic parameter construction
# ----------------------------------------------------------------------------
def init_mha_params(key, d_model, n_head):
    d_k = d_model // n_head
    d_v = d_model // n_head
    k1, k2, k3, k4 = jax.random.split(key, 4)
    s = 0.02
    return {
        "wq": s * jax.random.normal(k1, (d_model, n_head * d_k), jnp.float32),
        "wk": s * jax.random.normal(k2, (d_model, n_head * d_k), jnp.float32),
        "wv": s * jax.random.normal(k3, (d_model, n_head * d_v), jnp.float32),
        "wo": s * jax.random.normal(k4, (n_head * d_v, d_model), jnp.float32),
        "ln_g": jnp.ones((1, d_model), jnp.float32),
        "ln_b": jnp.zeros((1, d_model), jnp.float32),
    }


def init_ffn_params(key, d_model, d_inner):
    k1, k2 = jax.random.split(key, 2)
    s = 0.02
    return {
        "w1": s * jax.random.normal(k1, (d_model, d_inner), jnp.float32),
        "b1": jnp.zeros((1, d_inner), jnp.float32),
        "w2": s * jax.random.normal(k2, (d_inner, d_model), jnp.float32),
        "b2": jnp.zeros((1, d_model), jnp.float32),
        "ln_g": jnp.ones((1, d_model), jnp.float32),
        "ln_b": jnp.zeros((1, d_model), jnp.float32),
    }


# ----------------------------------------------------------------------------
# Main
# ----------------------------------------------------------------------------
if __name__ == "__main__":
    B = 2            # batch
    L_DEC = 8        # decoder sequence length
    L_ENC = 8        # encoder sequence length
    D_MODEL = 32
    D_INNER = 64
    N_HEAD = 4

    key = jax.random.PRNGKey(0)
    k_in1, k_in2, k_p1, k_p2, k_p3 = jax.random.split(key, 5)

    dec_input = jax.random.normal(k_in1, (B, L_DEC, D_MODEL), jnp.float32)
    enc_output = jax.random.normal(k_in2, (B, L_ENC, D_MODEL), jnp.float32)

    # causal mask for self-attention; all-ones (no masking) for cross-attention
    causal = jnp.tril(jnp.ones((L_DEC, L_DEC), jnp.float32))
    slf_attn_mask = jnp.broadcast_to(causal, (B, L_DEC, L_DEC))
    dec_enc_attn_mask = jnp.ones((B, L_DEC, L_ENC), jnp.float32)

    params = {
        "slf_attn": init_mha_params(k_p1, D_MODEL, N_HEAD),
        "enc_attn": init_mha_params(k_p2, D_MODEL, N_HEAD),
        "pos_ffn": init_ffn_params(k_p3, D_MODEL, D_INNER),
    }

    out = decoder_layer(dec_input, enc_output, slf_attn_mask,
                        dec_enc_attn_mask, params, n_head=N_HEAD)
    out = jax.block_until_ready(out)
    assert out.shape == (B, L_DEC, D_MODEL)
    assert bool(jnp.all(jnp.isfinite(out)))

    ref = _reference_decoder_layer(dec_input, enc_output, slf_attn_mask,
                                   dec_enc_attn_mask, params, n_head=N_HEAD)
    max_err = float(jnp.max(jnp.abs(out - ref)))
    assert max_err < 1e-1, f"max abs error vs reference: {max_err}"

    print("KERNEL_OK")
</pallas_src>

<mosaic_0001>
module attributes {stable_mosaic.version = 11 : i64} {
  func.func @_decoder_layer_kernel(%arg0: i32, %arg1: memref<1x8x32xf32, #tpu.memory_space<vmem>>, %arg2: memref<1x8x32xf32, #tpu.memory_space<vmem>>, %arg3: memref<1x8x8xf32, #tpu.memory_space<vmem>>, %arg4: memref<1x8x8xf32, #tpu.memory_space<vmem>>, %arg5: memref<4x32x8xf32, #tpu.memory_space<vmem>>, %arg6: memref<4x32x8xf32, #tpu.memory_space<vmem>>, %arg7: memref<4x32x8xf32, #tpu.memory_space<vmem>>, %arg8: memref<4x8x32xf32, #tpu.memory_space<vmem>>, %arg9: memref<1x32xf32, #tpu.memory_space<vmem>>, %arg10: memref<1x32xf32, #tpu.memory_space<vmem>>, %arg11: memref<4x32x8xf32, #tpu.memory_space<vmem>>, %arg12: memref<4x32x8xf32, #tpu.memory_space<vmem>>, %arg13: memref<4x32x8xf32, #tpu.memory_space<vmem>>, %arg14: memref<4x8x32xf32, #tpu.memory_space<vmem>>, %arg15: memref<1x32xf32, #tpu.memory_space<vmem>>, %arg16: memref<1x32xf32, #tpu.memory_space<vmem>>, %arg17: memref<32x64xf32, #tpu.memory_space<vmem>>, %arg18: memref<1x64xf32, #tpu.memory_space<vmem>>, %arg19: memref<64x32xf32, #tpu.memory_space<vmem>>, %arg20: memref<1x32xf32, #tpu.memory_space<vmem>>, %arg21: memref<1x32xf32, #tpu.memory_space<vmem>>, %arg22: memref<1x32xf32, #tpu.memory_space<vmem>>, %arg23: memref<1x8x32xf32, #tpu.memory_space<vmem>>) attributes {dimension_semantics = [#tpu.dimension_semantics<parallel>], iteration_bounds = array<i64: 2>, scalar_prefetch = 0 : i64, scratch_operands = 0 : i64, tpu.core_type = #tpu.core_type<tc>, window_params = [{transform_indices = @transform_0, window_bounds = array<i64: 1, 8, 32>}, {transform_indices = @transform_1, window_bounds = array<i64: 1, 8, 32>}, {transform_indices = @transform_2, window_bounds = array<i64: 1, 8, 8>}, {transform_indices = @transform_3, window_bounds = array<i64: 1, 8, 8>}, {pipeline_mode = #tpu.pipeline_mode<synchronous>, transform_indices = @transform_4, window_bounds = array<i64: 4, 32, 8>}, {pipeline_mode = #tpu.pipeline_mode<synchronous>, transform_indices = @transform_5, window_bounds = array<i64: 4, 32, 8>}, {pipeline_mode = #tpu.pipeline_mode<synchronous>, transform_indices = @transform_6, window_bounds = array<i64: 4, 32, 8>}, {pipeline_mode = #tpu.pipeline_mode<synchronous>, transform_indices = @transform_7, window_bounds = array<i64: 4, 8, 32>}, {pipeline_mode = #tpu.pipeline_mode<synchronous>, transform_indices = @transform_8, window_bounds = array<i64: 1, 32>}, {pipeline_mode = #tpu.pipeline_mode<synchronous>, transform_indices = @transform_9, window_bounds = array<i64: 1, 32>}, {pipeline_mode = #tpu.pipeline_mode<synchronous>, transform_indices = @transform_10, window_bounds = array<i64: 4, 32, 8>}, {pipeline_mode = #tpu.pipeline_mode<synchronous>, transform_indices = @transform_11, window_bounds = array<i64: 4, 32, 8>}, {pipeline_mode = #tpu.pipeline_mode<synchronous>, transform_indices = @transform_12, window_bounds = array<i64: 4, 32, 8>}, {pipeline_mode = #tpu.pipeline_mode<synchronous>, transform_indices = @transform_13, window_bounds = array<i64: 4, 8, 32>}, {pipeline_mode = #tpu.pipeline_mode<synchronous>, transform_indices = @transform_14, window_bounds = array<i64: 1, 32>}, {pipeline_mode = #tpu.pipeline_mode<synchronous>, transform_indices = @transform_15, window_bounds = array<i64: 1, 32>}, {pipeline_mode = #tpu.pipeline_mode<synchronous>, transform_indices = @transform_16, window_bounds = array<i64: 32, 64>}, {pipeline_mode = #tpu.pipeline_mode<synchronous>, transform_indices = @transform_17, window_bounds = array<i64: 1, 64>}, {pipeline_mode = #tpu.pipeline_mode<synchronous>, transform_indices = @transform_18, window_bounds = array<i64: 64, 32>}, {pipeline_mode = #tpu.pipeline_mode<synchronous>, transform_indices = @transform_19, window_bounds = array<i64: 1, 32>}, {pipeline_mode = #tpu.pipeline_mode<synchronous>, transform_indices = @transform_20, window_bounds = array<i64: 1, 32>}, {pipeline_mode = #tpu.pipeline_mode<synchronous>, transform_indices = @transform_21, window_bounds = array<i64: 1, 32>}, {transform_indices = @transform_22, window_bounds = array<i64: 1, 8, 32>}]} {
    %c0 = arith.constant 0 : index
    %c0_0 = arith.constant 0 : index
    %c0_1 = arith.constant 0 : index
    %0 = vector.load %arg1[%c0, %c0_0, %c0_1] : memref<1x8x32xf32, #tpu.memory_space<vmem>>, vector<1x8x32xf32>
    %1 = vector.shape_cast %0 : vector<1x8x32xf32> to vector<8x32xf32>
    %c0_2 = arith.constant 0 : index
    %c0_3 = arith.constant 0 : index
    %c0_4 = arith.constant 0 : index
    %2 = vector.load %arg2[%c0_2, %c0_3, %c0_4] : memref<1x8x32xf32, #tpu.memory_space<vmem>>, vector<1x8x32xf32>
    %3 = vector.shape_cast %2 : vector<1x8x32xf32> to vector<8x32xf32>
    %c0_5 = arith.constant 0 : index
    %c0_6 = arith.constant 0 : index
    %c0_7 = arith.constant 0 : index
    %4 = vector.load %arg3[%c0_5, %c0_6, %c0_7] : memref<1x8x8xf32, #tpu.memory_space<vmem>>, vector<1x8x8xf32>
    %5 = vector.shape_cast %4 : vector<1x8x8xf32> to vector<8x8xf32>
    %cst = arith.constant 0.000000e+00 : f32
    %6 = vector.broadcast %cst : f32 to vector<8x8xf32>
    %7 = arith.cmpf oeq, %5, %6 : vector<8x8xf32>
    %8 = vector.shape_cast %7 : vector<8x8xi1> to vector<1x8x8xi1>
    %9 = vector.shape_cast %1 : vector<8x32xf32> to vector<1x8x32xf32>
    %10 = vector.shape_cast %9 : vector<1x8x32xf32> to vector<1x8x32xf32>
    %11 = vector.broadcast %10 : vector<1x8x32xf32> to vector<4x8x32xf32>
    %12 = vector.shape_cast %1 : vector<8x32xf32> to vector<1x8x32xf32>
    %13 = vector.shape_cast %12 : vector<1x8x32xf32> to vector<1x8x32xf32>
    %14 = vector.broadcast %13 : vector<1x8x32xf32> to vector<4x8x32xf32>
    %c0_8 = arith.constant 0 : index
    %c0_9 = arith.constant 0 : index
    %c0_10 = arith.constant 0 : index
    %15 = vector.load %arg5[%c0_8, %c0_9, %c0_10] : memref<4x32x8xf32, #tpu.memory_space<vmem>>, vector<4x32x8xf32>
    "tpu.trace_start"() <{level = 10 : i32, message = "hqd,hde->hqe"}> : () -> ()
    %cst_11 = arith.constant dense<0.000000e+00> : vector<4x8x8xf32>
    %16 = tpu.matmul %11, %15, %cst_11 {dimension_numbers = #tpu.dot_dimension_numbers<[2], [1], [1], [2], [0, 0, 0, 1, 1, 2], [0], [0]>} : vector<4x8x32xf32>, vector<4x32x8xf32>, vector<4x8x8xf32> -> vector<4x8x8xf32>
    "tpu.trace_stop"() : () -> ()
    %cst_12 = arith.constant 0.353553385 : f32
    %17 = vector.broadcast %cst_12 : f32 to vector<4x8x8xf32>
    %18 = arith.mulf %16, %17 : vector<4x8x8xf32>
    %c0_13 = arith.constant 0 : index
    %c0_14 = arith.constant 0 : index
    %c0_15 = arith.constant 0 : index
    %19 = vector.load %arg6[%c0_13, %c0_14, %c0_15] : memref<4x32x8xf32, #tpu.memory_space<vmem>>, vector<4x32x8xf32>
    "tpu.trace_start"() <{level = 10 : i32, message = "hkd,hde->hke"}> : () -> ()
    %cst_16 = arith.constant dense<0.000000e+00> : vector<4x8x8xf32>
    %20 = tpu.matmul %14, %19, %cst_16 {dimension_numbers = #tpu.dot_dimension_numbers<[2], [1], [1], [2], [0, 0, 0, 1, 1, 2], [0], [0]>} : vector<4x8x32xf32>, vector<4x32x8xf32>, vector<4x8x8xf32> -> vector<4x8x8xf32>
    "tpu.trace_stop"() : () -> ()
    %c0_17 = arith.constant 0 : index
    %c0_18 = arith.constant 0 : index
    %c0_19 = arith.constant 0 : index
    %21 = vector.load %arg7[%c0_17, %c0_18, %c0_19] : memref<4x32x8xf32, #tpu.memory_space<vmem>>, vector<4x32x8xf32>
    "tpu.trace_start"() <{level = 10 : i32, message = "hkd,hde->hke"}> : () -> ()
    %cst_20 = arith.constant dense<0.000000e+00> : vector<4x8x8xf32>
    %22 = tpu.matmul %14, %21, %cst_20 {dimension_numbers = #tpu.dot_dimension_numbers<[2], [1], [1], [2], [0, 0, 0, 1, 1, 2], [0], [0]>} : vector<4x8x32xf32>, vector<4x32x8xf32>, vector<4x8x8xf32> -> vector<4x8x8xf32>
    "tpu.trace_stop"() : () -> ()
    "tpu.trace_start"() <{level = 10 : i32, message = "hqe,hke->hqk"}> : () -> ()
    %cst_21 = arith.constant dense<0.000000e+00> : vector<4x8x8xf32>
    %23 = tpu.matmul %18, %20, %cst_21 {dimension_numbers = #tpu.dot_dimension_numbers<[2], [2], [1], [1], [0, 0, 0, 1, 1, 1], [0], [0]>} : vector<4x8x8xf32>, vector<4x8x8xf32>, vector<4x8x8xf32> -> vector<4x8x8xf32>
    %cst_22 = arith.constant -1.000000e+09 : f32
    "tpu.trace_stop"() : () -> ()
    %24 = vector.shape_cast %8 : vector<1x8x8xi1> to vector<1x8x8xi1>
    %25 = vector.broadcast %24 : vector<1x8x8xi1> to vector<4x8x8xi1>
    %26 = vector.broadcast %cst_22 : f32 to vector<4x8x8xf32>
    %27 = arith.select %25, %26, %23 : vector<4x8x8xi1>, vector<4x8x8xf32>
    %cst_23 = arith.constant dense<0xFF800000> : vector<4x8xf32>
    %28 = vector.multi_reduction <maximumf>, %27, %cst_23 [2] : vector<4x8x8xf32> to vector<4x8xf32>
    %29 = vector.shape_cast %28 : vector<4x8xf32> to vector<4x8x1xf32>
    %30 = vector.broadcast %29 : vector<4x8x1xf32> to vector<4x8x8xf32>
    %31 = arith.subf %27, %30 : vector<4x8x8xf32>
    %32 = math.exp %31 : vector<4x8x8xf32>
    %cst_24 = arith.constant dense<0.000000e+00> : vector<4x8xf32>
    %33 = vector.multi_reduction <add>, %32, %cst_24 [2] : vector<4x8x8xf32> to vector<4x8xf32>
    %34 = vector.shape_cast %33 : vector<4x8xf32> to vector<4x8x1xf32>
    %35 = tpu.reciprocal %34 {approx = true} : vector<4x8x1xf32> -> vector<4x8x1xf32>
    %36 = vector.broadcast %35 : vector<4x8x1xf32> to vector<4x8x8xf32>
    %37 = arith.mulf %32, %36 : vector<4x8x8xf32>
    "tpu.trace_start"() <{level = 10 : i32, message = "hqk,hke->hqe"}> : () -> ()
    %cst_25 = arith.constant dense<0.000000e+00> : vector<4x8x8xf32>
    %38 = tpu.matmul %37, %22, %cst_25 {dimension_numbers = #tpu.dot_dimension_numbers<[2], [1], [1], [2], [0, 0, 0, 1, 1, 2], [0], [0]>} : vector<4x8x8xf32>, vector<4x8x8xf32>, vector<4x8x8xf32> -> vector<4x8x8xf32>
    "tpu.trace_stop"() : () -> ()
    %c0_26 = arith.constant 0 : index
    %c0_27 = arith.constant 0 : index
    %c0_28 = arith.constant 0 : index
    %39 = vector.load %arg8[%c0_26, %c0_27, %c0_28] : memref<4x8x32xf32, #tpu.memory_space<vmem>>, vector<4x8x32xf32>
    "tpu.trace_start"() <{level = 10 : i32, message = "hqe,hed->hqd"}> : () -> ()
    %cst_29 = arith.constant dense<0.000000e+00> : vector<4x8x32xf32>
    %40 = tpu.matmul %38, %39, %cst_29 {dimension_numbers = #tpu.dot_dimension_numbers<[2], [1], [1], [2], [0, 0, 0, 1, 1, 2], [0], [0]>} : vector<4x8x8xf32>, vector<4x8x32xf32>, vector<4x8x32xf32> -> vector<4x8x32xf32>
    "tpu.trace_stop"() : () -> ()
    %cst_30 = arith.constant dense<0.000000e+00> : vector<8x32xf32>
    %41 = vector.multi_reduction <add>, %40, %cst_30 [0] : vector<4x8x32xf32> to vector<8x32xf32>
    %42 = arith.addf %41, %1 : vector<8x32xf32>
    %cst_31 = arith.constant dense<0.000000e+00> : vector<8xf32>
    %43 = vector.multi_reduction <add>, %42, %cst_31 [1] : vector<8x32xf32> to vector<8xf32>
    %44 = vector.shape_cast %43 : vector<8xf32> to vector<8x1xf32>
    %cst_32 = arith.constant 3.125000e-02 : f32
    %45 = vector.broadcast %cst_32 : f32 to vector<8x1xf32>
    %46 = arith.mulf %44, %45 : vector<8x1xf32>
    %47 = vector.broadcast %46 : vector<8x1xf32> to vector<8x32xf32>
    %48 = arith.subf %42, %47 : vector<8x32xf32>
    %49 = arith.mulf %48, %48 : vector<8x32xf32>
    %cst_33 = arith.constant dense<0.000000e+00> : vector<8xf32>
    %50 = vector.multi_reduction <add>, %49, %cst_33 [1] : vector<8x32xf32> to vector<8xf32>
    %51 = vector.shape_cast %50 : vector<8xf32> to vector<8x1xf32>
    %cst_34 = arith.constant 3.125000e-02 : f32
    %52 = vector.broadcast %cst_34 : f32 to vector<8x1xf32>
    %53 = arith.mulf %51, %52 : vector<8x1xf32>
    %cst_35 = arith.constant 9.99999997E-7 : f32
    %54 = vector.broadcast %cst_35 : f32 to vector<8x1xf32>
    %55 = arith.addf %53, %54 : vector<8x1xf32>
    %56 = math.rsqrt %55 : vector<8x1xf32>
    %57 = vector.broadcast %56 : vector<8x1xf32> to vector<8x32xf32>
    %58 = arith.mulf %48, %57 : vector<8x32xf32>
    %c0_36 = arith.constant 0 : index
    %c0_37 = arith.constant 0 : index
    %59 = vector.load %arg9[%c0_36, %c0_37] : memref<1x32xf32, #tpu.memory_space<vmem>>, vector<1x32xf32>
    %60 = vector.broadcast %59 : vector<1x32xf32> to vector<8x32xf32>
    %61 = arith.mulf %58, %60 : vector<8x32xf32>
    %c0_38 = arith.constant 0 : index
    %c0_39 = arith.constant 0 : index
    %62 = vector.load %arg10[%c0_38, %c0_39] : memref<1x32xf32, #tpu.memory_space<vmem>>, vector<1x32xf32>
    %63 = vector.broadcast %62 : vector<1x32xf32> to vector<8x32xf32>
    %64 = arith.addf %61, %63 : vector<8x32xf32>
    %c0_40 = arith.constant 0 : index
    %c0_41 = arith.constant 0 : index
    %c0_42 = arith.constant 0 : index
    %65 = vector.load %arg4[%c0_40, %c0_41, %c0_42] : memref<1x8x8xf32, #tpu.memory_space<vmem>>, vector<1x8x8xf32>
    %66 = vector.shape_cast %65 : vector<1x8x8xf32> to vector<8x8xf32>
    %cst_43 = arith.constant 0.000000e+00 : f32
    %67 = vector.broadcast %cst_43 : f32 to vector<8x8xf32>
    %68 = arith.cmpf oeq, %66, %67 : vector<8x8xf32>
    %69 = vector.shape_cast %68 : vector<8x8xi1> to vector<1x8x8xi1>
    %70 = vector.shape_cast %64 : vector<8x32xf32> to vector<1x8x32xf32>
    %71 = vector.shape_cast %70 : vector<1x8x32xf32> to vector<1x8x32xf32>
    %72 = vector.broadcast %71 : vector<1x8x32xf32> to vector<4x8x32xf32>
    %73 = vector.shape_cast %3 : vector<8x32xf32> to vector<1x8x32xf32>
    %74 = vector.shape_cast %73 : vector<1x8x32xf32> to vector<1x8x32xf32>
    %75 = vector.broadcast %74 : vector<1x8x32xf32> to vector<4x8x32xf32>
    %c0_44 = arith.constant 0 : index
    %c0_45 = arith.constant 0 : index
    %c0_46 = arith.constant 0 : index
    %76 = vector.load %arg11[%c0_44, %c0_45, %c0_46] : memref<4x32x8xf32, #tpu.memory_space<vmem>>, vector<4x32x8xf32>
    "tpu.trace_start"() <{level = 10 : i32, message = "hqd,hde->hqe"}> : () -> ()
    %cst_47 = arith.constant dense<0.000000e+00> : vector<4x8x8xf32>
    %77 = tpu.matmul %72, %76, %cst_47 {dimension_numbers = #tpu.dot_dimension_numbers<[2], [1], [1], [2], [0, 0, 0, 1, 1, 2], [0], [0]>} : vector<4x8x32xf32>, vector<4x32x8xf32>, vector<4x8x8xf32> -> vector<4x8x8xf32>
    "tpu.trace_stop"() : () -> ()
    %cst_48 = arith.constant 0.353553385 : f32
    %78 = vector.broadcast %cst_48 : f32 to vector<4x8x8xf32>
    %79 = arith.mulf %77, %78 : vector<4x8x8xf32>
    %c0_49 = arith.constant 0 : index
    %c0_50 = arith.constant 0 : index
    %c0_51 = arith.constant 0 : index
    %80 = vector.load %arg12[%c0_49, %c0_50, %c0_51] : memref<4x32x8xf32, #tpu.memory_space<vmem>>, vector<4x32x8xf32>
    "tpu.trace_start"() <{level = 10 : i32, message = "hkd,hde->hke"}> : () -> ()
    %cst_52 = arith.constant dense<0.000000e+00> : vector<4x8x8xf32>
    %81 = tpu.matmul %75, %80, %cst_52 {dimension_numbers = #tpu.dot_dimension_numbers<[2], [1], [1], [2], [0, 0, 0, 1, 1, 2], [0], [0]>} : vector<4x8x32xf32>, vector<4x32x8xf32>, vector<4x8x8xf32> -> vector<4x8x8xf32>
    "tpu.trace_stop"() : () -> ()
    %c0_53 = arith.constant 0 : index
    %c0_54 = arith.constant 0 : index
    %c0_55 = arith.constant 0 : index
    %82 = vector.load %arg13[%c0_53, %c0_54, %c0_55] : memref<4x32x8xf32, #tpu.memory_space<vmem>>, vector<4x32x8xf32>
    "tpu.trace_start"() <{level = 10 : i32, message = "hkd,hde->hke"}> : () -> ()
    %cst_56 = arith.constant dense<0.000000e+00> : vector<4x8x8xf32>
    %83 = tpu.matmul %75, %82, %cst_56 {dimension_numbers = #tpu.dot_dimension_numbers<[2], [1], [1], [2], [0, 0, 0, 1, 1, 2], [0], [0]>} : vector<4x8x32xf32>, vector<4x32x8xf32>, vector<4x8x8xf32> -> vector<4x8x8xf32>
    "tpu.trace_stop"() : () -> ()
    "tpu.trace_start"() <{level = 10 : i32, message = "hqe,hke->hqk"}> : () -> ()
    %cst_57 = arith.constant dense<0.000000e+00> : vector<4x8x8xf32>
    %84 = tpu.matmul %79, %81, %cst_57 {dimension_numbers = #tpu.dot_dimension_numbers<[2], [2], [1], [1], [0, 0, 0, 1, 1, 1], [0], [0]>} : vector<4x8x8xf32>, vector<4x8x8xf32>, vector<4x8x8xf32> -> vector<4x8x8xf32>
    %cst_58 = arith.constant -1.000000e+09 : f32
    "tpu.trace_stop"() : () -> ()
    %85 = vector.shape_cast %69 : vector<1x8x8xi1> to vector<1x8x8xi1>
    %86 = vector.broadcast %85 : vector<1x8x8xi1> to vector<4x8x8xi1>
    %87 = vector.broadcast %cst_58 : f32 to vector<4x8x8xf32>
    %88 = arith.select %86, %87, %84 : vector<4x8x8xi1>, vector<4x8x8xf32>
    %cst_59 = arith.constant dense<0xFF800000> : vector<4x8xf32>
    %89 = vector.multi_reduction <maximumf>, %88, %cst_59 [2] : vector<4x8x8xf32> to vector<4x8xf32>
    %90 = vector.shape_cast %89 : vector<4x8xf32> to vector<4x8x1xf32>
    %91 = vector.broadcast %90 : vector<4x8x1xf32> to vector<4x8x8xf32>
    %92 = arith.subf %88, %91 : vector<4x8x8xf32>
    %93 = math.exp %92 : vector<4x8x8xf32>
    %cst_60 = arith.constant dense<0.000000e+00> : vector<4x8xf32>
    %94 = vector.multi_reduction <add>, %93, %cst_60 [2] : vector<4x8x8xf32> to vector<4x8xf32>
    %95 = vector.shape_cast %94 : vector<4x8xf32> to vector<4x8x1xf32>
    %96 = tpu.reciprocal %95 {approx = true} : vector<4x8x1xf32> -> vector<4x8x1xf32>
    %97 = vector.broadcast %96 : vector<4x8x1xf32> to vector<4x8x8xf32>
    %98 = arith.mulf %93, %97 : vector<4x8x8xf32>
    "tpu.trace_start"() <{level = 10 : i32, message = "hqk,hke->hqe"}> : () -> ()
    %cst_61 = arith.constant dense<0.000000e+00> : vector<4x8x8xf32>
    %99 = tpu.matmul %98, %83, %cst_61 {dimension_numbers = #tpu.dot_dimension_numbers<[2], [1], [1], [2], [0, 0, 0, 1, 1, 2], [0], [0]>} : vector<4x8x8xf32>, vector<4x8x8xf32>, vector<4x8x8xf32> -> vector<4x8x8xf32>
    "tpu.trace_stop"() : () -> ()
    %c0_62 = arith.constant 0 : index
    %c0_63 = arith.constant 0 : index
    %c0_64 = arith.constant 0 : index
    %100 = vector.load %arg14[%c0_62, %c0_63, %c0_64] : memref<4x8x32xf32, #tpu.memory_space<vmem>>, vector<4x8x32xf32>
    "tpu.trace_start"() <{level = 10 : i32, message = "hqe,hed->hqd"}> : () -> ()
    %cst_65 = arith.constant dense<0.000000e+00> : vector<4x8x32xf32>
    %101 = tpu.matmul %99, %100, %cst_65 {dimension_numbers = #tpu.dot_dimension_numbers<[2], [1], [1], [2], [0, 0, 0, 1, 1, 2], [0], [0]>} : vector<4x8x8xf32>, vector<4x8x32xf32>, vector<4x8x32xf32> -> vector<4x8x32xf32>
    "tpu.trace_stop"() : () -> ()
    %cst_66 = arith.constant dense<0.000000e+00> : vector<8x32xf32>
    %102 = vector.multi_reduction <add>, %101, %cst_66 [0] : vector<4x8x32xf32> to vector<8x32xf32>
    %103 = arith.addf %102, %64 : vector<8x32xf32>
    %cst_67 = arith.constant dense<0.000000e+00> : vector<8xf32>
    %104 = vector.multi_reduction <add>, %103, %cst_67 [1] : vector<8x32xf32> to vector<8xf32>
    %105 = vector.shape_cast %104 : vector<8xf32> to vector<8x1xf32>
    %cst_68 = arith.constant 3.125000e-02 : f32
    %106 = vector.broadcast %cst_68 : f32 to vector<8x1xf32>
    %107 = arith.mulf %105, %106 : vector<8x1xf32>
    %108 = vector.broadcast %107 : vector<8x1xf32> to vector<8x32xf32>
    %109 = arith.subf %103, %108 : vector<8x32xf32>
    %110 = arith.mulf %109, %109 : vector<8x32xf32>
    %cst_69 = arith.constant dense<0.000000e+00> : vector<8xf32>
    %111 = vector.multi_reduction <add>, %110, %cst_69 [1] : vector<8x32xf32> to vector<8xf32>
    %112 = vector.shape_cast %111 : vector<8xf32> to vector<8x1xf32>
    %cst_70 = arith.constant 3.125000e-02 : f32
    %113 = vector.broadcast %cst_70 : f32 to vector<8x1xf32>
    %114 = arith.mulf %112, %113 : vector<8x1xf32>
    %cst_71 = arith.constant 9.99999997E-7 : f32
    %115 = vector.broadcast %cst_71 : f32 to vector<8x1xf32>
    %116 = arith.addf %114, %115 : vector<8x1xf32>
    %117 = math.rsqrt %116 : vector<8x1xf32>
    %118 = vector.broadcast %117 : vector<8x1xf32> to vector<8x32xf32>
    %119 = arith.mulf %109, %118 : vector<8x32xf32>
    %c0_72 = arith.constant 0 : index
    %c0_73 = arith.constant 0 : index
    %120 = vector.load %arg15[%c0_72, %c0_73] : memref<1x32xf32, #tpu.memory_space<vmem>>, vector<1x32xf32>
    %121 = vector.broadcast %120 : vector<1x32xf32> to vector<8x32xf32>
    %122 = arith.mulf %119, %121 : vector<8x32xf32>
    %c0_74 = arith.constant 0 : index
    %c0_75 = arith.constant 0 : index
    %123 = vector.load %arg16[%c0_74, %c0_75] : memref<1x32xf32, #tpu.memory_space<vmem>>, vector<1x32xf32>
    %124 = vector.broadcast %123 : vector<1x32xf32> to vector<8x32xf32>
    %125 = arith.addf %122, %124 : vector<8x32xf32>
    %c0_76 = arith.constant 0 : index
    %c0_77 = arith.constant 0 : index
    %126 = vector.load %arg17[%c0_76, %c0_77] : memref<32x64xf32, #tpu.memory_space<vmem>>, vector<32x64xf32>
    %cst_78 = arith.constant dense<0.000000e+00> : vector<8x64xf32>
    %127 = tpu.matmul %125, %126, %cst_78 {dimension_numbers = #tpu.dot_dimension_numbers<[1], [0], [0], [1], [0, 0, 1, 1], [], []>} : vector<8x32xf32>, vector<32x64xf32>, vector<8x64xf32> -> vector<8x64xf32>
    %c0_79 = arith.constant 0 : index
    %c0_80 = arith.constant 0 : index
    %128 = vector.load %arg18[%c0_79, %c0_80] : memref<1x64xf32, #tpu.memory_space<vmem>>, vector<1x64xf32>
    %129 = vector.broadcast %128 : vector<1x64xf32> to vector<8x64xf32>
    %130 = arith.addf %127, %129 : vector<8x64xf32>
    %cst_81 = arith.constant 0.000000e+00 : f32
    %131 = vector.broadcast %cst_81 : f32 to vector<8x64xf32>
    %132 = arith.maximumf %130, %131 : vector<8x64xf32>
    %c0_82 = arith.constant 0 : index
    %c0_83 = arith.constant 0 : index
    %133 = vector.load %arg19[%c0_82, %c0_83] : memref<64x32xf32, #tpu.memory_space<vmem>>, vector<64x32xf32>
    %cst_84 = arith.constant dense<0.000000e+00> : vector<8x32xf32>
    %134 = tpu.matmul %132, %133, %cst_84 {dimension_numbers = #tpu.dot_dimension_numbers<[1], [0], [0], [1], [0, 0, 1, 1], [], []>} : vector<8x64xf32>, vector<64x32xf32>, vector<8x32xf32> -> vector<8x32xf32>
    %c0_85 = arith.constant 0 : index
    %c0_86 = arith.constant 0 : index
    %135 = vector.load %arg20[%c0_85, %c0_86] : memref<1x32xf32, #tpu.memory_space<vmem>>, vector<1x32xf32>
    %136 = vector.broadcast %135 : vector<1x32xf32> to vector<8x32xf32>
    %137 = arith.addf %134, %136 : vector<8x32xf32>
    %138 = arith.addf %137, %125 : vector<8x32xf32>
    %cst_87 = arith.constant dense<0.000000e+00> : vector<8xf32>
    %139 = vector.multi_reduction <add>, %138, %cst_87 [1] : vector<8x32xf32> to vector<8xf32>
    %140 = vector.shape_cast %139 : vector<8xf32> to vector<8x1xf32>
    %cst_88 = arith.constant 3.125000e-02 : f32
    %141 = vector.broadcast %cst_88 : f32 to vector<8x1xf32>
    %142 = arith.mulf %140, %141 : vector<8x1xf32>
    %143 = vector.broadcast %142 : vector<8x1xf32> to vector<8x32xf32>
    %144 = arith.subf %138, %143 : vector<8x32xf32>
    %145 = arith.mulf %144, %144 : vector<8x32xf32>
    %cst_89 = arith.constant dense<0.000000e+00> : vector<8xf32>
    %146 = vector.multi_reduction <add>, %145, %cst_89 [1] : vector<8x32xf32> to vector<8xf32>
    %147 = vector.shape_cast %146 : vector<8xf32> to vector<8x1xf32>
    %cst_90 = arith.constant 3.125000e-02 : f32
    %148 = vector.broadcast %cst_90 : f32 to vector<8x1xf32>
    %149 = arith.mulf %147, %148 : vector<8x1xf32>
    %cst_91 = arith.constant 9.99999997E-7 : f32
    %150 = vector.broadcast %cst_91 : f32 to vector<8x1xf32>
    %151 = arith.addf %149, %150 : vector<8x1xf32>
    %152 = math.rsqrt %151 : vector<8x1xf32>
    %153 = vector.broadcast %152 : vector<8x1xf32> to vector<8x32xf32>
    %154 = arith.mulf %144, %153 : vector<8x32xf32>
    %c0_92 = arith.constant 0 : index
    %c0_93 = arith.constant 0 : index
    %155 = vector.load %arg21[%c0_92, %c0_93] : memref<1x32xf32, #tpu.memory_space<vmem>>, vector<1x32xf32>
    %156 = vector.broadcast %155 : vector<1x32xf32> to vector<8x32xf32>
    %157 = arith.mulf %154, %156 : vector<8x32xf32>
    %c0_94 = arith.constant 0 : index
    %c0_95 = arith.constant 0 : index
    %158 = vector.load %arg22[%c0_94, %c0_95] : memref<1x32xf32, #tpu.memory_space<vmem>>, vector<1x32xf32>
    %159 = vector.broadcast %158 : vector<1x32xf32> to vector<8x32xf32>
    %160 = arith.addf %157, %159 : vector<8x32xf32>
    %c0_96 = arith.constant 0 : index
    %c0_97 = arith.constant 0 : index
    %c0_98 = arith.constant 0 : index
    %161 = vector.load %arg23[%c0_96, %c0_97, %c0_98] : memref<1x8x32xf32, #tpu.memory_space<vmem>>, vector<1x8x32xf32>
    %162 = vector.shape_cast %161 : vector<1x8x32xf32> to vector<8x32xf32>
    %163 = vector.shape_cast %160 : vector<8x32xf32> to vector<1x8x32xf32>
    tpu.vector_store %arg23[%c0_96, %c0_97, %c0_98], %163 {strides = array<i32>} : memref<1x8x32xf32, #tpu.memory_space<vmem>>, vector<1x8x32xf32>,
    return
  }
  func.func @transform_0(%arg0: i32) -> (i32, i32, i32) {
    %c0_i32 = arith.constant 0 : i32
    %c0_i32_0 = arith.constant 0 : i32
    %c0_i32_1 = arith.constant 0 : i32
    return %arg0, %c0_i32, %c0_i32_0 : i32, i32, i32
  }
  func.func @transform_1(%arg0: i32) -> (i32, i32, i32) {
    %c0_i32 = arith.constant 0 : i32
    %c0_i32_0 = arith.constant 0 : i32
    %c0_i32_1 = arith.constant 0 : i32
    return %arg0, %c0_i32, %c0_i32_0 : i32, i32, i32
  }
  func.func @transform_2(%arg0: i32) -> (i32, i32, i32) {
    %c0_i32 = arith.constant 0 : i32
    %c0_i32_0 = arith.constant 0 : i32
    %c0_i32_1 = arith.constant 0 : i32
    return %arg0, %c0_i32, %c0_i32_0 : i32, i32, i32
  }
  func.func @transform_3(%arg0: i32) -> (i32, i32, i32) {
    %c0_i32 = arith.constant 0 : i32
    %c0_i32_0 = arith.constant 0 : i32
    %c0_i32_1 = arith.constant 0 : i32
    return %arg0, %c0_i32, %c0_i32_0 : i32, i32, i32
  }
  func.func @transform_4(%arg0: i32) -> (i32, i32, i32) {
    %c0_i32 = arith.constant 0 : i32
    %c0_i32_0 = arith.constant 0 : i32
    %c0_i32_1 = arith.constant 0 : i32
    %c0_i32_2 = arith.constant 0 : i32
    return %c0_i32, %c0_i32_0, %c0_i32_1 : i32, i32, i32
  }
  func.func @transform_5(%arg0: i32) -> (i32, i32, i32) {
    %c0_i32 = arith.constant 0 : i32
    %c0_i32_0 = arith.constant 0 : i32
    %c0_i32_1 = arith.constant 0 : i32
    %c0_i32_2 = arith.constant 0 : i32
    return %c0_i32, %c0_i32_0, %c0_i32_1 : i32, i32, i32
  }
  func.func @transform_6(%arg0: i32) -> (i32, i32, i32) {
    %c0_i32 = arith.constant 0 : i32
    %c0_i32_0 = arith.constant 0 : i32
    %c0_i32_1 = arith.constant 0 : i32
    %c0_i32_2 = arith.constant 0 : i32
    return %c0_i32, %c0_i32_0, %c0_i32_1 : i32, i32, i32
  }
  func.func @transform_7(%arg0: i32) -> (i32, i32, i32) {
    %c0_i32 = arith.constant 0 : i32
    %c0_i32_0 = arith.constant 0 : i32
    %c0_i32_1 = arith.constant 0 : i32
    %c0_i32_2 = arith.constant 0 : i32
    return %c0_i32, %c0_i32_0, %c0_i32_1 : i32, i32, i32
  }
  func.func @transform_8(%arg0: i32) -> (i32, i32) {
    %c0_i32 = arith.constant 0 : i32
    %c0_i32_0 = arith.constant 0 : i32
    %c0_i32_1 = arith.constant 0 : i32
    return %c0_i32, %c0_i32_0 : i32, i32
  }
  func.func @transform_9(%arg0: i32) -> (i32, i32) {
    %c0_i32 = arith.constant 0 : i32
    %c0_i32_0 = arith.constant 0 : i32
    %c0_i32_1 = arith.constant 0 : i32
    return %c0_i32, %c0_i32_0 : i32, i32
  }
  func.func @transform_10(%arg0: i32) -> (i32, i32, i32) {
    %c0_i32 = arith.constant 0 : i32
    %c0_i32_0 = arith.constant 0 : i32
    %c0_i32_1 = arith.constant 0 : i32
    %c0_i32_2 = arith.constant 0 : i32
    return %c0_i32, %c0_i32_0, %c0_i32_1 : i32, i32, i32
  }
  func.func @transform_11(%arg0: i32) -> (i32, i32, i32) {
    %c0_i32 = arith.constant 0 : i32
    %c0_i32_0 = arith.constant 0 : i32
    %c0_i32_1 = arith.constant 0 : i32
    %c0_i32_2 = arith.constant 0 : i32
    return %c0_i32, %c0_i32_0, %c0_i32_1 : i32, i32, i32
  }
  func.func @transform_12(%arg0: i32) -> (i32, i32, i32) {
    %c0_i32 = arith.constant 0 : i32
    %c0_i32_0 = arith.constant 0 : i32
    %c0_i32_1 = arith.constant 0 : i32
    %c0_i32_2 = arith.constant 0 : i32
    return %c0_i32, %c0_i32_0, %c0_i32_1 : i32, i32, i32
  }
  func.func @transform_13(%arg0: i32) -> (i32, i32, i32) {
    %c0_i32 = arith.constant 0 : i32
    %c0_i32_0 = arith.constant 0 : i32
    %c0_i32_1 = arith.constant 0 : i32
    %c0_i32_2 = arith.constant 0 : i32
    return %c0_i32, %c0_i32_0, %c0_i32_1 : i32, i32, i32
  }
  func.func @transform_14(%arg0: i32) -> (i32, i32) {
    %c0_i32 = arith.constant 0 : i32
    %c0_i32_0 = arith.constant 0 : i32
    %c0_i32_1 = arith.constant 0 : i32
    return %c0_i32, %c0_i32_0 : i32, i32
  }
  func.func @transform_15(%arg0: i32) -> (i32, i32) {
    %c0_i32 = arith.constant 0 : i32
    %c0_i32_0 = arith.constant 0 : i32
    %c0_i32_1 = arith.constant 0 : i32
    return %c0_i32, %c0_i32_0 : i32, i32
  }
  func.func @transform_16(%arg0: i32) -> (i32, i32) {
    %c0_i32 = arith.constant 0 : i32
    %c0_i32_0 = arith.constant 0 : i32
    %c0_i32_1 = arith.constant 0 : i32
    return %c0_i32, %c0_i32_0 : i32, i32
  }
  func.func @transform_17(%arg0: i32) -> (i32, i32) {
    %c0_i32 = arith.constant 0 : i32
    %c0_i32_0 = arith.constant 0 : i32
    %c0_i32_1 = arith.constant 0 : i32
    return %c0_i32, %c0_i32_0 : i32, i32
  }
  func.func @transform_18(%arg0: i32) -> (i32, i32) {
    %c0_i32 = arith.constant 0 : i32
    %c0_i32_0 = arith.constant 0 : i32
    %c0_i32_1 = arith.constant 0 : i32
    return %c0_i32, %c0_i32_0 : i32, i32
  }
  func.func @transform_19(%arg0: i32) -> (i32, i32) {
    %c0_i32 = arith.constant 0 : i32
    %c0_i32_0 = arith.constant 0 : i32
    %c0_i32_1 = arith.constant 0 : i32
    return %c0_i32, %c0_i32_0 : i32, i32
  }
  func.func @transform_20(%arg0: i32) -> (i32, i32) {
    %c0_i32 = arith.constant 0 : i32
    %c0_i32_0 = arith.constant 0 : i32
    %c0_i32_1 = arith.constant 0 : i32
    return %c0_i32, %c0_i32_0 : i32, i32
  }
  func.func @transform_21(%arg0: i32) -> (i32, i32) {
    %c0_i32 = arith.constant 0 : i32
    %c0_i32_0 = arith.constant 0 : i32
    %c0_i32_1 = arith.constant 0 : i32
    return %c0_i32, %c0_i32_0 : i32, i32
  }
  func.func @transform_22(%arg0: i32) -> (i32, i32, i32) {
    %c0_i32 = arith.constant 0 : i32
    %c0_i32_0 = arith.constant 0 : i32
    %c0_i32_1 = arith.constant 0 : i32
    return %arg0, %c0_i32, %c0_i32_0 : i32, i32, i32
  }
}

</mosaic_0001>

<llo_original>
// kernel: tpu_custom_call.1
$region0: #{tpu_custom_call.1}
  #allocation0 [shape = 'u32[]', space=smem, size = 0x4, offset = 0x4, fixed_abs, tag = 'smem constant byte address 0x4 - core index']
  #allocation1 [shape = 'u32[144,128]{1,0:T(1,128)}', space=vmem, size = 0x12000, scoped, tag = 'internal scratch']
  %s0 = inlined_call_operand.vmem [shape: f32[2,8,32], index: 0, kind: input, shape index: {}]
  %s1 = inlined_call_operand.vmem [shape: f32[2,8,32], index: 1, kind: input, shape index: {}]
  %s2 = inlined_call_operand.vmem [shape: f32[2,8,8], index: 2, kind: input, shape index: {}]
  %s3 = inlined_call_operand.vmem [shape: f32[2,8,8], index: 3, kind: input, shape index: {}]
  %s4 = inlined_call_operand.vmem [shape: f32[4,32,8], index: 4, kind: input, shape index: {}]
  %s5 = inlined_call_operand.vmem [shape: f32[4,32,8], index: 5, kind: input, shape index: {}]
  %s6 = inlined_call_operand.vmem [shape: f32[4,32,8], index: 6, kind: input, shape index: {}]
  %s7 = inlined_call_operand.vmem [shape: f32[4,8,32], index: 7, kind: input, shape index: {}]
  %s8 = inlined_call_operand.vmem [shape: f32[1,32], index: 8, kind: input, shape index: {}]
  %s9 = inlined_call_operand.vmem [shape: f32[1,32], index: 9, kind: input, shape index: {}]
  %s10 = inlined_call_operand.vmem [shape: f32[4,32,8], index: 10, kind: input, shape index: {}]
  %s11 = inlined_call_operand.vmem [shape: f32[4,32,8], index: 11, kind: input, shape index: {}]
  %s12 = inlined_call_operand.vmem [shape: f32[4,32,8], index: 12, kind: input, shape index: {}]
  %s13 = inlined_call_operand.vmem [shape: f32[4,8,32], index: 13, kind: input, shape index: {}]
  %s14 = inlined_call_operand.vmem [shape: f32[1,32], index: 14, kind: input, shape index: {}]
  %s15 = inlined_call_operand.vmem [shape: f32[1,32], index: 15, kind: input, shape index: {}]
  %s16 = inlined_call_operand.vmem [shape: f32[32,64], index: 16, kind: input, shape index: {}]
  %s17 = inlined_call_operand.vmem [shape: f32[1,64], index: 17, kind: input, shape index: {}]
  %s18 = inlined_call_operand.vmem [shape: f32[64,32], index: 18, kind: input, shape index: {}]
  %s19 = inlined_call_operand.vmem [shape: f32[1,32], index: 19, kind: input, shape index: {}]
  %s20 = inlined_call_operand.vmem [shape: f32[1,32], index: 20, kind: input, shape index: {}]
  %s21 = inlined_call_operand.vmem [shape: f32[1,32], index: 21, kind: input, shape index: {}]
  %s22 = inlined_call_operand.hbm [shape: f32[2,8,32], index: 22, kind: output, shape index: {}]
  %s23 = sld [smem:[#allocation0]]
  $region121: #{tpu_custom_call.1} parent=0
    _
  %s25 = ssub.s32 1, %s23
  %s26 = scalar_select 0, %s25, %s23
  $region1: #{tpu_custom_call.1} parent=0
    #allocation2 [shape = 'u8[8192]{0}', space=vmem, size = 0x2000, scoped, tag = 'output window, operand 0']
    #allocation3 [shape = 's32[2]{0}', space=sflag, size = 0x8, scoped, tag = 'scoped memory for tpu_custom_call.1']
    %27 = vsyncpa [#allocation3], 0
    %s28 = scalar_lea.sflag [#allocation3], 1
    %29 = vsyncpa %s28, 0
    loop: start=0, step=1, limit=4
    $region2: #{tpu_custom_call.1} parent=1 // loop_pre_header
      _
    $region3: #{tpu_custom_call.1} parent=1 // loop_header
      %s31 = sphi 0, %s35
      %p32 = scmp.ge.s32.totalorder %s31, 4
      %s41 = sphi 0, %s43
      %s44 = sphi 0, %s41
      %s45 = sphi 0, %s44
      %s61 = sphi 0, %s45
      %s67 = sphi 0, %s69
      %s70 = sphi 0, %s67
      %s71 = sphi 0, %s70
      %s87 = sphi 0, %s71
      %s93 = sphi 0, %s95
      %s96 = sphi 0, %s93
      %s97 = sphi 0, %s96
      %s113 = sphi 0, %s97
      %s119 = sphi 0, %s121
      %s122 = sphi 0, %s119
      %s123 = sphi 0, %s122
      %s139 = sphi 0, %s123
      %s143 = sphi 0, %s143
      %s145 = sphi 0, %s143
      %s146 = sphi 0, %s145
      %s160 = sphi 0, %s146
      %s164 = sphi 0, %s164
      %s166 = sphi 0, %s164
      %s167 = sphi 0, %s166
      %s181 = sphi 0, %s167
      %s185 = sphi 0, %s185
      %s187 = sphi 0, %s185
      %s188 = sphi 0, %s187
      %s202 = sphi 0, %s188
      %s206 = sphi 0, %s206
      %s208 = sphi 0, %s206
      %s209 = sphi 0, %s208
      %s223 = sphi 0, %s209
      %s227 = sphi 0, %s227
      %s229 = sphi 0, %s227
      %s230 = sphi 0, %s229
      %s244 = sphi 0, %s230
      %s248 = sphi 0, %s248
      %s250 = sphi 0, %s248
      %s251 = sphi 0, %s250
      %s265 = sphi 0, %s251
      %s269 = sphi 0, %s269
      %s271 = sphi 0, %s269
      %s272 = sphi 0, %s271
      %s286 = sphi 0, %s272
      %s290 = sphi 0, %s290
      %s292 = sphi 0, %s290
      %s293 = sphi 0, %s292
      %s307 = sphi 0, %s293
      %s311 = sphi 0, %s311
      %s313 = sphi 0, %s311
      %s314 = sphi 0, %s313
      %s328 = sphi 0, %s314
      %s332 = sphi 0, %s332
      %s334 = sphi 0, %s332
      %s335 = sphi 0, %s334
      %s349 = sphi 0, %s335
      %s353 = sphi 0, %s353
      %s355 = sphi 0, %s353
      %s356 = sphi 0, %s355
      %s370 = sphi 0, %s356
      %s374 = sphi 0, %s374
      %s376 = sphi 0, %s374
      %s377 = sphi 0, %s376
      %s391 = sphi 0, %s377
      %s395 = sphi 0, %s395
      %s397 = sphi 0, %s395
      %s398 = sphi 0, %s397
      %s412 = sphi 0, %s398
      %s416 = sphi 0, %s416
      %s418 = sphi 0, %s416
      %s419 = sphi 0, %s418
      %s433 = sphi 0, %s419
      %s437 = sphi 0, %s437
      %s439 = sphi 0, %s437
      %s440 = sphi 0, %s439
      %s454 = sphi 0, %s440
      %s458 = sphi 0, %s458
      %s460 = sphi 0, %s458
      %s461 = sphi 0, %s460
      %s475 = sphi 0, %s461
      %s479 = sphi 0, %s479
      %s481 = sphi 0, %s479
      %s482 = sphi 0, %s481
      %s496 = sphi 0, %s482
      %s500 = sphi 0, %s500
      %s502 = sphi 0, %s500
      %s503 = sphi 0, %s502
      %s517 = sphi 0, %s503
      %s523 = sphi 0, %s525
      %s526 = sphi 0, %s523
      %s527 = sphi 0, %s526
      %s543 = sphi 0, %s527
    $region4: #{tpu_custom_call.1} parent=1 // loop_header_branch
      %34 = sbr.rel (%p32) target = $region8
    $region5: #{tpu_custom_call.1} parent=1 // loop_body
      %s36 = ssub.s32 %s31, 1
      %s37 = ssub.s32 %s31, 2
      %s38 = sadd.s32 %s31, 1
      %s39 = ssub.s32 %s31, %s38
      %p40 = scmp.eq.s32.totalorder %s39, 0
      %s42 = sadd.s32 %s41, 1
      %s43 = scalar_select %p40, %s41, %s42
      %p46 = pneg %p40
      %p47 = scmp.eq.s32.totalorder %s31, 1
      %p48 = por %p46, %p47
      %p49 = scmp.ne.s32.totalorder %s41, %s44
      %p50 = scmp.eq.s32.totalorder %s31, 0
      %p51 = por %p49, %p50
      %p52 = scmp.ne.s32.totalorder %s41, %s44
      %p53 = scmp.eq.s32.totalorder %s36, 1
      %p54 = por %p52, %p53
      %p55 = scmp.ne.s32.totalorder %s44, %s45
      %p56 = scmp.eq.s32.totalorder %s36, 0
      %p57 = por %p55, %p56
      %p58 = scmp.ne.s32.totalorder %s44, %s45
      %p59 = scmp.eq.s32.totalorder %s37, 1
      %p60 = por %p58, %p59
      %p62 = scmp.ne.s32.totalorder %s45, %s61
      %p63 = scmp.eq.s32.totalorder %s37, 0
      %p64 = por %p62, %p63
      %s65 = ssub.s32 %s31, %s38
      %p66 = scmp.eq.s32.totalorder %s65, 0
      %s68 = sadd.s32 %s67, 1
      %s69 = scalar_select %p66, %s67, %s68
      %p72 = pneg %p66
      %p73 = scmp.eq.s32.totalorder %s31, 1
      %p74 = por %p72, %p73
      %p75 = scmp.ne.s32.totalorder %s67, %s70
      %p76 = scmp.eq.s32.totalorder %s31, 0
      %p77 = por %p75, %p76
      %p78 = scmp.ne.s32.totalorder %s67, %s70
      %p79 = scmp.eq.s32.totalorder %s36, 1
      %p80 = por %p78, %p79
      %p81 = scmp.ne.s32.totalorder %s70, %s71
      %p82 = scmp.eq.s32.totalorder %s36, 0
      %p83 = por %p81, %p82
      %p84 = scmp.ne.s32.totalorder %s70, %s71
      %p85 = scmp.eq.s32.totalorder %s37, 1
      %p86 = por %p84, %p85
      %p88 = scmp.ne.s32.totalorder %s71, %s87
      %p89 = scmp.eq.s32.totalorder %s37, 0
      %p90 = por %p88, %p89
      %s91 = ssub.s32 %s31, %s38
      %p92 = scmp.eq.s32.totalorder %s91, 0
      %s94 = sadd.s32 %s93, 1
      %s95 = scalar_select %p92, %s93, %s94
      %p98 = pneg %p92
      %p99 = scmp.eq.s32.totalorder %s31, 1
      %p100 = por %p98, %p99
      %p101 = scmp.ne.s32.totalorder %s93, %s96
      %p102 = scmp.eq.s32.totalorder %s31, 0
      %p103 = por %p101, %p102
      %p104 = scmp.ne.s32.totalorder %s93, %s96
      %p105 = scmp.eq.s32.totalorder %s36, 1
      %p106 = por %p104, %p105
      %p107 = scmp.ne.s32.totalorder %s96, %s97
      %p108 = scmp.eq.s32.totalorder %s36, 0
      %p109 = por %p107, %p108
      %p110 = scmp.ne.s32.totalorder %s96, %s97
      %p111 = scmp.eq.s32.totalorder %s37, 1
      %p112 = por %p110, %p111
      %p114 = scmp.ne.s32.totalorder %s97, %s113
      %p115 = scmp.eq.s32.totalorder %s37, 0
      %p116 = por %p114, %p115
      %s117 = ssub.s32 %s31, %s38
      %p118 = scmp.eq.s32.totalorder %s117, 0
      %s120 = sadd.s32 %s119, 1
      %s121 = scalar_select %p118, %s119, %s120
      %p124 = pneg %p118
      %p125 = scmp.eq.s32.totalorder %s31, 1
      %p126 = por %p124, %p125
      %p127 = scmp.ne.s32.totalorder %s119, %s122
      %p128 = scmp.eq.s32.totalorder %s31, 0
      %p129 = por %p127, %p128
      %p130 = scmp.ne.s32.totalorder %s119, %s122
      %p131 = scmp.eq.s32.totalorder %s36, 1
      %p132 = por %p130, %p131
      %p133 = scmp.ne.s32.totalorder %s122, %s123
      %p134 = scmp.eq.s32.totalorder %s36, 0
      %p135 = por %p133, %p134
      %p136 = scmp.ne.s32.totalorder %s122, %s123
      %p137 = scmp.eq.s32.totalorder %s37, 1
      %p138 = por %p136, %p137
      %p140 = scmp.ne.s32.totalorder %s123, %s139
      %p141 = scmp.eq.s32.totalorder %s37, 0
      %p142 = por %p140, %p141
      %s144 = sadd.s32 %s143, 1
      %p147 = scmp.eq.s32.totalorder %s31, 1
      %p148 = scmp.ne.s32.totalorder %s143, %s145
      %p149 = scmp.eq.s32.totalorder %s31, 0
      %p150 = por %p148, %p149
      %p151 = scmp.ne.s32.totalorder %s143, %s145
      %p152 = scmp.eq.s32.totalorder %s36, 1
      %p153 = por %p151, %p152
      %p154 = scmp.ne.s32.totalorder %s145, %s146
      %p155 = scmp.eq.s32.totalorder %s36, 0
      %p156 = por %p154, %p155
      %p157 = scmp.ne.s32.totalorder %s145, %s146
      %p158 = scmp.eq.s32.totalorder %s37, 1
      %p159 = por %p157, %p158
      %p161 = scmp.ne.s32.totalorder %s146, %s160
      %p162 = scmp.eq.s32.totalorder %s37, 0
      %p163 = por %p161, %p162
      %s165 = sadd.s32 %s164, 1
      %p168 = scmp.eq.s32.totalorder %s31, 1
      %p169 = scmp.ne.s32.totalorder %s164, %s166
      %p170 = scmp.eq.s32.totalorder %s31, 0
      %p171 = por %p169, %p170
      %p172 = scmp.ne.s32.totalorder %s164, %s166
      %p173 = scmp.eq.s32.totalorder %s36, 1
      %p174 = por %p172, %p173
      %p175 = scmp.ne.s32.totalorder %s166, %s167
      %p176 = scmp.eq.s32.totalorder %s36, 0
      %p177 = por %p175, %p176
      %p178 = scmp.ne.s32.totalorder %s166, %s167
      %p179 = scmp.eq.s32.totalorder %s37, 1
      %p180 = por %p178, %p179
      %p182 = scmp.ne.s32.totalorder %s167, %s181
      %p183 = scmp.eq.s32.totalorder %s37, 0
      %p184 = por %p182, %p183
      %s186 = sadd.s32 %s185, 1
      %p189 = scmp.eq.s32.totalorder %s31, 1
      %p190 = scmp.ne.s32.totalorder %s185, %s187
      %p191 = scmp.eq.s32.totalorder %s31, 0
      %p192 = por %p190, %p191
      %p193 = scmp.ne.s32.totalorder %s185, %s187
      %p194 = scmp.eq.s32.totalorder %s36, 1
      %p195 = por %p193, %p194
      %p196 = scmp.ne.s32.totalorder %s187, %s188
      %p197 = scmp.eq.s32.totalorder %s36, 0
      %p198 = por %p196, %p197
      %p199 = scmp.ne.s32.totalorder %s187, %s188
      %p200 = scmp.eq.s32.totalorder %s37, 1
      %p201 = por %p199, %p200
      %p203 = scmp.ne.s32.totalorder %s188, %s202
      %p204 = scmp.eq.s32.totalorder %s37, 0
      %p205 = por %p203, %p204
      %s207 = sadd.s32 %s206, 1
      %p210 = scmp.eq.s32.totalorder %s31, 1
      %p211 = scmp.ne.s32.totalorder %s206, %s208
      %p212 = scmp.eq.s32.totalorder %s31, 0
      %p213 = por %p211, %p212
      %p214 = scmp.ne.s32.totalorder %s206, %s208
      %p215 = scmp.eq.s32.totalorder %s36, 1
      %p216 = por %p214, %p215
      %p217 = scmp.ne.s32.totalorder %s208, %s209
      %p218 = scmp.eq.s32.totalorder %s36, 0
      %p219 = por %p217, %p218
      %p220 = scmp.ne.s32.totalorder %s208, %s209
      %p221 = scmp.eq.s32.totalorder %s37, 1
      %p222 = por %p220, %p221
      %p224 = scmp.ne.s32.totalorder %s209, %s223
      %p225 = scmp.eq.s32.totalorder %s37, 0
      %p226 = por %p224, %p225
      %s228 = sadd.s32 %s227, 1
      %p231 = scmp.eq.s32.totalorder %s31, 1
      %p232 = scmp.ne.s32.totalorder %s227, %s229
      %p233 = scmp.eq.s32.totalorder %s31, 0
      %p234 = por %p232, %p233
      %p235 = scmp.ne.s32.totalorder %s227, %s229
      %p236 = scmp.eq.s32.totalorder %s36, 1
      %p237 = por %p235, %p236
      %p238 = scmp.ne.s32.totalorder %s229, %s230
      %p239 = scmp.eq.s32.totalorder %s36, 0
      %p240 = por %p238, %p239
      %p241 = scmp.ne.s32.totalorder %s229, %s230
      %p242 = scmp.eq.s32.totalorder %s37, 1
      %p243 = por %p241, %p242
      %p245 = scmp.ne.s32.totalorder %s230, %s244
      %p246 = scmp.eq.s32.totalorder %s37, 0
      %p247 = por %p245, %p246
      %s249 = sadd.s32 %s248, 1
      %p252 = scmp.eq.s32.totalorder %s31, 1
      %p253 = scmp.ne.s32.totalorder %s248, %s250
      %p254 = scmp.eq.s32.totalorder %s31, 0
      %p255 = por %p253, %p254
      %p256 = scmp.ne.s32.totalorder %s248, %s250
      %p257 = scmp.eq.s32.totalorder %s36, 1
      %p258 = por %p256, %p257
      %p259 = scmp.ne.s32.totalorder %s250, %s251
      %p260 = scmp.eq.s32.totalorder %s36, 0
      %p261 = por %p259, %p260
      %p262 = scmp.ne.s32.totalorder %s250, %s251
      %p263 = scmp.eq.s32.totalorder %s37, 1
      %p264 = por %p262, %p263
      %p266 = scmp.ne.s32.totalorder %s251, %s265
      %p267 = scmp.eq.s32.totalorder %s37, 0
      %p268 = por %p266, %p267
      %s270 = sadd.s32 %s269, 1
      %p273 = scmp.eq.s32.totalorder %s31, 1
      %p274 = scmp.ne.s32.totalorder %s269, %s271
      %p275 = scmp.eq.s32.totalorder %s31, 0
      %p276 = por %p274, %p275
      %p277 = scmp.ne.s32.totalorder %s269, %s271
      %p278 = scmp.eq.s32.totalorder %s36, 1
      %p279 = por %p277, %p278
      %p280 = scmp.ne.s32.totalorder %s271, %s272
      %p281 = scmp.eq.s32.totalorder %s36, 0
      %p282 = por %p280, %p281
      %p283 = scmp.ne.s32.totalorder %s271, %s272
      %p284 = scmp.eq.s32.totalorder %s37, 1
      %p285 = por %p283, %p284
      %p287 = scmp.ne.s32.totalorder %s272, %s286
      %p288 = scmp.eq.s32.totalorder %s37, 0
      %p289 = por %p287, %p288
      %s291 = sadd.s32 %s290, 1
      %p294 = scmp.eq.s32.totalorder %s31, 1
      %p295 = scmp.ne.s32.totalorder %s290, %s292
      %p296 = scmp.eq.s32.totalorder %s31, 0
      %p297 = por %p295, %p296
      %p298 = scmp.ne.s32.totalorder %s290, %s292
      %p299 = scmp.eq.s32.totalorder %s36, 1
      %p300 = por %p298, %p299
      %p301 = scmp.ne.s32.totalorder %s292, %s293
      %p302 = scmp.eq.s32.totalorder %s36, 0
      %p303 = por %p301, %p302
      %p304 = scmp.ne.s32.totalorder %s292, %s293
      %p305 = scmp.eq.s32.totalorder %s37, 1
      %p306 = por %p304, %p305
      %p308 = scmp.ne.s32.totalorder %s293, %s307
      %p309 = scmp.eq.s32.totalorder %s37, 0
      %p310 = por %p308, %p309
      %s312 = sadd.s32 %s311, 1
      %p315 = scmp.eq.s32.totalorder %s31, 1
      %p316 = scmp.ne.s32.totalorder %s311, %s313
      %p317 = scmp.eq.s32.totalorder %s31, 0
      %p318 = por %p316, %p317
      %p319 = scmp.ne.s32.totalorder %s311, %s313
      %p320 = scmp.eq.s32.totalorder %s36, 1
      %p321 = por %p319, %p320
      %p322 = scmp.ne.s32.totalorder %s313, %s314
      %p323 = scmp.eq.s32.totalorder %s36, 0
      %p324 = por %p322, %p323
      %p325 = scmp.ne.s32.totalorder %s313, %s314
      %p326 = scmp.eq.s32.totalorder %s37, 1
      %p327 = por %p325, %p326
      %p329 = scmp.ne.s32.totalorder %s314, %s328
      %p330 = scmp.eq.s32.totalorder %s37, 0
      %p331 = por %p329, %p330
      %s333 = sadd.s32 %s332, 1
      %p336 = scmp.eq.s32.totalorder %s31, 1
      %p337 = scmp.ne.s32.totalorder %s332, %s334
      %p338 = scmp.eq.s32.totalorder %s31, 0
      %p339 = por %p337, %p338
      %p340 = scmp.ne.s32.totalorder %s332, %s334
      %p341 = scmp.eq.s32.totalorder %s36, 1
      %p342 = por %p340, %p341
      %p343 = scmp.ne.s32.totalorder %s334, %s335
      %p344 = scmp.eq.s32.totalorder %s36, 0
      %p345 = por %p343, %p344
      %p346 = scmp.ne.s32.totalorder %s334, %s335
      %p347 = scmp.eq.s32.totalorder %s37, 1
      %p348 = por %p346, %p347
      %p350 = scmp.ne.s32.totalorder %s335, %s349
      %p351 = scmp.eq.s32.totalorder %s37, 0
      %p352 = por %p350, %p351
      %s354 = sadd.s32 %s353, 1
      %p357 = scmp.eq.s32.totalorder %s31, 1
      %p358 = scmp.ne.s32.totalorder %s353, %s355
      %p359 = scmp.eq.s32.totalorder %s31, 0
      %p360 = por %p358, %p359
      %p361 = scmp.ne.s32.totalorder %s353, %s355
      %p362 = scmp.eq.s32.totalorder %s36, 1
      %p363 = por %p361, %p362
      %p364 = scmp.ne.s32.totalorder %s355, %s356
      %p365 = scmp.eq.s32.totalorder %s36, 0
      %p366 = por %p364, %p365
      %p367 = scmp.ne.s32.totalorder %s355, %s356
      %p368 = scmp.eq.s32.totalorder %s37, 1
      %p369 = por %p367, %p368
      %p371 = scmp.ne.s32.totalorder %s356, %s370
      %p372 = scmp.eq.s32.totalorder %s37, 0
      %p373 = por %p371, %p372
      %s375 = sadd.s32 %s374, 1
      %p378 = scmp.eq.s32.totalorder %s31, 1
      %p379 = scmp.ne.s32.totalorder %s374, %s376
      %p380 = scmp.eq.s32.totalorder %s31, 0
      %p381 = por %p379, %p380
      %p382 = scmp.ne.s32.totalorder %s374, %s376
      %p383 = scmp.eq.s32.totalorder %s36, 1
      %p384 = por %p382, %p383
      %p385 = scmp.ne.s32.totalorder %s376, %s377
      %p386 = scmp.eq.s32.totalorder %s36, 0
      %p387 = por %p385, %p386
      %p388 = scmp.ne.s32.totalorder %s376, %s377
      %p389 = scmp.eq.s32.totalorder %s37, 1
      %p390 = por %p388, %p389
      %p392 = scmp.ne.s32.totalorder %s377, %s391
      %p393 = scmp.eq.s32.totalorder %s37, 0
      %p394 = por %p392, %p393
      %s396 = sadd.s32 %s395, 1
      %p399 = scmp.eq.s32.totalorder %s31, 1
      %p400 = scmp.ne.s32.totalorder %s395, %s397
      %p401 = scmp.eq.s32.totalorder %s31, 0
      %p402 = por %p400, %p401
      %p403 = scmp.ne.s32.totalorder %s395, %s397
      %p404 = scmp.eq.s32.totalorder %s36, 1
      %p405 = por %p403, %p404
      %p406 = scmp.ne.s32.totalorder %s397, %s398
      %p407 = scmp.eq.s32.totalorder %s36, 0
      %p408 = por %p406, %p407
      %p409 = scmp.ne.s32.totalorder %s397, %s398
      %p410 = scmp.eq.s32.totalorder %s37, 1
      %p411 = por %p409, %p410
      %p413 = scmp.ne.s32.totalorder %s398, %s412
      %p414 = scmp.eq.s32.totalorder %s37, 0
      %p415 = por %p413, %p414
      %s417 = sadd.s32 %s416, 1
      %p420 = scmp.eq.s32.totalorder %s31, 1
      %p421 = scmp.ne.s32.totalorder %s416, %s418
      %p422 = scmp.eq.s32.totalorder %s31, 0
      %p423 = por %p421, %p422
      %p424 = scmp.ne.s32.totalorder %s416, %s418
      %p425 = scmp.eq.s32.totalorder %s36, 1
      %p426 = por %p424, %p425
      %p427 = scmp.ne.s32.totalorder %s418, %s419
      %p428 = scmp.eq.s32.totalorder %s36, 0
      %p429 = por %p427, %p428
      %p430 = scmp.ne.s32.totalorder %s418, %s419
      %p431 = scmp.eq.s32.totalorder %s37, 1
      %p432 = por %p430, %p431
      %p434 = scmp.ne.s32.totalorder %s419, %s433
      %p435 = scmp.eq.s32.totalorder %s37, 0
      %p436 = por %p434, %p435
      %s438 = sadd.s32 %s437, 1
      %p441 = scmp.eq.s32.totalorder %s31, 1
      %p442 = scmp.ne.s32.totalorder %s437, %s439
      %p443 = scmp.eq.s32.totalorder %s31, 0
      %p444 = por %p442, %p443
      %p445 = scmp.ne.s32.totalorder %s437, %s439
      %p446 = scmp.eq.s32.totalorder %s36, 1
      %p447 = por %p445, %p446
      %p448 = scmp.ne.s32.totalorder %s439, %s440
      %p449 = scmp.eq.s32.totalorder %s36, 0
      %p450 = por %p448, %p449
      %p451 = scmp.ne.s32.totalorder %s439, %s440
      %p452 = scmp.eq.s32.totalorder %s37, 1
      %p453 = por %p451, %p452
      %p455 = scmp.ne.s32.totalorder %s440, %s454
      %p456 = scmp.eq.s32.totalorder %s37, 0
      %p457 = por %p455, %p456
      %s459 = sadd.s32 %s458, 1
      %p462 = scmp.eq.s32.totalorder %s31, 1
      %p463 = scmp.ne.s32.totalorder %s458, %s460
      %p464 = scmp.eq.s32.totalorder %s31, 0
      %p465 = por %p463, %p464
      %p466 = scmp.ne.s32.totalorder %s458, %s460
      %p467 = scmp.eq.s32.totalorder %s36, 1
      %p468 = por %p466, %p467
      %p469 = scmp.ne.s32.totalorder %s460, %s461
      %p470 = scmp.eq.s32.totalorder %s36, 0
      %p471 = por %p469, %p470
      %p472 = scmp.ne.s32.totalorder %s460, %s461
      %p473 = scmp.eq.s32.totalorder %s37, 1
      %p474 = por %p472, %p473
      %p476 = scmp.ne.s32.totalorder %s461, %s475
      %p477 = scmp.eq.s32.totalorder %s37, 0
      %p478 = por %p476, %p477
      %s480 = sadd.s32 %s479, 1
      %p483 = scmp.eq.s32.totalorder %s31, 1
      %p484 = scmp.ne.s32.totalorder %s479, %s481
      %p485 = scmp.eq.s32.totalorder %s31, 0
      %p486 = por %p484, %p485
      %p487 = scmp.ne.s32.totalorder %s479, %s481
      %p488 = scmp.eq.s32.totalorder %s36, 1
      %p489 = por %p487, %p488
      %p490 = scmp.ne.s32.totalorder %s481, %s482
      %p491 = scmp.eq.s32.totalorder %s36, 0
      %p492 = por %p490, %p491
      %p493 = scmp.ne.s32.totalorder %s481, %s482
      %p494 = scmp.eq.s32.totalorder %s37, 1
      %p495 = por %p493, %p494
      %p497 = scmp.ne.s32.totalorder %s482, %s496
      %p498 = scmp.eq.s32.totalorder %s37, 0
      %p499 = por %p497, %p498
      %s501 = sadd.s32 %s500, 1
      %p504 = scmp.eq.s32.totalorder %s31, 1
      %p505 = scmp.ne.s32.totalorder %s500, %s502
      %p506 = scmp.eq.s32.totalorder %s31, 0
      %p507 = por %p505, %p506
      %p508 = scmp.ne.s32.totalorder %s500, %s502
      %p509 = scmp.eq.s32.totalorder %s36, 1
      %p510 = por %p508, %p509
      %p511 = scmp.ne.s32.totalorder %s502, %s503
      %p512 = scmp.eq.s32.totalorder %s36, 0
      %p513 = por %p511, %p512
      %p514 = scmp.ne.s32.totalorder %s502, %s503
      %p515 = scmp.eq.s32.totalorder %s37, 1
      %p516 = por %p514, %p515
      %p518 = scmp.ne.s32.totalorder %s503, %s517
      %p519 = scmp.eq.s32.totalorder %s37, 0
      %p520 = por %p518, %p519
      %s521 = ssub.s32 %s31, %s38
      %p522 = scmp.eq.s32.totalorder %s521, 0
      %s524 = sadd.s32 %s523, 1
      %s525 = scalar_select %p522, %s523, %s524
      %p528 = pneg %p522
      %p529 = scmp.eq.s32.totalorder %s31, 1
      %p530 = por %p528, %p529
      %p531 = scmp.ne.s32.totalorder %s523, %s526
      %p532 = scmp.eq.s32.totalorder %s31, 0
      %p533 = por %p531, %p532
      %p534 = scmp.ne.s32.totalorder %s523, %s526
      %p535 = scmp.eq.s32.totalorder %s36, 1
      %p536 = por %p534, %p535
      %p537 = scmp.ne.s32.totalorder %s526, %s527
      %p538 = scmp.eq.s32.totalorder %s36, 0
      %p539 = por %p537, %p538
      %p540 = scmp.ne.s32.totalorder %s526, %s527
      %p541 = scmp.eq.s32.totalorder %s37, 1
      %p542 = por %p540, %p541
      %p544 = scmp.ne.s32.totalorder %s527, %s543
      %p545 = scmp.eq.s32.totalorder %s37, 0
      %p546 = por %p544, %p545
      %p547 = scmp.le.s32.totalorder 1, %s31
      %p548 = scmp.lt.s32.totalorder %s31, 3
      %p549 = pnand %p547, %p548
      %p550 = pneg %p549
      // Predicated region
      $region9: #{tpu_custom_call.1} parent=5 // pred_check
        _
      $region10: #{tpu_custom_call.1} parent=5 // pred_check_branch
        %552 = sbr.rel (%p549) target = $region12
      $region11: #{tpu_custom_call.1} parent=5 // pred_region
        %s553 = ssub.s32 %s31, 1
        // Predicated region
        $region13: #{tpu_custom_call.1} parent=11 // pred_check
          %p554 = pneg %p156
        $region14: #{tpu_custom_call.1} parent=11 // pred_check_branch
          %556 = sbr.rel (%p554) target = $region16
        $region15: #{tpu_custom_call.1} parent=11 // pred_region
          _
        $region16: #{tpu_custom_call.1} parent=11 // pred_fallthru
          _
        // Predicated region
        $region17: #{tpu_custom_call.1} parent=11 // pred_check
          %p557 = pneg %p177
        $region18: #{tpu_custom_call.1} parent=11 // pred_check_branch
          %559 = sbr.rel (%p557) target = $region20
        $region19: #{tpu_custom_call.1} parent=11 // pred_region
          _
        $region20: #{tpu_custom_call.1} parent=11 // pred_fallthru
          _
        // Predicated region
        $region21: #{tpu_custom_call.1} parent=11 // pred_check
          %p560 = pneg %p198
        $region22: #{tpu_custom_call.1} parent=11 // pred_check_branch
          %562 = sbr.rel (%p560) target = $region24
        $region23: #{tpu_custom_call.1} parent=11 // pred_region
          _
        $region24: #{tpu_custom_call.1} parent=11 // pred_fallthru
          _
        // Predicated region
        $region25: #{tpu_custom_call.1} parent=11 // pred_check
          %p563 = pneg %p219
        $region26: #{tpu_custom_call.1} parent=11 // pred_check_branch
          %565 = sbr.rel (%p563) target = $region28
        $region27: #{tpu_custom_call.1} parent=11 // pred_region
          _
        $region28: #{tpu_custom_call.1} parent=11 // pred_fallthru
          _
        // Predicated region
        $region29: #{tpu_custom_call.1} parent=11 // pred_check
          %p566 = pneg %p240
        $region30: #{tpu_custom_call.1} parent=11 // pred_check_branch
          %568 = sbr.rel (%p566) target = $region32
        $region31: #{tpu_custom_call.1} parent=11 // pred_region
          _
        $region32: #{tpu_custom_call.1} parent=11 // pred_fallthru
          _
        // Predicated region
        $region33: #{tpu_custom_call.1} parent=11 // pred_check
          %p569 = pneg %p261
        $region34: #{tpu_custom_call.1} parent=11 // pred_check_branch
          %571 = sbr.rel (%p569) target = $region36
        $region35: #{tpu_custom_call.1} parent=11 // pred_region
          _
        $region36: #{tpu_custom_call.1} parent=11 // pred_fallthru
          _
        // Predicated region
        $region37: #{tpu_custom_call.1} parent=11 // pred_check
          %p572 = pneg %p282
        $region38: #{tpu_custom_call.1} parent=11 // pred_check_branch
          %574 = sbr.rel (%p572) target = $region40
        $region39: #{tpu_custom_call.1} parent=11 // pred_region
          _
        $region40: #{tpu_custom_call.1} parent=11 // pred_fallthru
          _
        // Predicated region
        $region41: #{tpu_custom_call.1} parent=11 // pred_check
          %p575 = pneg %p303
        $region42: #{tpu_custom_call.1} parent=11 // pred_check_branch
          %577 = sbr.rel (%p575) target = $region44
        $region43: #{tpu_custom_call.1} parent=11 // pred_region
          _
        $region44: #{tpu_custom_call.1} parent=11 // pred_fallthru
          _
        // Predicated region
        $region45: #{tpu_custom_call.1} parent=11 // pred_check
          %p578 = pneg %p324
        $region46: #{tpu_custom_call.1} parent=11 // pred_check_branch
          %580 = sbr.rel (%p578) target = $region48
        $region47: #{tpu_custom_call.1} parent=11 // pred_region
          _
        $region48: #{tpu_custom_call.1} parent=11 // pred_fallthru
          _
        // Predicated region
        $region49: #{tpu_custom_call.1} parent=11 // pred_check
          %p581 = pneg %p345
        $region50: #{tpu_custom_call.1} parent=11 // pred_check_branch
          %583 = sbr.rel (%p581) target = $region52
        $region51: #{tpu_custom_call.1} parent=11 // pred_region
          _
        $region52: #{tpu_custom_call.1} parent=11 // pred_fallthru
          _
        // Predicated region
        $region53: #{tpu_custom_call.1} parent=11 // pred_check
          %p584 = pneg %p366
        $region54: #{tpu_custom_call.1} parent=11 // pred_check_branch
          %586 = sbr.rel (%p584) target = $region56
        $region55: #{tpu_custom_call.1} parent=11 // pred_region
          _
        $region56: #{tpu_custom_call.1} parent=11 // pred_fallthru
          _
        // Predicated region
        $region57: #{tpu_custom_call.1} parent=11 // pred_check
          %p587 = pneg %p387
        $region58: #{tpu_custom_call.1} parent=11 // pred_check_branch
          %589 = sbr.rel (%p587) target = $region60
        $region59: #{tpu_custom_call.1} parent=11 // pred_region
          _
        $region60: #{tpu_custom_call.1} parent=11 // pred_fallthru
          _
        // Predicated region
        $region61: #{tpu_custom_call.1} parent=11 // pred_check
          %p590 = pneg %p408
        $region62: #{tpu_custom_call.1} parent=11 // pred_check_branch
          %592 = sbr.rel (%p590) target = $region64
        $region63: #{tpu_custom_call.1} parent=11 // pred_region
          _
        $region64: #{tpu_custom_call.1} parent=11 // pred_fallthru
          _
        // Predicated region
        $region65: #{tpu_custom_call.1} parent=11 // pred_check
          %p593 = pneg %p429
        $region66: #{tpu_custom_call.1} parent=11 // pred_check_branch
          %595 = sbr.rel (%p593) target = $region68
        $region67: #{tpu_custom_call.1} parent=11 // pred_region
          _
        $region68: #{tpu_custom_call.1} parent=11 // pred_fallthru
          _
        // Predicated region
        $region69: #{tpu_custom_call.1} parent=11 // pred_check
          %p596 = pneg %p450
        $region70: #{tpu_custom_call.1} parent=11 // pred_check_branch
          %598 = sbr.rel (%p596) target = $region72
        $region71: #{tpu_custom_call.1} parent=11 // pred_region
          _
        $region72: #{tpu_custom_call.1} parent=11 // pred_fallthru
          _
        // Predicated region
        $region73: #{tpu_custom_call.1} parent=11 // pred_check
          %p599 = pneg %p471
        $region74: #{tpu_custom_call.1} parent=11 // pred_check_branch
          %601 = sbr.rel (%p599) target = $region76
        $region75: #{tpu_custom_call.1} parent=11 // pred_region
          _
        $region76: #{tpu_custom_call.1} parent=11 // pred_fallthru
          _
        // Predicated region
        $region77: #{tpu_custom_call.1} parent=11 // pred_check
          %p602 = pneg %p492
        $region78: #{tpu_custom_call.1} parent=11 // pred_check_branch
          %604 = sbr.rel (%p602) target = $region80
        $region79: #{tpu_custom_call.1} parent=11 // pred_region
          _
        $region80: #{tpu_custom_call.1} parent=11 // pred_fallthru
          _
        // Predicated region
        $region81: #{tpu_custom_call.1} parent=11 // pred_check
          %p605 = pneg %p513
        $region82: #{tpu_custom_call.1} parent=11 // pred_check_branch
          %607 = sbr.rel (%p605) target = $region84
        $region83: #{tpu_custom_call.1} parent=11 // pred_region
          _
        $region84: #{tpu_custom_call.1} parent=11 // pred_fallthru
          _
      $region12: #{tpu_custom_call.1} parent=5 // pred_fallthru
        _
      %p608 = scmp.lt.s32.totalorder %s31, 2
      // Predicated region
      $region85: #{tpu_custom_call.1} parent=5 // pred_check
        %p609 = pneg %p608
      $region86: #{tpu_custom_call.1} parent=5 // pred_check_branch
        %611 = sbr.rel (%p609) target = $region88
      $region87: #{tpu_custom_call.1} parent=5 // pred_region
        // Predicated region
        $region89: #{tpu_custom_call.1} parent=87 // pred_check
          %p612 = pneg %p51
        $region90: #{tpu_custom_call.1} parent=87 // pred_check_branch
          %614 = sbr.rel (%p612) target = $region92
        $region91: #{tpu_custom_call.1} parent=87 // pred_region
          %p615 = scmp.lt.s32.totalorder %s31, 1
          %s616 = scalar_select %p615, %s31, 1
          %s617 = smul.addr %s616, 8
          %s618 = scalar_lea.vmem %s0, %s617
        $region92: #{tpu_custom_call.1} parent=87 // pred_fallthru
          _
        // Predicated region
        $region93: #{tpu_custom_call.1} parent=87 // pred_check
          %p619 = pneg %p77
        $region94: #{tpu_custom_call.1} parent=87 // pred_check_branch
          %621 = sbr.rel (%p619) target = $region96
        $region95: #{tpu_custom_call.1} parent=87 // pred_region
          %p622 = scmp.lt.s32.totalorder %s31, 1
          %s623 = scalar_select %p622, %s31, 1
          %s624 = smul.addr %s623, 8
          %s625 = scalar_lea.vmem %s1, %s624
        $region96: #{tpu_custom_call.1} parent=87 // pred_fallthru
          _
        // Predicated region
        $region97: #{tpu_custom_call.1} parent=87 // pred_check
          %p626 = pneg %p103
        $region98: #{tpu_custom_call.1} parent=87 // pred_check_branch
          %628 = sbr.rel (%p626) target = $region100
        $region99: #{tpu_custom_call.1} parent=87 // pred_region
          %p629 = scmp.lt.s32.totalorder %s31, 1
          %s630 = scalar_select %p629, %s31, 1
          %s631 = smul.addr %s630, 8
          %s632 = scalar_lea.vmem %s2, %s631
        $region100: #{tpu_custom_call.1} parent=87 // pred_fallthru
          _
        // Predicated region
        $region101: #{tpu_custom_call.1} parent=87 // pred_check
          %p633 = pneg %p129
        $region102: #{tpu_custom_call.1} parent=87 // pred_check_branch
          %635 = sbr.rel (%p633) target = $region104
        $region103: #{tpu_custom_call.1} parent=87 // pred_region
          %p636 = scmp.lt.s32.totalorder %s31, 1
          %s637 = scalar_select %p636, %s31, 1
          %s638 = smul.addr %s637, 8
          %s639 = scalar_lea.vmem %s3, %s638
        $region104: #{tpu_custom_call.1} parent=87 // pred_fallthru
          _
      $region88: #{tpu_custom_call.1} parent=5 // pred_fallthru
        _
      %p640 = scmp.le.s32.totalorder 1, %s31
      %p641 = scmp.lt.s32.totalorder %s31, 3
      %p642 = pnand %p640, %p641
      %p643 = pneg %p642
      // Predicated region
      $region105: #{tpu_custom_call.1} parent=5 // pred_check
        _
      $region106: #{tpu_custom_call.1} parent=5 // pred_check_branch
        %645 = sbr.rel (%p642) target = $region108
      $region107: #{tpu_custom_call.1} parent=5 // pred_region
        %s646 = ssub.s32 %s31, 1
        %p647 = scmp.lt.s32.totalorder %s36, 1
        %s648 = scalar_select %p647, %s36, 1
        %s649 = smul.addr %s648, 8
        %s650 = scalar_lea.vmem %s0, %s649
        %p651 = pneg %p57
        %p652 = pneg %p54
        %p653 = scmp.lt.s32.totalorder %s36, 1
        %s654 = scalar_select %p653, %s36, 1
        %s655 = smul.addr %s654, 8
        %s656 = scalar_lea.vmem %s1, %s655
        %p657 = pneg %p83
        %p658 = pneg %p80
        %p659 = scmp.lt.s32.totalorder %s36, 1
        %s660 = scalar_select %p659, %s36, 1
        %s661 = smul.addr %s660, 8
        %s662 = scalar_lea.vmem %s2, %s661
        %p663 = pneg %p109
        %p664 = pneg %p106
        %p665 = scmp.lt.s32.totalorder %s36, 1
        %s666 = scalar_select %p665, %s36, 1
        %s667 = smul.addr %s666, 8
        %s668 = scalar_lea.vmem %s3, %s667
        %p669 = pneg %p135
        %p670 = pneg %p132
        %p671 = pneg %p156
        %p672 = pneg %p153
        %p673 = pneg %p177
        %p674 = pneg %p174
        %p675 = pneg %p198
        %p676 = pneg %p195
        %p677 = pneg %p219
        %p678 = pneg %p216
        %p679 = pneg %p240
        %p680 = pneg %p237
        %p681 = pneg %p261
        %p682 = pneg %p258
        %p683 = pneg %p282
        %p684 = pneg %p279
        %p685 = pneg %p303
        %p686 = pneg %p300
        %p687 = pneg %p324
        %p688 = pneg %p321
        %p689 = pneg %p345
        %p690 = pneg %p342
        %p691 = pneg %p366
        %p692 = pneg %p363
        %p693 = pneg %p387
        %p694 = pneg %p384
        %p695 = pneg %p408
        %p696 = pneg %p405
        %p697 = pneg %p429
        %p698 = pneg %p426
        %p699 = pneg %p450
        %p700 = pneg %p447
        %p701 = pneg %p471
        %p702 = pneg %p468
        %p703 = pneg %p492
        %p704 = pneg %p489
        %p705 = pneg %p513
        %p706 = pneg %p510
        %p707 = pneg %p539
        %p708 = pneg %p536
        %s709 = sand.u32 %s526, 1
        %s710 = scalar_lea.sflag [#allocation3], %s709
        %s711 = sand.u32 %s526, 1
        %s712 = smul.addr %s711, 8
        %s713 = scalar_lea.vmem [#allocation2], %s712
        %p714 = scmp.lt.s32.totalorder %s36, 1
        %s715 = scalar_select %p714, %s36, 1
        %s716 = smul.addr %s715, 8
        %s717 = scalar_lea.vmem %s0, %s716
        %p718 = scmp.lt.s32.totalorder %s36, 1
        %s719 = scalar_select %p718, %s36, 1
        %s720 = smul.addr %s719, 8
        %s721 = scalar_lea.vmem %s1, %s720
        %p722 = scmp.lt.s32.totalorder %s36, 1
        %s723 = scalar_select %p722, %s36, 1
        %s724 = smul.addr %s723, 8
        %s725 = scalar_lea.vmem %s2, %s724
        %p726 = scmp.lt.s32.totalorder %s36, 1
        %s727 = scalar_select %p726, %s36, 1
        %s728 = smul.addr %s727, 8
        %s729 = scalar_lea.vmem %s3, %s728
        %v730 = vld [vmem:[%s717] sm:$0xff]
        %v731 = vld [vmem:[%s721] sm:$0xff]
        %v732 = vld [vmem:[%s725] sm:$0xff]
        %vm733 = vcmp.eq.f32.partialorder %v732, 0.0
        %v734 = vld [vmem:[%s4] sm:$0xff]
        %v735 = vld [vmem:[%s4 + $0x8] sm:$0xff]
        %v736 = vld [vmem:[%s4 + $0x10] sm:$0xff]
        %v737 = vld [vmem:[%s4 + $0x18] sm:$0xff]
        %v738 = vld [vmem:[%s4 + $0x20] sm:$0xff]
        %v739 = vld [vmem:[%s4 + $0x28] sm:$0xff]
        %v740 = vld [vmem:[%s4 + $0x30] sm:$0xff]
        %v741 = vld [vmem:[%s4 + $0x38] sm:$0xff]
        %v742 = vld [vmem:[%s4 + $0x40] sm:$0xff]
        %v743 = vld [vmem:[%s4 + $0x48] sm:$0xff]
        %v744 = vld [vmem:[%s4 + $0x50] sm:$0xff]
        %v745 = vld [vmem:[%s4 + $0x58] sm:$0xff]
        %v746 = vld [vmem:[%s4 + $0x60] sm:$0xff]
        %v747 = vld [vmem:[%s4 + $0x68] sm:$0xff]
        %v748 = vld [vmem:[%s4 + $0x70] sm:$0xff]
        %v749 = vld [vmem:[%s4 + $0x78] sm:$0xff]
        %vm750 = vcmask 261120
        %v752 = vsel %vm750, %v730, 0
        %754 = vmatprep.subr.mxu0 0.0
        %755 = vmatpush1.msra.mxu0 0.0
        %756 = vmatprep.subr.mxu0 0.0
        %757 = vmatpush1.msra.mxu0 0.0
        %758 = vmatprep.subr.mxu0 0.0
        %759 = vmatpush1.msra.mxu0 0.0
        %760 = vmatprep.subr.mxu0 0.0
        %761 = vmatpush1.msra.mxu0 0.0
        %762 = vmatprep.subr.mxu0 0.0
        %763 = vmatpush1.msra.mxu0 0.0
        %764 = vmatprep.subr.mxu0 0.0
        %765 = vmatpush1.msra.mxu0 0.0
        %766 = vmatprep.subr.mxu0 0.0
        %767 = vmatpush1.msra.mxu0 0.0
        %768 = vmatprep.subr.mxu0 0.0
        %769 = vmatpush1.msra.mxu0 0.0
        %770 = vmatprep.subr.mxu0 0.0
        %771 = vmatpush1.msra.mxu0 0.0
        %772 = vmatprep.subr.mxu0 0.0
        %773 = vmatpush1.msra.mxu0 0.0
        %774 = vmatprep.subr.mxu0 0.0
        %775 = vmatpush1.msra.mxu0 0.0
        %776 = vmatprep.subr.mxu0 0.0
        %777 = vmatpush1.msra.mxu0 0.0
        %778 = vmatprep.subr.mxu0 0.0
        %779 = vmatpush1.msra.mxu0 %v737
        %780 = vmatprep.subr.mxu0 0.0
        %781 = vmatpush1.msra.mxu0 %v736
        %782 = vmatprep.subr.mxu0 0.0
        %783 = vmatpush1.msra.mxu0 %v735
        %784 = vmatprep.subr.mxu0 0.0
        %785 = vmatpush1.msra.mxu0 %v734
        %786 = vmatprep.subr.mxu0 0.0
        %787 = vmatpush2.msra.mxu0 0.0
        %788 = vmatprep.subr.mxu0 0.0
        %789 = vmatpush2.msra.mxu0 0.0
        %790 = vmatprep.subr.mxu0 0.0
        %791 = vmatpush2.msra.mxu0 0.0
        %792 = vmatprep.subr.mxu0 0.0
        %793 = vmatpush2.msra.mxu0 0.0
        %794 = vmatprep.subr.mxu0 0.0
        %795 = vmatpush2.msra.mxu0 0.0
        %796 = vmatprep.subr.mxu0 0.0
        %797 = vmatpush2.msra.mxu0 0.0
        %798 = vmatprep.subr.mxu0 0.0
        %799 = vmatpush2.msra.mxu0 0.0
        %800 = vmatprep.subr.mxu0 0.0
        %801 = vmatpush2.msra.mxu0 0.0
        %802 = vmatprep.subr.mxu0 0.0
        %803 = vmatpush2.msra.mxu0 0.0
        %804 = vmatprep.subr.mxu0 0.0
        %805 = vmatpush2.msra.mxu0 0.0
        %806 = vmatprep.subr.mxu0 0.0
        %807 = vmatpush2.msra.mxu0 0.0
        %808 = vmatprep.subr.mxu0 0.0
        %809 = vmatpush2.msra.mxu0 0.0
        %810 = vmatprep.subr.mxu0 0.0
        %811 = vmatpush2.msra.mxu0 0.0
        %812 = vmatprep.subr.mxu0 0.0
        %813 = vmatpush2.msra.mxu0 0.0
        %814 = vmatprep.subr.mxu0 0.0
        %815 = vmatpush2.msra.mxu0 0.0
        %816 = vmatprep.subr.mxu0 0.0
        %817 = vmatpush2.msra.mxu0 0.0
        %818 = vmatprep.mubr.f32.mxu0 0.0
        %819 = vmatmul.mubr.f32.gmra.mxu0 %v752
        %v820 = vpop.f32.mrf.mxu0
        %v821 = vadd.f32 0.0, %v820
        %v822 = vpop.f32.mrf.mxu0
        %823 = vdwg.mxu0
        %824 = vmatprep.subr.mxu0 0.0
        %825 = vmatpush1.msra.mxu0 0.0
        %826 = vmatprep.subr.mxu0 0.0
        %827 = vmatpush1.msra.mxu0 0.0
        %828 = vmatprep.subr.mxu0 0.0
        %829 = vmatpush1.msra.mxu0 0.0
        %830 = vmatprep.subr.mxu0 0.0
        %831 = vmatpush1.msra.mxu0 0.0
        %832 = vmatprep.subr.mxu0 0.0
        %833 = vmatpush1.msra.mxu0 0.0
        %834 = vmatprep.subr.mxu0 0.0
        %835 = vmatpush1.msra.mxu0 0.0
        %836 = vmatprep.subr.mxu0 0.0
        %837 = vmatpush1.msra.mxu0 0.0
        %838 = vmatprep.subr.mxu0 0.0
        %839 = vmatpush1.msra.mxu0 0.0
        %840 = vmatprep.subr.mxu0 0.0
        %841 = vmatpush1.msra.mxu0 0.0
        %842 = vmatprep.subr.mxu0 0.0
        %843 = vmatpush1.msra.mxu0 0.0
        %844 = vmatprep.subr.mxu0 0.0
        %845 = vmatpush1.msra.mxu0 0.0
        %846 = vmatprep.subr.mxu0 0.0
        %847 = vmatpush1.msra.mxu0 0.0
        %848 = vmatprep.subr.mxu0 0.0
        %849 = vmatpush1.msra.mxu0 %v741
        %850 = vmatprep.subr.mxu0 0.0
        %851 = vmatpush1.msra.mxu0 %v740
        %852 = vmatprep.subr.mxu0 0.0
        %853 = vmatpush1.msra.mxu0 %v739
        %854 = vmatprep.subr.mxu0 0.0
        %855 = vmatpush1.msra.mxu0 %v738
        %856 = vmatprep.subr.mxu0 0.0
        %857 = vmatpush2.msra.mxu0 0.0
        %858 = vmatprep.subr.mxu0 0.0
        %859 = vmatpush2.msra.mxu0 0.0
        %860 = vmatprep.subr.mxu0 0.0
        %861 = vmatpush2.msra.mxu0 0.0
        %862 = vmatprep.subr.mxu0 0.0
        %863 = vmatpush2.msra.mxu0 0.0
        %864 = vmatprep.subr.mxu0 0.0
        %865 = vmatpush2.msra.mxu0 0.0
        %866 = vmatprep.subr.mxu0 0.0
        %867 = vmatpush2.msra.mxu0 0.0
        %868 = vmatprep.subr.mxu0 0.0
        %869 = vmatpush2.msra.mxu0 0.0
        %870 = vmatprep.subr.mxu0 0.0
        %871 = vmatpush2.msra.mxu0 0.0
        %872 = vmatprep.subr.mxu0 0.0
        %873 = vmatpush2.msra.mxu0 0.0
        %874 = vmatprep.subr.mxu0 0.0
        %875 = vmatpush2.msra.mxu0 0.0
        %876 = vmatprep.subr.mxu0 0.0
        %877 = vmatpush2.msra.mxu0 0.0
        %878 = vmatprep.subr.mxu0 0.0
        %879 = vmatpush2.msra.mxu0 0.0
        %880 = vmatprep.subr.mxu0 0.0
        %881 = vmatpush2.msra.mxu0 0.0
        %882 = vmatprep.subr.mxu0 0.0
        %883 = vmatpush2.msra.mxu0 0.0
        %884 = vmatprep.subr.mxu0 0.0
        %885 = vmatpush2.msra.mxu0 0.0
        %886 = vmatprep.subr.mxu0 0.0
        %887 = vmatpush2.msra.mxu0 0.0
        %888 = vmatprep.mubr.f32.mxu0 0.0
        %889 = vmatmul.mubr.f32.gmra.mxu0 %v752
        %v890 = vpop.f32.mrf.mxu0
        %v891 = vadd.f32 0.0, %v890
        %v892 = vpop.f32.mrf.mxu0
        %893 = vdwg.mxu0
        %894 = vmatprep.subr.mxu0 0.0
        %895 = vmatpush1.msra.mxu0 0.0
        %896 = vmatprep.subr.mxu0 0.0
        %897 = vmatpush1.msra.mxu0 0.0
        %898 = vmatprep.subr.mxu0 0.0
        %899 = vmatpush1.msra.mxu0 0.0
        %900 = vmatprep.subr.mxu0 0.0
        %901 = vmatpush1.msra.mxu0 0.0
        %902 = vmatprep.subr.mxu0 0.0
        %903 = vmatpush1.msra.mxu0 0.0
        %904 = vmatprep.subr.mxu0 0.0
        %905 = vmatpush1.msra.mxu0 0.0
        %906 = vmatprep.subr.mxu0 0.0
        %907 = vmatpush1.msra.mxu0 0.0
        %908 = vmatprep.subr.mxu0 0.0
        %909 = vmatpush1.msra.mxu0 0.0
        %910 = vmatprep.subr.mxu0 0.0
        %911 = vmatpush1.msra.mxu0 0.0
        %912 = vmatprep.subr.mxu0 0.0
        %913 = vmatpush1.msra.mxu0 0.0
        %914 = vmatprep.subr.mxu0 0.0
        %915 = vmatpush1.msra.mxu0 0.0
        %916 = vmatprep.subr.mxu0 0.0
        %917 = vmatpush1.msra.mxu0 0.0
        %918 = vmatprep.subr.mxu0 0.0
        %919 = vmatpush1.msra.mxu0 %v745
        %920 = vmatprep.subr.mxu0 0.0
        %921 = vmatpush1.msra.mxu0 %v744
        %922 = vmatprep.subr.mxu0 0.0
        %923 = vmatpush1.msra.mxu0 %v743
        %924 = vmatprep.subr.mxu0 0.0
        %925 = vmatpush1.msra.mxu0 %v742
        %926 = vmatprep.subr.mxu0 0.0
        %927 = vmatpush2.msra.mxu0 0.0
        %928 = vmatprep.subr.mxu0 0.0
        %929 = vmatpush2.msra.mxu0 0.0
        %930 = vmatprep.subr.mxu0 0.0
        %931 = vmatpush2.msra.mxu0 0.0
        %932 = vmatprep.subr.mxu0 0.0
        %933 = vmatpush2.msra.mxu0 0.0
        %934 = vmatprep.subr.mxu0 0.0
        %935 = vmatpush2.msra.mxu0 0.0
        %936 = vmatprep.subr.mxu0 0.0
        %937 = vmatpush2.msra.mxu0 0.0
        %938 = vmatprep.subr.mxu0 0.0
        %939 = vmatpush2.msra.mxu0 0.0
        %940 = vmatprep.subr.mxu0 0.0
        %941 = vmatpush2.msra.mxu0 0.0
        %942 = vmatprep.subr.mxu0 0.0
        %943 = vmatpush2.msra.mxu0 0.0
        %944 = vmatprep.subr.mxu0 0.0
        %945 = vmatpush2.msra.mxu0 0.0
        %946 = vmatprep.subr.mxu0 0.0
        %947 = vmatpush2.msra.mxu0 0.0
        %948 = vmatprep.subr.mxu0 0.0
        %949 = vmatpush2.msra.mxu0 0.0
        %950 = vmatprep.subr.mxu0 0.0
        %951 = vmatpush2.msra.mxu0 0.0
        %952 = vmatprep.subr.mxu0 0.0
        %953 = vmatpush2.msra.mxu0 0.0
        %954 = vmatprep.subr.mxu0 0.0
        %955 = vmatpush2.msra.mxu0 0.0
        %956 = vmatprep.subr.mxu0 0.0
        %957 = vmatpush2.msra.mxu0 0.0
        %958 = vmatprep.mubr.f32.mxu0 0.0
        %959 = vmatmul.mubr.f32.gmra.mxu0 %v752
        %v960 = vpop.f32.mrf.mxu0
        %v961 = vadd.f32 0.0, %v960
        %v962 = vpop.f32.mrf.mxu0
        %963 = vdwg.mxu0
        %964 = vmatprep.subr.mxu0 0.0
        %965 = vmatpush1.msra.mxu0 0.0
        %966 = vmatprep.subr.mxu0 0.0
        %967 = vmatpush1.msra.mxu0 0.0
        %968 = vmatprep.subr.mxu0 0.0
        %969 = vmatpush1.msra.mxu0 0.0
        %970 = vmatprep.subr.mxu0 0.0
        %971 = vmatpush1.msra.mxu0 0.0
        %972 = vmatprep.subr.mxu0 0.0
        %973 = vmatpush1.msra.mxu0 0.0
        %974 = vmatprep.subr.mxu0 0.0
        %975 = vmatpush1.msra.mxu0 0.0
        %976 = vmatprep.subr.mxu0 0.0
        %977 = vmatpush1.msra.mxu0 0.0
        %978 = vmatprep.subr.mxu0 0.0
        %979 = vmatpush1.msra.mxu0 0.0
        %980 = vmatprep.subr.mxu0 0.0
        %981 = vmatpush1.msra.mxu0 0.0
        %982 = vmatprep.subr.mxu0 0.0
        %983 = vmatpush1.msra.mxu0 0.0
        %984 = vmatprep.subr.mxu0 0.0
        %985 = vmatpush1.msra.mxu0 0.0
        %986 = vmatprep.subr.mxu0 0.0
        %987 = vmatpush1.msra.mxu0 0.0
        %988 = vmatprep.subr.mxu0 0.0
        %989 = vmatpush1.msra.mxu0 %v749
        %990 = vmatprep.subr.mxu0 0.0
        %991 = vmatpush1.msra.mxu0 %v748
        %992 = vmatprep.subr.mxu0 0.0
        %993 = vmatpush1.msra.mxu0 %v747
        %994 = vmatprep.subr.mxu0 0.0
        %995 = vmatpush1.msra.mxu0 %v746
        %996 = vmatprep.subr.mxu0 0.0
        %997 = vmatpush2.msra.mxu0 0.0
        %998 = vmatprep.subr.mxu0 0.0
        %999 = vmatpush2.msra.mxu0 0.0
        %1000 = vmatprep.subr.mxu0 0.0
        %1001 = vmatpush2.msra.mxu0 0.0
        %1002 = vmatprep.subr.mxu0 0.0
        %1003 = vmatpush2.msra.mxu0 0.0
        %1004 = vmatprep.subr.mxu0 0.0
        %1005 = vmatpush2.msra.mxu0 0.0
        %1006 = vmatprep.subr.mxu0 0.0
        %1007 = vmatpush2.msra.mxu0 0.0
        %1008 = vmatprep.subr.mxu0 0.0
        %1009 = vmatpush2.msra.mxu0 0.0
        %1010 = vmatprep.subr.mxu0 0.0
        %1011 = vmatpush2.msra.mxu0 0.0
        %1012 = vmatprep.subr.mxu0 0.0
        %1013 = vmatpush2.msra.mxu0 0.0
        %1014 = vmatprep.subr.mxu0 0.0
        %1015 = vmatpush2.msra.mxu0 0.0
        %1016 = vmatprep.subr.mxu0 0.0
        %1017 = vmatpush2.msra.mxu0 0.0
        %1018 = vmatprep.subr.mxu0 0.0
        %1019 = vmatpush2.msra.mxu0 0.0
        %1020 = vmatprep.subr.mxu0 0.0
        %1021 = vmatpush2.msra.mxu0 0.0
        %1022 = vmatprep.subr.mxu0 0.0
        %1023 = vmatpush2.msra.mxu0 0.0
        %1024 = vmatprep.subr.mxu0 0.0
        %1025 = vmatpush2.msra.mxu0 0.0
        %1026 = vmatprep.subr.mxu0 0.0
        %1027 = vmatpush2.msra.mxu0 0.0
        %1028 = vmatprep.mubr.f32.mxu0 0.0
        %1029 = vmatmul.mubr.f32.gmra.mxu0 %v752
        %v1030 = vpop.f32.mrf.mxu0
        %v1031 = vadd.f32 0.0, %v1030
        %v1032 = vpop.f32.mrf.mxu0
        %1033 = vdwg.mxu0
        %v1034 = vmul.f32 %v821, 0.35355338
        %v1035 = vmul.f32 %v891, 0.35355338
        %v1036 = vmul.f32 %v961, 0.35355338
        %v1037 = vmul.f32 %v1031, 0.35355338
        %v1038 = vld [vmem:[%s5] sm:$0xff]
        %v1039 = vld [vmem:[%s5 + $0x8] sm:$0xff]
        %v1040 = vld [vmem:[%s5 + $0x10] sm:$0xff]
        %v1041 = vld [vmem:[%s5 + $0x18] sm:$0xff]
        %v1042 = vld [vmem:[%s5 + $0x20] sm:$0xff]
        %v1043 = vld [vmem:[%s5 + $0x28] sm:$0xff]
        %v1044 = vld [vmem:[%s5 + $0x30] sm:$0xff]
        %v1045 = vld [vmem:[%s5 + $0x38] sm:$0xff]
        %v1046 = vld [vmem:[%s5 + $0x40] sm:$0xff]
        %v1047 = vld [vmem:[%s5 + $0x48] sm:$0xff]
        %v1048 = vld [vmem:[%s5 + $0x50] sm:$0xff]
        %v1049 = vld [vmem:[%s5 + $0x58] sm:$0xff]
        %v1050 = vld [vmem:[%s5 + $0x60] sm:$0xff]
        %v1051 = vld [vmem:[%s5 + $0x68] sm:$0xff]
        %v1052 = vld [vmem:[%s5 + $0x70] sm:$0xff]
        %v1053 = vld [vmem:[%s5 + $0x78] sm:$0xff]
        %1054 = vmatprep.subr.mxu0 0.0
        %1055 = vmatpush1.msra.mxu0 0.0
        %1056 = vmatprep.subr.mxu0 0.0
        %1057 = vmatpush1.msra.mxu0 0.0
        %1058 = vmatprep.subr.mxu0 0.0
        %1059 = vmatpush1.msra.mxu0 0.0
        %1060 = vmatprep.subr.mxu0 0.0
        %1061 = vmatpush1.msra.mxu0 0.0
        %1062 = vmatprep.subr.mxu0 0.0
        %1063 = vmatpush1.msra.mxu0 0.0
        %1064 = vmatprep.subr.mxu0 0.0
        %1065 = vmatpush1.msra.mxu0 0.0
        %1066 = vmatprep.subr.mxu0 0.0
        %1067 = vmatpush1.msra.mxu0 0.0
        %1068 = vmatprep.subr.mxu0 0.0
        %1069 = vmatpush1.msra.mxu0 0.0
        %1070 = vmatprep.subr.mxu0 0.0
        %1071 = vmatpush1.msra.mxu0 0.0
        %1072 = vmatprep.subr.mxu0 0.0
        %1073 = vmatpush1.msra.mxu0 0.0
        %1074 = vmatprep.subr.mxu0 0.0
        %1075 = vmatpush1.msra.mxu0 0.0
        %1076 = vmatprep.subr.mxu0 0.0
        %1077 = vmatpush1.msra.mxu0 0.0
        %1078 = vmatprep.subr.mxu0 0.0
        %1079 = vmatpush1.msra.mxu0 %v1041
        %1080 = vmatprep.subr.mxu0 0.0
        %1081 = vmatpush1.msra.mxu0 %v1040
        %1082 = vmatprep.subr.mxu0 0.0
        %1083 = vmatpush1.msra.mxu0 %v1039
        %1084 = vmatprep.subr.mxu0 0.0
        %1085 = vmatpush1.msra.mxu0 %v1038
        %1086 = vmatprep.subr.mxu0 0.0
        %1087 = vmatpush2.msra.mxu0 0.0
        %1088 = vmatprep.subr.mxu0 0.0
        %1089 = vmatpush2.msra.mxu0 0.0
        %1090 = vmatprep.subr.mxu0 0.0
        %1091 = vmatpush2.msra.mxu0 0.0
        %1092 = vmatprep.subr.mxu0 0.0
        %1093 = vmatpush2.msra.mxu0 0.0
        %1094 = vmatprep.subr.mxu0 0.0
        %1095 = vmatpush2.msra.mxu0 0.0
        %1096 = vmatprep.subr.mxu0 0.0
        %1097 = vmatpush2.msra.mxu0 0.0
        %1098 = vmatprep.subr.mxu0 0.0
        %1099 = vmatpush2.msra.mxu0 0.0
        %1100 = vmatprep.subr.mxu0 0.0
        %1101 = vmatpush2.msra.mxu0 0.0
        %1102 = vmatprep.subr.mxu0 0.0
        %1103 = vmatpush2.msra.mxu0 0.0
        %1104 = vmatprep.subr.mxu0 0.0
        %1105 = vmatpush2.msra.mxu0 0.0
        %1106 = vmatprep.subr.mxu0 0.0
        %1107 = vmatpush2.msra.mxu0 0.0
        %1108 = vmatprep.subr.mxu0 0.0
        %1109 = vmatpush2.msra.mxu0 0.0
        %1110 = vmatprep.subr.mxu0 0.0
        %1111 = vmatpush2.msra.mxu0 0.0
        %1112 = vmatprep.subr.mxu0 0.0
        %1113 = vmatpush2.msra.mxu0 0.0
        %1114 = vmatprep.subr.mxu0 0.0
        %1115 = vmatpush2.msra.mxu0 0.0
        %1116 = vmatprep.subr.mxu0 0.0
        %1117 = vmatpush2.msra.mxu0 0.0
        %1118 = vmatprep.mubr.f32.mxu0 0.0
        %1119 = vmatmul.mubr.f32.gmra.mxu0 %v752
        %v1120 = vpop.f32.mrf.mxu0
        %v1121 = vadd.f32 0.0, %v1120
        %v1122 = vpop.f32.mrf.mxu0
        %1123 = vdwg.mxu0
        %1124 = vmatprep.subr.mxu0 0.0
        %1125 = vmatpush1.msra.mxu0 0.0
        %1126 = vmatprep.subr.mxu0 0.0
        %1127 = vmatpush1.msra.mxu0 0.0
        %1128 = vmatprep.subr.mxu0 0.0
        %1129 = vmatpush1.msra.mxu0 0.0
        %1130 = vmatprep.subr.mxu0 0.0
        %1131 = vmatpush1.msra.mxu0 0.0
        %1132 = vmatprep.subr.mxu0 0.0
        %1133 = vmatpush1.msra.mxu0 0.0
        %1134 = vmatprep.subr.mxu0 0.0
        %1135 = vmatpush1.msra.mxu0 0.0
        %1136 = vmatprep.subr.mxu0 0.0
        %1137 = vmatpush1.msra.mxu0 0.0
        %1138 = vmatprep.subr.mxu0 0.0
        %1139 = vmatpush1.msra.mxu0 0.0
        %1140 = vmatprep.subr.mxu0 0.0
        %1141 = vmatpush1.msra.mxu0 0.0
        %1142 = vmatprep.subr.mxu0 0.0
        %1143 = vmatpush1.msra.mxu0 0.0
        %1144 = vmatprep.subr.mxu0 0.0
        %1145 = vmatpush1.msra.mxu0 0.0
        %1146 = vmatprep.subr.mxu0 0.0
        %1147 = vmatpush1.msra.mxu0 0.0
        %1148 = vmatprep.subr.mxu0 0.0
        %1149 = vmatpush1.msra.mxu0 %v1045
        %1150 = vmatprep.subr.mxu0 0.0
        %1151 = vmatpush1.msra.mxu0 %v1044
        %1152 = vmatprep.subr.mxu0 0.0
        %1153 = vmatpush1.msra.mxu0 %v1043
        %1154 = vmatprep.subr.mxu0 0.0
        %1155 = vmatpush1.msra.mxu0 %v1042
        %1156 = vmatprep.subr.mxu0 0.0
        %1157 = vmatpush2.msra.mxu0 0.0
        %1158 = vmatprep.subr.mxu0 0.0
        %1159 = vmatpush2.msra.mxu0 0.0
        %1160 = vmatprep.subr.mxu0 0.0
        %1161 = vmatpush2.msra.mxu0 0.0
        %1162 = vmatprep.subr.mxu0 0.0
        %1163 = vmatpush2.msra.mxu0 0.0
        %1164 = vmatprep.subr.mxu0 0.0
        %1165 = vmatpush2.msra.mxu0 0.0
        %1166 = vmatprep.subr.mxu0 0.0
        %1167 = vmatpush2.msra.mxu0 0.0
        %1168 = vmatprep.subr.mxu0 0.0
        %1169 = vmatpush2.msra.mxu0 0.0
        %1170 = vmatprep.subr.mxu0 0.0
        %1171 = vmatpush2.msra.mxu0 0.0
        %1172 = vmatprep.subr.mxu0 0.0
        %1173 = vmatpush2.msra.mxu0 0.0
        %1174 = vmatprep.subr.mxu0 0.0
        %1175 = vmatpush2.msra.mxu0 0.0
        %1176 = vmatprep.subr.mxu0 0.0
        %1177 = vmatpush2.msra.mxu0 0.0
        %1178 = vmatprep.subr.mxu0 0.0
        %1179 = vmatpush2.msra.mxu0 0.0
        %1180 = vmatprep.subr.mxu0 0.0
        %1181 = vmatpush2.msra.mxu0 0.0
        %1182 = vmatprep.subr.mxu0 0.0
        %1183 = vmatpush2.msra.mxu0 0.0
        %1184 = vmatprep.subr.mxu0 0.0
        %1185 = vmatpush2.msra.mxu0 0.0
        %1186 = vmatprep.subr.mxu0 0.0
        %1187 = vmatpush2.msra.mxu0 0.0
        %1188 = vmatprep.mubr.f32.mxu0 0.0
        %1189 = vmatmul.mubr.f32.gmra.mxu0 %v752
        %v1190 = vpop.f32.mrf.mxu0
        %v1191 = vadd.f32 0.0, %v1190
        %v1192 = vpop.f32.mrf.mxu0
        %1193 = vdwg.mxu0
        %1194 = vmatprep.subr.mxu0 0.0
        %1195 = vmatpush1.msra.mxu0 0.0
        %1196 = vmatprep.subr.mxu0 0.0
        %1197 = vmatpush1.msra.mxu0 0.0
        %1198 = vmatprep.subr.mxu0 0.0
        %1199 = vmatpush1.msra.mxu0 0.0
        %1200 = vmatprep.subr.mxu0 0.0
        %1201 = vmatpush1.msra.mxu0 0.0
        %1202 = vmatprep.subr.mxu0 0.0
        %1203 = vmatpush1.msra.mxu0 0.0
        %1204 = vmatprep.subr.mxu0 0.0
        %1205 = vmatpush1.msra.mxu0 0.0
        %1206 = vmatprep.subr.mxu0 0.0
        %1207 = vmatpush1.msra.mxu0 0.0
        %1208 = vmatprep.subr.mxu0 0.0
        %1209 = vmatpush1.msra.mxu0 0.0
        %1210 = vmatprep.subr.mxu0 0.0
        %1211 = vmatpush1.msra.mxu0 0.0
        %1212 = vmatprep.subr.mxu0 0.0
        %1213 = vmatpush1.msra.mxu0 0.0
        %1214 = vmatprep.subr.mxu0 0.0
        %1215 = vmatpush1.msra.mxu0 0.0
        %1216 = vmatprep.subr.mxu0 0.0
        %1217 = vmatpush1.msra.mxu0 0.0
        %1218 = vmatprep.subr.mxu0 0.0
        %1219 = vmatpush1.msra.mxu0 %v1049
        %1220 = vmatprep.subr.mxu0 0.0
        %1221 = vmatpush1.msra.mxu0 %v1048
        %1222 = vmatprep.subr.mxu0 0.0
        %1223 = vmatpush1.msra.mxu0 %v1047
        %1224 = vmatprep.subr.mxu0 0.0
        %1225 = vmatpush1.msra.mxu0 %v1046
        %1226 = vmatprep.subr.mxu0 0.0
        %1227 = vmatpush2.msra.mxu0 0.0
        %1228 = vmatprep.subr.mxu0 0.0
        %1229 = vmatpush2.msra.mxu0 0.0
        %1230 = vmatprep.subr.mxu0 0.0
        %1231 = vmatpush2.msra.mxu0 0.0
        %1232 = vmatprep.subr.mxu0 0.0
        %1233 = vmatpush2.msra.mxu0 0.0
        %1234 = vmatprep.subr.mxu0 0.0
        %1235 = vmatpush2.msra.mxu0 0.0
        %1236 = vmatprep.subr.mxu0 0.0
        %1237 = vmatpush2.msra.mxu0 0.0
        %1238 = vmatprep.subr.mxu0 0.0
        %1239 = vmatpush2.msra.mxu0 0.0
        %1240 = vmatprep.subr.mxu0 0.0
        %1241 = vmatpush2.msra.mxu0 0.0
        %1242 = vmatprep.subr.mxu0 0.0
        %1243 = vmatpush2.msra.mxu0 0.0
        %1244 = vmatprep.subr.mxu0 0.0
        %1245 = vmatpush2.msra.mxu0 0.0
        %1246 = vmatprep.subr.mxu0 0.0
        %1247 = vmatpush2.msra.mxu0 0.0
        %1248 = vmatprep.subr.mxu0 0.0
        %1249 = vmatpush2.msra.mxu0 0.0
        %1250 = vmatprep.subr.mxu0 0.0
        %1251 = vmatpush2.msra.mxu0 0.0
        %1252 = vmatprep.subr.mxu0 0.0
        %1253 = vmatpush2.msra.mxu0 0.0
        %1254 = vmatprep.subr.mxu0 0.0
        %1255 = vmatpush2.msra.mxu0 0.0
        %1256 = vmatprep.subr.mxu0 0.0
        %1257 = vmatpush2.msra.mxu0 0.0
        %1258 = vmatprep.mubr.f32.mxu0 0.0
        %1259 = vmatmul.mubr.f32.gmra.mxu0 %v752
        %v1260 = vpop.f32.mrf.mxu0
        %v1261 = vadd.f32 0.0, %v1260
        %v1262 = vpop.f32.mrf.mxu0
        %1263 = vdwg.mxu0
        %1264 = vmatprep.subr.mxu0 0.0
        %1265 = vmatpush1.msra.mxu0 0.0
        %1266 = vmatprep.subr.mxu0 0.0
        %1267 = vmatpush1.msra.mxu0 0.0
        %1268 = vmatprep.subr.mxu0 0.0
        %1269 = vmatpush1.msra.mxu0 0.0
        %1270 = vmatprep.subr.mxu0 0.0
        %1271 = vmatpush1.msra.mxu0 0.0
        %1272 = vmatprep.subr.mxu0 0.0
        %1273 = vmatpush1.msra.mxu0 0.0
        %1274 = vmatprep.subr.mxu0 0.0
        %1275 = vmatpush1.msra.mxu0 0.0
        %1276 = vmatprep.subr.mxu0 0.0
        %1277 = vmatpush1.msra.mxu0 0.0
        %1278 = vmatprep.subr.mxu0 0.0
        %1279 = vmatpush1.msra.mxu0 0.0
        %1280 = vmatprep.subr.mxu0 0.0
        %1281 = vmatpush1.msra.mxu0 0.0
        %1282 = vmatprep.subr.mxu0 0.0
        %1283 = vmatpush1.msra.mxu0 0.0
        %1284 = vmatprep.subr.mxu0 0.0
        %1285 = vmatpush1.msra.mxu0 0.0
        %1286 = vmatprep.subr.mxu0 0.0
        %1287 = vmatpush1.msra.mxu0 0.0
        %1288 = vmatprep.subr.mxu0 0.0
        %1289 = vmatpush1.msra.mxu0 %v1053
        %1290 = vmatprep.subr.mxu0 0.0
        %1291 = vmatpush1.msra.mxu0 %v1052
        %1292 = vmatprep.subr.mxu0 0.0
        %1293 = vmatpush1.msra.mxu0 %v1051
        %1294 = vmatprep.subr.mxu0 0.0
        %1295 = vmatpush1.msra.mxu0 %v1050
        %1296 = vmatprep.subr.mxu0 0.0
        %1297 = vmatpush2.msra.mxu0 0.0
        %1298 = vmatprep.subr.mxu0 0.0
        %1299 = vmatpush2.msra.mxu0 0.0
        %1300 = vmatprep.subr.mxu0 0.0
        %1301 = vmatpush2.msra.mxu0 0.0
        %1302 = vmatprep.subr.mxu0 0.0
        %1303 = vmatpush2.msra.mxu0 0.0
        %1304 = vmatprep.subr.mxu0 0.0
        %1305 = vmatpush2.msra.mxu0 0.0
        %1306 = vmatprep.subr.mxu0 0.0
        %1307 = vmatpush2.msra.mxu0 0.0
        %1308 = vmatprep.subr.mxu0 0.0
        %1309 = vmatpush2.msra.mxu0 0.0
        %1310 = vmatprep.subr.mxu0 0.0
        %1311 = vmatpush2.msra.mxu0 0.0
        %1312 = vmatprep.subr.mxu0 0.0
        %1313 = vmatpush2.msra.mxu0 0.0
        %1314 = vmatprep.subr.mxu0 0.0
        %1315 = vmatpush2.msra.mxu0 0.0
        %1316 = vmatprep.subr.mxu0 0.0
        %1317 = vmatpush2.msra.mxu0 0.0
        %1318 = vmatprep.subr.mxu0 0.0
        %1319 = vmatpush2.msra.mxu0 0.0
        %1320 = vmatprep.subr.mxu0 0.0
        %1321 = vmatpush2.msra.mxu0 0.0
        %1322 = vmatprep.subr.mxu0 0.0
        %1323 = vmatpush2.msra.mxu0 0.0
        %1324 = vmatprep.subr.mxu0 0.0
        %1325 = vmatpush2.msra.mxu0 0.0
        %1326 = vmatprep.subr.mxu0 0.0
        %1327 = vmatpush2.msra.mxu0 0.0
        %1328 = vmatprep.mubr.f32.mxu0 0.0
        %1329 = vmatmul.mubr.f32.gmra.mxu0 %v752
        %v1330 = vpop.f32.mrf.mxu0
        %v1331 = vadd.f32 0.0, %v1330
        %v1332 = vpop.f32.mrf.mxu0
        %1333 = vdwg.mxu0
        %v1334 = vld [vmem:[%s6] sm:$0xff]
        %v1335 = vld [vmem:[%s6 + $0x8] sm:$0xff]
        %v1336 = vld [vmem:[%s6 + $0x10] sm:$0xff]
        %v1337 = vld [vmem:[%s6 + $0x18] sm:$0xff]
        %v1338 = vld [vmem:[%s6 + $0x20] sm:$0xff]
        %v1339 = vld [vmem:[%s6 + $0x28] sm:$0xff]
        %v1340 = vld [vmem:[%s6 + $0x30] sm:$0xff]
        %v1341 = vld [vmem:[%s6 + $0x38] sm:$0xff]
        %v1342 = vld [vmem:[%s6 + $0x40] sm:$0xff]
        %v1343 = vld [vmem:[%s6 + $0x48] sm:$0xff]
        %v1344 = vld [vmem:[%s6 + $0x50] sm:$0xff]
        %v1345 = vld [vmem:[%s6 + $0x58] sm:$0xff]
        %v1346 = vld [vmem:[%s6 + $0x60] sm:$0xff]
        %v1347 = vld [vmem:[%s6 + $0x68] sm:$0xff]
        %v1348 = vld [vmem:[%s6 + $0x70] sm:$0xff]
        %v1349 = vld [vmem:[%s6 + $0x78] sm:$0xff]
        %1350 = vmatprep.subr.mxu0 0.0
        %1351 = vmatpush1.msra.mxu0 0.0
        %1352 = vmatprep.subr.mxu0 0.0
        %1353 = vmatpush1.msra.mxu0 0.0
        %1354 = vmatprep.subr.mxu0 0.0
        %1355 = vmatpush1.msra.mxu0 0.0
        %1356 = vmatprep.subr.mxu0 0.0
        %1357 = vmatpush1.msra.mxu0 0.0
        %1358 = vmatprep.subr.mxu0 0.0
        %1359 = vmatpush1.msra.mxu0 0.0
        %1360 = vmatprep.subr.mxu0 0.0
        %1361 = vmatpush1.msra.mxu0 0.0
        %1362 = vmatprep.subr.mxu0 0.0
        %1363 = vmatpush1.msra.mxu0 0.0
        %1364 = vmatprep.subr.mxu0 0.0
        %1365 = vmatpush1.msra.mxu0 0.0
        %1366 = vmatprep.subr.mxu0 0.0
        %1367 = vmatpush1.msra.mxu0 0.0
        %1368 = vmatprep.subr.mxu0 0.0
        %1369 = vmatpush1.msra.mxu0 0.0
        %1370 = vmatprep.subr.mxu0 0.0
        %1371 = vmatpush1.msra.mxu0 0.0
        %1372 = vmatprep.subr.mxu0 0.0
        %1373 = vmatpush1.msra.mxu0 0.0
        %1374 = vmatprep.subr.mxu0 0.0
        %1375 = vmatpush1.msra.mxu0 %v1337
        %1376 = vmatprep.subr.mxu0 0.0
        %1377 = vmatpush1.msra.mxu0 %v1336
        %1378 = vmatprep.subr.mxu0 0.0
        %1379 = vmatpush1.msra.mxu0 %v1335
        %1380 = vmatprep.subr.mxu0 0.0
        %1381 = vmatpush1.msra.mxu0 %v1334
        %1382 = vmatprep.subr.mxu0 0.0
        %1383 = vmatpush2.msra.mxu0 0.0
        %1384 = vmatprep.subr.mxu0 0.0
        %1385 = vmatpush2.msra.mxu0 0.0
        %1386 = vmatprep.subr.mxu0 0.0
        %1387 = vmatpush2.msra.mxu0 0.0
        %1388 = vmatprep.subr.mxu0 0.0
        %1389 = vmatpush2.msra.mxu0 0.0
        %1390 = vmatprep.subr.mxu0 0.0
        %1391 = vmatpush2.msra.mxu0 0.0
        %1392 = vmatprep.subr.mxu0 0.0
        %1393 = vmatpush2.msra.mxu0 0.0
        %1394 = vmatprep.subr.mxu0 0.0
        %1395 = vmatpush2.msra.mxu0 0.0
        %1396 = vmatprep.subr.mxu0 0.0
        %1397 = vmatpush2.msra.mxu0 0.0
        %1398 = vmatprep.subr.mxu0 0.0
        %1399 = vmatpush2.msra.mxu0 0.0
        %1400 = vmatprep.subr.mxu0 0.0
        %1401 = vmatpush2.msra.mxu0 0.0
        %1402 = vmatprep.subr.mxu0 0.0
        %1403 = vmatpush2.msra.mxu0 0.0
        %1404 = vmatprep.subr.mxu0 0.0
        %1405 = vmatpush2.msra.mxu0 0.0
        %1406 = vmatprep.subr.mxu0 0.0
        %1407 = vmatpush2.msra.mxu0 0.0
        %1408 = vmatprep.subr.mxu0 0.0
        %1409 = vmatpush2.msra.mxu0 0.0
        %1410 = vmatprep.subr.mxu0 0.0
        %1411 = vmatpush2.msra.mxu0 0.0
        %1412 = vmatprep.subr.mxu0 0.0
        %1413 = vmatpush2.msra.mxu0 0.0
        %1414 = vmatprep.mubr.f32.mxu0 0.0
        %1415 = vmatmul.mubr.f32.gmra.mxu0 %v752
        %v1416 = vpop.f32.mrf.mxu0
        %v1417 = vadd.f32 0.0, %v1416
        %v1418 = vpop.f32.mrf.mxu0
        %1419 = vdwg.mxu0
        %1420 = vmatprep.subr.mxu0 0.0
        %1421 = vmatpush1.msra.mxu0 0.0
        %1422 = vmatprep.subr.mxu0 0.0
        %1423 = vmatpush1.msra.mxu0 0.0
        %1424 = vmatprep.subr.mxu0 0.0
        %1425 = vmatpush1.msra.mxu0 0.0
        %1426 = vmatprep.subr.mxu0 0.0
        %1427 = vmatpush1.msra.mxu0 0.0
        %1428 = vmatprep.subr.mxu0 0.0
        %1429 = vmatpush1.msra.mxu0 0.0
        %1430 = vmatprep.subr.mxu0 0.0
        %1431 = vmatpush1.msra.mxu0 0.0
        %1432 = vmatprep.subr.mxu0 0.0
        %1433 = vmatpush1.msra.mxu0 0.0
        %1434 = vmatprep.subr.mxu0 0.0
        %1435 = vmatpush1.msra.mxu0 0.0
        %1436 = vmatprep.subr.mxu0 0.0
        %1437 = vmatpush1.msra.mxu0 0.0
        %1438 = vmatprep.subr.mxu0 0.0
        %1439 = vmatpush1.msra.mxu0 0.0
        %1440 = vmatprep.subr.mxu0 0.0
        %1441 = vmatpush1.msra.mxu0 0.0
        %1442 = vmatprep.subr.mxu0 0.0
        %1443 = vmatpush1.msra.mxu0 0.0
        %1444 = vmatprep.subr.mxu0 0.0
        %1445 = vmatpush1.msra.mxu0 %v1341
        %1446 = vmatprep.subr.mxu0 0.0
        %1447 = vmatpush1.msra.mxu0 %v1340
        %1448 = vmatprep.subr.mxu0 0.0
        %1449 = vmatpush1.msra.mxu0 %v1339
        %1450 = vmatprep.subr.mxu0 0.0
        %1451 = vmatpush1.msra.mxu0 %v1338
        %1452 = vmatprep.subr.mxu0 0.0
        %1453 = vmatpush2.msra.mxu0 0.0
        %1454 = vmatprep.subr.mxu0 0.0
        %1455 = vmatpush2.msra.mxu0 0.0
        %1456 = vmatprep.subr.mxu0 0.0
        %1457 = vmatpush2.msra.mxu0 0.0
        %1458 = vmatprep.subr.mxu0 0.0
        %1459 = vmatpush2.msra.mxu0 0.0
        %1460 = vmatprep.subr.mxu0 0.0
        %1461 = vmatpush2.msra.mxu0 0.0
        %1462 = vmatprep.subr.mxu0 0.0
        %1463 = vmatpush2.msra.mxu0 0.0
        %1464 = vmatprep.subr.mxu0 0.0
        %1465 = vmatpush2.msra.mxu0 0.0
        %1466 = vmatprep.subr.mxu0 0.0
        %1467 = vmatpush2.msra.mxu0 0.0
        %1468 = vmatprep.subr.mxu0 0.0
        %1469 = vmatpush2.msra.mxu0 0.0
        %1470 = vmatprep.subr.mxu0 0.0
        %1471 = vmatpush2.msra.mxu0 0.0
        %1472 = vmatprep.subr.mxu0 0.0
        %1473 = vmatpush2.msra.mxu0 0.0
        %1474 = vmatprep.subr.mxu0 0.0
        %1475 = vmatpush2.msra.mxu0 0.0
        %1476 = vmatprep.subr.mxu0 0.0
        %1477 = vmatpush2.msra.mxu0 0.0
        %1478 = vmatprep.subr.mxu0 0.0
        %1479 = vmatpush2.msra.mxu0 0.0
        %1480 = vmatprep.subr.mxu0 0.0
        %1481 = vmatpush2.msra.mxu0 0.0
        %1482 = vmatprep.subr.mxu0 0.0
        %1483 = vmatpush2.msra.mxu0 0.0
        %1484 = vmatprep.mubr.f32.mxu0 0.0
        %1485 = vmatmul.mubr.f32.gmra.mxu0 %v752
        %v1486 = vpop.f32.mrf.mxu0
        %v1487 = vadd.f32 0.0, %v1486
        %v1488 = vpop.f32.mrf.mxu0
        %1489 = vdwg.mxu0
        %1490 = vmatprep.subr.mxu0 0.0
        %1491 = vmatpush1.msra.mxu0 0.0
        %1492 = vmatprep.subr.mxu0 0.0
        %1493 = vmatpush1.msra.mxu0 0.0
        %1494 = vmatprep.subr.mxu0 0.0
        %1495 = vmatpush1.msra.mxu0 0.0
        %1496 = vmatprep.subr.mxu0 0.0
        %1497 = vmatpush1.msra.mxu0 0.0
        %1498 = vmatprep.subr.mxu0 0.0
        %1499 = vmatpush1.msra.mxu0 0.0
        %1500 = vmatprep.subr.mxu0 0.0
        %1501 = vmatpush1.msra.mxu0 0.0
        %1502 = vmatprep.subr.mxu0 0.0
        %1503 = vmatpush1.msra.mxu0 0.0
        %1504 = vmatprep.subr.mxu0 0.0
        %1505 = vmatpush1.msra.mxu0 0.0
        %1506 = vmatprep.subr.mxu0 0.0
        %1507 = vmatpush1.msra.mxu0 0.0
        %1508 = vmatprep.subr.mxu0 0.0
        %1509 = vmatpush1.msra.mxu0 0.0
        %1510 = vmatprep.subr.mxu0 0.0
        %1511 = vmatpush1.msra.mxu0 0.0
        %1512 = vmatprep.subr.mxu0 0.0
        %1513 = vmatpush1.msra.mxu0 0.0
        %1514 = vmatprep.subr.mxu0 0.0
        %1515 = vmatpush1.msra.mxu0 %v1345
        %1516 = vmatprep.subr.mxu0 0.0
        %1517 = vmatpush1.msra.mxu0 %v1344
        %1518 = vmatprep.subr.mxu0 0.0
        %1519 = vmatpush1.msra.mxu0 %v1343
        %1520 = vmatprep.subr.mxu0 0.0
        %1521 = vmatpush1.msra.mxu0 %v1342
        %1522 = vmatprep.subr.mxu0 0.0
        %1523 = vmatpush2.msra.mxu0 0.0
        %1524 = vmatprep.subr.mxu0 0.0
        %1525 = vmatpush2.msra.mxu0 0.0
        %1526 = vmatprep.subr.mxu0 0.0
        %1527 = vmatpush2.msra.mxu0 0.0
        %1528 = vmatprep.subr.mxu0 0.0
        %1529 = vmatpush2.msra.mxu0 0.0
        %1530 = vmatprep.subr.mxu0 0.0
        %1531 = vmatpush2.msra.mxu0 0.0
        %1532 = vmatprep.subr.mxu0 0.0
        %1533 = vmatpush2.msra.mxu0 0.0
        %1534 = vmatprep.subr.mxu0 0.0
        %1535 = vmatpush2.msra.mxu0 0.0
        %1536 = vmatprep.subr.mxu0 0.0
        %1537 = vmatpush2.msra.mxu0 0.0
        %1538 = vmatprep.subr.mxu0 0.0
        %1539 = vmatpush2.msra.mxu0 0.0
        %1540 = vmatprep.subr.mxu0 0.0
        %1541 = vmatpush2.msra.mxu0 0.0
        %1542 = vmatprep.subr.mxu0 0.0
        %1543 = vmatpush2.msra.mxu0 0.0
        %1544 = vmatprep.subr.mxu0 0.0
        %1545 = vmatpush2.msra.mxu0 0.0
        %1546 = vmatprep.subr.mxu0 0.0
        %1547 = vmatpush2.msra.mxu0 0.0
        %1548 = vmatprep.subr.mxu0 0.0
        %1549 = vmatpush2.msra.mxu0 0.0
        %1550 = vmatprep.subr.mxu0 0.0
        %1551 = vmatpush2.msra.mxu0 0.0
        %1552 = vmatprep.subr.mxu0 0.0
        %1553 = vmatpush2.msra.mxu0 0.0
        %1554 = vmatprep.mubr.f32.mxu0 0.0
        %1555 = vmatmul.mubr.f32.gmra.mxu0 %v752
        %v1556 = vpop.f32.mrf.mxu0
        %v1557 = vadd.f32 0.0, %v1556
        %v1558 = vpop.f32.mrf.mxu0
        %1559 = vdwg.mxu0
        %1560 = vmatprep.subr.mxu0 0.0
        %1561 = vmatpush1.msra.mxu0 0.0
        %1562 = vmatprep.subr.mxu0 0.0
        %1563 = vmatpush1.msra.mxu0 0.0
        %1564 = vmatprep.subr.mxu0 0.0
        %1565 = vmatpush1.msra.mxu0 0.0
        %1566 = vmatprep.subr.mxu0 0.0
        %1567 = vmatpush1.msra.mxu0 0.0
        %1568 = vmatprep.subr.mxu0 0.0
        %1569 = vmatpush1.msra.mxu0 0.0
        %1570 = vmatprep.subr.mxu0 0.0
        %1571 = vmatpush1.msra.mxu0 0.0
        %1572 = vmatprep.subr.mxu0 0.0
        %1573 = vmatpush1.msra.mxu0 0.0
        %1574 = vmatprep.subr.mxu0 0.0
        %1575 = vmatpush1.msra.mxu0 0.0
        %1576 = vmatprep.subr.mxu0 0.0
        %1577 = vmatpush1.msra.mxu0 0.0
        %1578 = vmatprep.subr.mxu0 0.0
        %1579 = vmatpush1.msra.mxu0 0.0
        %1580 = vmatprep.subr.mxu0 0.0
        %1581 = vmatpush1.msra.mxu0 0.0
        %1582 = vmatprep.subr.mxu0 0.0
        %1583 = vmatpush1.msra.mxu0 0.0
        %1584 = vmatprep.subr.mxu0 0.0
        %1585 = vmatpush1.msra.mxu0 %v1349
        %1586 = vmatprep.subr.mxu0 0.0
        %1587 = vmatpush1.msra.mxu0 %v1348
        %1588 = vmatprep.subr.mxu0 0.0
        %1589 = vmatpush1.msra.mxu0 %v1347
        %1590 = vmatprep.subr.mxu0 0.0
        %1591 = vmatpush1.msra.mxu0 %v1346
        %1592 = vmatprep.subr.mxu0 0.0
        %1593 = vmatpush2.msra.mxu0 0.0
        %1594 = vmatprep.subr.mxu0 0.0
        %1595 = vmatpush2.msra.mxu0 0.0
        %1596 = vmatprep.subr.mxu0 0.0
        %1597 = vmatpush2.msra.mxu0 0.0
        %1598 = vmatprep.subr.mxu0 0.0
        %1599 = vmatpush2.msra.mxu0 0.0
        %1600 = vmatprep.subr.mxu0 0.0
        %1601 = vmatpush2.msra.mxu0 0.0
        %1602 = vmatprep.subr.mxu0 0.0
        %1603 = vmatpush2.msra.mxu0 0.0
        %1604 = vmatprep.subr.mxu0 0.0
        %1605 = vmatpush2.msra.mxu0 0.0
        %1606 = vmatprep.subr.mxu0 0.0
        %1607 = vmatpush2.msra.mxu0 0.0
        %1608 = vmatprep.subr.mxu0 0.0
        %1609 = vmatpush2.msra.mxu0 0.0
        %1610 = vmatprep.subr.mxu0 0.0
        %1611 = vmatpush2.msra.mxu0 0.0
        %1612 = vmatprep.subr.mxu0 0.0
        %1613 = vmatpush2.msra.mxu0 0.0
        %1614 = vmatprep.subr.mxu0 0.0
        %1615 = vmatpush2.msra.mxu0 0.0
        %1616 = vmatprep.subr.mxu0 0.0
        %1617 = vmatpush2.msra.mxu0 0.0
        %1618 = vmatprep.subr.mxu0 0.0
        %1619 = vmatpush2.msra.mxu0 0.0
        %1620 = vmatprep.subr.mxu0 0.0
        %1621 = vmatpush2.msra.mxu0 0.0
        %1622 = vmatprep.subr.mxu0 0.0
        %1623 = vmatpush2.msra.mxu0 0.0
        %1624 = vmatprep.mubr.f32.mxu0 0.0
        %1625 = vmatmul.mubr.f32.gmra.mxu0 %v752
        %v1626 = vpop.f32.mrf.mxu0
        %v1627 = vadd.f32 0.0, %v1626
        %v1628 = vpop.f32.mrf.mxu0
        %1629 = vdwg.mxu0
        %vm1630 = vcmask 64512
        %v1632 = vsel %vm1630, %v1034, 0
        %v1635 = vsel %vm1630, %v1121, 0
        %1637 = vmatprep.subr.mxu0 0.0
        %1638 = vmatpush1.xpose.msra.mxu0 0.0
        %1639 = vmatprep.subr.mxu0 0.0
        %1640 = vmatpush1.xpose.msra.mxu0 0.0
        %1641 = vmatprep.subr.mxu0 0.0
        %1642 = vmatpush1.xpose.msra.mxu0 0.0
        %1643 = vmatprep.subr.mxu0 0.0
        %1644 = vmatpush1.xpose.msra.mxu0 0.0
        %1645 = vmatprep.subr.mxu0 0.0
        %1646 = vmatpush1.xpose.msra.mxu0 0.0
        %1647 = vmatprep.subr.mxu0 0.0
        %1648 = vmatpush1.xpose.msra.mxu0 0.0
        %1649 = vmatprep.subr.mxu0 0.0
        %1650 = vmatpush1.xpose.msra.mxu0 0.0
        %1651 = vmatprep.subr.mxu0 0.0
        %1652 = vmatpush1.xpose.msra.mxu0 0.0
        %1653 = vmatprep.subr.mxu0 0.0
        %1654 = vmatpush1.xpose.msra.mxu0 0.0
        %1655 = vmatprep.subr.mxu0 0.0
        %1656 = vmatpush1.xpose.msra.mxu0 0.0
        %1657 = vmatprep.subr.mxu0 0.0
        %1658 = vmatpush1.xpose.msra.mxu0 0.0
        %1659 = vmatprep.subr.mxu0 0.0
        %1660 = vmatpush1.xpose.msra.mxu0 0.0
        %1661 = vmatprep.subr.mxu0 0.0
        %1662 = vmatpush1.xpose.msra.mxu0 0.0
        %1663 = vmatprep.subr.mxu0 0.0
        %1664 = vmatpush1.xpose.msra.mxu0 0.0
        %1665 = vmatprep.subr.mxu0 0.0
        %1666 = vmatpush1.xpose.msra.mxu0 0.0
        %1667 = vmatprep.subr.mxu0 0.0
        %1668 = vmatpush1.xpose.msra.mxu0 %v1635
        %1669 = vmatprep.subr.mxu0 0.0
        %1670 = vmatpush2.xpose.msra.mxu0 0.0
        %1671 = vmatprep.subr.mxu0 0.0
        %1672 = vmatpush2.xpose.msra.mxu0 0.0
        %1673 = vmatprep.subr.mxu0 0.0
        %1674 = vmatpush2.xpose.msra.mxu0 0.0
        %1675 = vmatprep.subr.mxu0 0.0
        %1676 = vmatpush2.xpose.msra.mxu0 0.0
        %1677 = vmatprep.subr.mxu0 0.0
        %1678 = vmatpush2.xpose.msra.mxu0 0.0
        %1679 = vmatprep.subr.mxu0 0.0
        %1680 = vmatpush2.xpose.msra.mxu0 0.0
        %1681 = vmatprep.subr.mxu0 0.0
        %1682 = vmatpush2.xpose.msra.mxu0 0.0
        %1683 = vmatprep.subr.mxu0 0.0
        %1684 = vmatpush2.xpose.msra.mxu0 0.0
        %1685 = vmatprep.subr.mxu0 0.0
        %1686 = vmatpush2.xpose.msra.mxu0 0.0
        %1687 = vmatprep.subr.mxu0 0.0
        %1688 = vmatpush2.xpose.msra.mxu0 0.0
        %1689 = vmatprep.subr.mxu0 0.0
        %1690 = vmatpush2.xpose.msra.mxu0 0.0
        %1691 = vmatprep.subr.mxu0 0.0
        %1692 = vmatpush2.xpose.msra.mxu0 0.0
        %1693 = vmatprep.subr.mxu0 0.0
        %1694 = vmatpush2.xpose.msra.mxu0 0.0
        %1695 = vmatprep.subr.mxu0 0.0
        %1696 = vmatpush2.xpose.msra.mxu0 0.0
        %1697 = vmatprep.subr.mxu0 0.0
        %1698 = vmatpush2.xpose.msra.mxu0 0.0
        %1699 = vmatprep.subr.mxu0 0.0
        %1700 = vmatpush2.xpose.msra.mxu0 0.0
        %1701 = vmatprep.mubr.f32.mxu0 0.0
        %1702 = vmatmul.mubr.f32.gmra.mxu0 %v1632
        %v1703 = vpop.f32.mrf.mxu0
        %v1704 = vadd.f32 0.0, %v1703
        %v1705 = vpop.f32.mrf.mxu0
        %1706 = vdwg.mxu0
        %v1708 = vsel %vm1630, %v1035, 0
        %v1711 = vsel %vm1630, %v1191, 0
        %1713 = vmatprep.subr.mxu0 0.0
        %1714 = vmatpush1.xpose.msra.mxu0 0.0
        %1715 = vmatprep.subr.mxu0 0.0
        %1716 = vmatpush1.xpose.msra.mxu0 0.0
        %1717 = vmatprep.subr.mxu0 0.0
        %1718 = vmatpush1.xpose.msra.mxu0 0.0
        %1719 = vmatprep.subr.mxu0 0.0
        %1720 = vmatpush1.xpose.msra.mxu0 0.0
        %1721 = vmatprep.subr.mxu0 0.0
        %1722 = vmatpush1.xpose.msra.mxu0 0.0
        %1723 = vmatprep.subr.mxu0 0.0
        %1724 = vmatpush1.xpose.msra.mxu0 0.0
        %1725 = vmatprep.subr.mxu0 0.0
        %1726 = vmatpush1.xpose.msra.mxu0 0.0
        %1727 = vmatprep.subr.mxu0 0.0
        %1728 = vmatpush1.xpose.msra.mxu0 0.0
        %1729 = vmatprep.subr.mxu0 0.0
        %1730 = vmatpush1.xpose.msra.mxu0 0.0
        %1731 = vmatprep.subr.mxu0 0.0
        %1732 = vmatpush1.xpose.msra.mxu0 0.0
        %1733 = vmatprep.subr.mxu0 0.0
        %1734 = vmatpush1.xpose.msra.mxu0 0.0
        %1735 = vmatprep.subr.mxu0 0.0
        %1736 = vmatpush1.xpose.msra.mxu0 0.0
        %1737 = vmatprep.subr.mxu0 0.0
        %1738 = vmatpush1.xpose.msra.mxu0 0.0
        %1739 = vmatprep.subr.mxu0 0.0
        %1740 = vmatpush1.xpose.msra.mxu0 0.0
        %1741 = vmatprep.subr.mxu0 0.0
        %1742 = vmatpush1.xpose.msra.mxu0 0.0
        %1743 = vmatprep.subr.mxu0 0.0
        %1744 = vmatpush1.xpose.msra.mxu0 %v1711
        %1745 = vmatprep.subr.mxu0 0.0
        %1746 = vmatpush2.xpose.msra.mxu0 0.0
        %1747 = vmatprep.subr.mxu0 0.0
        %1748 = vmatpush2.xpose.msra.mxu0 0.0
        %1749 = vmatprep.subr.mxu0 0.0
        %1750 = vmatpush2.xpose.msra.mxu0 0.0
        %1751 = vmatprep.subr.mxu0 0.0
        %1752 = vmatpush2.xpose.msra.mxu0 0.0
        %1753 = vmatprep.subr.mxu0 0.0
        %1754 = vmatpush2.xpose.msra.mxu0 0.0
        %1755 = vmatprep.subr.mxu0 0.0
        %1756 = vmatpush2.xpose.msra.mxu0 0.0
        %1757 = vmatprep.subr.mxu0 0.0
        %1758 = vmatpush2.xpose.msra.mxu0 0.0
        %1759 = vmatprep.subr.mxu0 0.0
        %1760 = vmatpush2.xpose.msra.mxu0 0.0
        %1761 = vmatprep.subr.mxu0 0.0
        %1762 = vmatpush2.xpose.msra.mxu0 0.0
        %1763 = vmatprep.subr.mxu0 0.0
        %1764 = vmatpush2.xpose.msra.mxu0 0.0
        %1765 = vmatprep.subr.mxu0 0.0
        %1766 = vmatpush2.xpose.msra.mxu0 0.0
        %1767 = vmatprep.subr.mxu0 0.0
        %1768 = vmatpush2.xpose.msra.mxu0 0.0
        %1769 = vmatprep.subr.mxu0 0.0
        %1770 = vmatpush2.xpose.msra.mxu0 0.0
        %1771 = vmatprep.subr.mxu0 0.0
        %1772 = vmatpush2.xpose.msra.mxu0 0.0
        %1773 = vmatprep.subr.mxu0 0.0
        %1774 = vmatpush2.xpose.msra.mxu0 0.0
        %1775 = vmatprep.subr.mxu0 0.0
        %1776 = vmatpush2.xpose.msra.mxu0 0.0
        %1777 = vmatprep.mubr.f32.mxu0 0.0
        %1778 = vmatmul.mubr.f32.gmra.mxu0 %v1708
        %v1779 = vpop.f32.mrf.mxu0
        %v1780 = vadd.f32 0.0, %v1779
        %v1781 = vpop.f32.mrf.mxu0
        %1782 = vdwg.mxu0
        %v1784 = vsel %vm1630, %v1036, 0
        %v1787 = vsel %vm1630, %v1261, 0
        %1789 = vmatprep.subr.mxu0 0.0
        %1790 = vmatpush1.xpose.msra.mxu0 0.0
        %1791 = vmatprep.subr.mxu0 0.0
        %1792 = vmatpush1.xpose.msra.mxu0 0.0
        %1793 = vmatprep.subr.mxu0 0.0
        %1794 = vmatpush1.xpose.msra.mxu0 0.0
        %1795 = vmatprep.subr.mxu0 0.0
        %1796 = vmatpush1.xpose.msra.mxu0 0.0
        %1797 = vmatprep.subr.mxu0 0.0
        %1798 = vmatpush1.xpose.msra.mxu0 0.0
        %1799 = vmatprep.subr.mxu0 0.0
        %1800 = vmatpush1.xpose.msra.mxu0 0.0
        %1801 = vmatprep.subr.mxu0 0.0
        %1802 = vmatpush1.xpose.msra.mxu0 0.0
        %1803 = vmatprep.subr.mxu0 0.0
        %1804 = vmatpush1.xpose.msra.mxu0 0.0
        %1805 = vmatprep.subr.mxu0 0.0
        %1806 = vmatpush1.xpose.msra.mxu0 0.0
        %1807 = vmatprep.subr.mxu0 0.0
        %1808 = vmatpush1.xpose.msra.mxu0 0.0
        %1809 = vmatprep.subr.mxu0 0.0
        %1810 = vmatpush1.xpose.msra.mxu0 0.0
        %1811 = vmatprep.subr.mxu0 0.0
        %1812 = vmatpush1.xpose.msra.mxu0 0.0
        %1813 = vmatprep.subr.mxu0 0.0
        %1814 = vmatpush1.xpose.msra.mxu0 0.0
        %1815 = vmatprep.subr.mxu0 0.0
        %1816 = vmatpush1.xpose.msra.mxu0 0.0
        %1817 = vmatprep.subr.mxu0 0.0
        %1818 = vmatpush1.xpose.msra.mxu0 0.0
        %1819 = vmatprep.subr.mxu0 0.0
        %1820 = vmatpush1.xpose.msra.mxu0 %v1787
        %1821 = vmatprep.subr.mxu0 0.0
        %1822 = vmatpush2.xpose.msra.mxu0 0.0
        %1823 = vmatprep.subr.mxu0 0.0
        %1824 = vmatpush2.xpose.msra.mxu0 0.0
        %1825 = vmatprep.subr.mxu0 0.0
        %1826 = vmatpush2.xpose.msra.mxu0 0.0
        %1827 = vmatprep.subr.mxu0 0.0
        %1828 = vmatpush2.xpose.msra.mxu0 0.0
        %1829 = vmatprep.subr.mxu0 0.0
        %1830 = vmatpush2.xpose.msra.mxu0 0.0
        %1831 = vmatprep.subr.mxu0 0.0
        %1832 = vmatpush2.xpose.msra.mxu0 0.0
        %1833 = vmatprep.subr.mxu0 0.0
        %1834 = vmatpush2.xpose.msra.mxu0 0.0
        %1835 = vmatprep.subr.mxu0 0.0
        %1836 = vmatpush2.xpose.msra.mxu0 0.0
        %1837 = vmatprep.subr.mxu0 0.0
        %1838 = vmatpush2.xpose.msra.mxu0 0.0
        %1839 = vmatprep.subr.mxu0 0.0
        %1840 = vmatpush2.xpose.msra.mxu0 0.0
        %1841 = vmatprep.subr.mxu0 0.0
        %1842 = vmatpush2.xpose.msra.mxu0 0.0
        %1843 = vmatprep.subr.mxu0 0.0
        %1844 = vmatpush2.xpose.msra.mxu0 0.0
        %1845 = vmatprep.subr.mxu0 0.0
        %1846 = vmatpush2.xpose.msra.mxu0 0.0
        %1847 = vmatprep.subr.mxu0 0.0
        %1848 = vmatpush2.xpose.msra.mxu0 0.0
        %1849 = vmatprep.subr.mxu0 0.0
        %1850 = vmatpush2.xpose.msra.mxu0 0.0
        %1851 = vmatprep.subr.mxu0 0.0
        %1852 = vmatpush2.xpose.msra.mxu0 0.0
        %1853 = vmatprep.mubr.f32.mxu0 0.0
        %1854 = vmatmul.mubr.f32.gmra.mxu0 %v1784
        %v1855 = vpop.f32.mrf.mxu0
        %v1856 = vadd.f32 0.0, %v1855
        %v1857 = vpop.f32.mrf.mxu0
        %1858 = vdwg.mxu0
        %v1860 = vsel %vm1630, %v1037, 0
        %v1863 = vsel %vm1630, %v1331, 0
        %1865 = vmatprep.subr.mxu0 0.0
        %1866 = vmatpush1.xpose.msra.mxu0 0.0
        %1867 = vmatprep.subr.mxu0 0.0
        %1868 = vmatpush1.xpose.msra.mxu0 0.0
        %1869 = vmatprep.subr.mxu0 0.0
        %1870 = vmatpush1.xpose.msra.mxu0 0.0
        %1871 = vmatprep.subr.mxu0 0.0
        %1872 = vmatpush1.xpose.msra.mxu0 0.0
        %1873 = vmatprep.subr.mxu0 0.0
        %1874 = vmatpush1.xpose.msra.mxu0 0.0
        %1875 = vmatprep.subr.mxu0 0.0
        %1876 = vmatpush1.xpose.msra.mxu0 0.0
        %1877 = vmatprep.subr.mxu0 0.0
        %1878 = vmatpush1.xpose.msra.mxu0 0.0
        %1879 = vmatprep.subr.mxu0 0.0
        %1880 = vmatpush1.xpose.msra.mxu0 0.0
        %1881 = vmatprep.subr.mxu0 0.0
        %1882 = vmatpush1.xpose.msra.mxu0 0.0
        %1883 = vmatprep.subr.mxu0 0.0
        %1884 = vmatpush1.xpose.msra.mxu0 0.0
        %1885 = vmatprep.subr.mxu0 0.0
        %1886 = vmatpush1.xpose.msra.mxu0 0.0
        %1887 = vmatprep.subr.mxu0 0.0
        %1888 = vmatpush1.xpose.msra.mxu0 0.0
        %1889 = vmatprep.subr.mxu0 0.0
        %1890 = vmatpush1.xpose.msra.mxu0 0.0
        %1891 = vmatprep.subr.mxu0 0.0
        %1892 = vmatpush1.xpose.msra.mxu0 0.0
        %1893 = vmatprep.subr.mxu0 0.0
        %1894 = vmatpush1.xpose.msra.mxu0 0.0
        %1895 = vmatprep.subr.mxu0 0.0
        %1896 = vmatpush1.xpose.msra.mxu0 %v1863
        %1897 = vmatprep.subr.mxu0 0.0
        %1898 = vmatpush2.xpose.msra.mxu0 0.0
        %1899 = vmatprep.subr.mxu0 0.0
        %1900 = vmatpush2.xpose.msra.mxu0 0.0
        %1901 = vmatprep.subr.mxu0 0.0
        %1902 = vmatpush2.xpose.msra.mxu0 0.0
        %1903 = vmatprep.subr.mxu0 0.0
        %1904 = vmatpush2.xpose.msra.mxu0 0.0
        %1905 = vmatprep.subr.mxu0 0.0
        %1906 = vmatpush2.xpose.msra.mxu0 0.0
        %1907 = vmatprep.subr.mxu0 0.0
        %1908 = vmatpush2.xpose.msra.mxu0 0.0
        %1909 = vmatprep.subr.mxu0 0.0
        %1910 = vmatpush2.xpose.msra.mxu0 0.0
        %1911 = vmatprep.subr.mxu0 0.0
        %1912 = vmatpush2.xpose.msra.mxu0 0.0
        %1913 = vmatprep.subr.mxu0 0.0
        %1914 = vmatpush2.xpose.msra.mxu0 0.0
        %1915 = vmatprep.subr.mxu0 0.0
        %1916 = vmatpush2.xpose.msra.mxu0 0.0
        %1917 = vmatprep.subr.mxu0 0.0
        %1918 = vmatpush2.xpose.msra.mxu0 0.0
        %1919 = vmatprep.subr.mxu0 0.0
        %1920 = vmatpush2.xpose.msra.mxu0 0.0
        %1921 = vmatprep.subr.mxu0 0.0
        %1922 = vmatpush2.xpose.msra.mxu0 0.0
        %1923 = vmatprep.subr.mxu0 0.0
        %1924 = vmatpush2.xpose.msra.mxu0 0.0
        %1925 = vmatprep.subr.mxu0 0.0
        %1926 = vmatpush2.xpose.msra.mxu0 0.0
        %1927 = vmatprep.subr.mxu0 0.0
        %1928 = vmatpush2.xpose.msra.mxu0 0.0
        %1929 = vmatprep.mubr.f32.mxu0 0.0
        %1930 = vmatmul.mubr.f32.gmra.mxu0 %v1860
        %v1931 = vpop.f32.mrf.mxu0
        %v1932 = vadd.f32 0.0, %v1931
        %v1933 = vpop.f32.mrf.mxu0
        %1934 = vdwg.mxu0
        %v1935 = vsel %vm733, 1, 0
        %vm1936 = vcmp.eq.s32.totalorder %v1935, 1
        %v1937 = vsel %vm1936, -1e+09, %v1704
        %v1938 = vsel %vm1936, -1e+09, %v1780
        %v1939 = vsel %vm1936, -1e+09, %v1856
        %v1940 = vsel %vm1936, -1e+09, %v1932
        %v1941 = vsel %vm1630, %v1937, -inf
        %1942 = vmax.xlane.f32.xlu0 %v1941
        %v1943 = vpop.xlane.xlu0 %1942
        %v1944 = vsel %vm1630, %v1938, -inf
        %1945 = vmax.xlane.f32.xlu0 %v1944
        %v1946 = vpop.xlane.xlu0 %1945
        %v1947 = vsel %vm1630, %v1939, -inf
        %1948 = vmax.xlane.f32.xlu0 %v1947
        %v1949 = vpop.xlane.xlu0 %1948
        %v1950 = vsel %vm1630, %v1940, -inf
        %1951 = vmax.xlane.f32.xlu0 %v1950
        %v1952 = vpop.xlane.xlu0 %1951
        %v1953 = vsub.f32 %v1937, %v1943
        %v1954 = vsub.f32 %v1938, %v1946
        %v1955 = vsub.f32 %v1939, %v1949
        %v1956 = vsub.f32 %v1940, %v1952
        %v1957 = vmul.f32 %v1953, 1.442695
        %v1958 = vpow.pop %v1957
        %v1959 = vmul.f32 %v1954, 1.442695
        %v1960 = vpow.pop %v1959
        %v1961 = vmul.f32 %v1955, 1.442695
        %v1962 = vpow.pop %v1961
        %v1963 = vmul.f32 %v1956, 1.442695
        %v1964 = vpow.pop %v1963
        %v1965 = vsel %vm1630, %v1958, 0.0
        %1966 = vadd.xlane.f32.xlu0 %v1965
        %v1967 = vpop.xlane.xlu0 %1966
        %v1968 = vsel %vm1630, %v1960, 0.0
        %1969 = vadd.xlane.f32.xlu0 %v1968
        %v1970 = vpop.xlane.xlu0 %1969
        %v1971 = vsel %vm1630, %v1962, 0.0
        %1972 = vadd.xlane.f32.xlu0 %v1971
        %v1973 = vpop.xlane.xlu0 %1972
        %v1974 = vsel %vm1630, %v1964, 0.0
        %1975 = vadd.xlane.f32.xlu0 %v1974
        %v1976 = vpop.xlane.xlu0 %1975
        %v1977 = vrcp.pop %v1967
        %v1978 = vrcp.pop %v1970
        %v1979 = vrcp.pop %v1973
        %v1980 = vrcp.pop %v1976
        %v1981 = vmul.f32 %v1958, %v1977
        %v1982 = vmul.f32 %v1960, %v1978
        %v1983 = vmul.f32 %v1962, %v1979
        %v1984 = vmul.f32 %v1964, %v1980
        %v1986 = vsel %vm1630, %v1981, 0
        %1988 = vmatprep.subr.mxu0 0.0
        %1989 = vmatpush1.msra.mxu0 0.0
        %1990 = vmatprep.subr.mxu0 0.0
        %1991 = vmatpush1.msra.mxu0 0.0
        %1992 = vmatprep.subr.mxu0 0.0
        %1993 = vmatpush1.msra.mxu0 0.0
        %1994 = vmatprep.subr.mxu0 0.0
        %1995 = vmatpush1.msra.mxu0 0.0
        %1996 = vmatprep.subr.mxu0 0.0
        %1997 = vmatpush1.msra.mxu0 0.0
        %1998 = vmatprep.subr.mxu0 0.0
        %1999 = vmatpush1.msra.mxu0 0.0
        %2000 = vmatprep.subr.mxu0 0.0
        %2001 = vmatpush1.msra.mxu0 0.0
        %2002 = vmatprep.subr.mxu0 0.0
        %2003 = vmatpush1.msra.mxu0 0.0
        %2004 = vmatprep.subr.mxu0 0.0
        %2005 = vmatpush1.msra.mxu0 0.0
        %2006 = vmatprep.subr.mxu0 0.0
        %2007 = vmatpush1.msra.mxu0 0.0
        %2008 = vmatprep.subr.mxu0 0.0
        %2009 = vmatpush1.msra.mxu0 0.0
        %2010 = vmatprep.subr.mxu0 0.0
        %2011 = vmatpush1.msra.mxu0 0.0
        %2012 = vmatprep.subr.mxu0 0.0
        %2013 = vmatpush1.msra.mxu0 0.0
        %2014 = vmatprep.subr.mxu0 0.0
        %2015 = vmatpush1.msra.mxu0 0.0
        %2016 = vmatprep.subr.mxu0 0.0
        %2017 = vmatpush1.msra.mxu0 0.0
        %2018 = vmatprep.subr.mxu0 0.0
        %2019 = vmatpush1.msra.mxu0 %v1417
        %2020 = vmatprep.subr.mxu0 0.0
        %2021 = vmatpush2.msra.mxu0 0.0
        %2022 = vmatprep.subr.mxu0 0.0
        %2023 = vmatpush2.msra.mxu0 0.0
        %2024 = vmatprep.subr.mxu0 0.0
        %2025 = vmatpush2.msra.mxu0 0.0
        %2026 = vmatprep.subr.mxu0 0.0
        %2027 = vmatpush2.msra.mxu0 0.0
        %2028 = vmatprep.subr.mxu0 0.0
        %2029 = vmatpush2.msra.mxu0 0.0
        %2030 = vmatprep.subr.mxu0 0.0
        %2031 = vmatpush2.msra.mxu0 0.0
        %2032 = vmatprep.subr.mxu0 0.0
        %2033 = vmatpush2.msra.mxu0 0.0
        %2034 = vmatprep.subr.mxu0 0.0
        %2035 = vmatpush2.msra.mxu0 0.0
        %2036 = vmatprep.subr.mxu0 0.0
        %2037 = vmatpush2.msra.mxu0 0.0
        %2038 = vmatprep.subr.mxu0 0.0
        %2039 = vmatpush2.msra.mxu0 0.0
        %2040 = vmatprep.subr.mxu0 0.0
        %2041 = vmatpush2.msra.mxu0 0.0
        %2042 = vmatprep.subr.mxu0 0.0
        %2043 = vmatpush2.msra.mxu0 0.0
        %2044 = vmatprep.subr.mxu0 0.0
        %2045 = vmatpush2.msra.mxu0 0.0
        %2046 = vmatprep.subr.mxu0 0.0
        %2047 = vmatpush2.msra.mxu0 0.0
        %2048 = vmatprep.subr.mxu0 0.0
        %2049 = vmatpush2.msra.mxu0 0.0
        %2050 = vmatprep.subr.mxu0 0.0
        %2051 = vmatpush2.msra.mxu0 0.0
        %2052 = vmatprep.mubr.f32.mxu0 0.0
        %2053 = vmatmul.mubr.f32.gmra.mxu0 %v1986
        %v2054 = vpop.f32.mrf.mxu0
        %v2055 = vadd.f32 0.0, %v2054
        %v2056 = vpop.f32.mrf.mxu0
        %2057 = vdwg.mxu0
        %v2059 = vsel %vm1630, %v1982, 0
        %2061 = vmatprep.subr.mxu0 0.0
        %2062 = vmatpush1.msra.mxu0 0.0
        %2063 = vmatprep.subr.mxu0 0.0
        %2064 = vmatpush1.msra.mxu0 0.0
        %2065 = vmatprep.subr.mxu0 0.0
        %2066 = vmatpush1.msra.mxu0 0.0
        %2067 = vmatprep.subr.mxu0 0.0
        %2068 = vmatpush1.msra.mxu0 0.0
        %2069 = vmatprep.subr.mxu0 0.0
        %2070 = vmatpush1.msra.mxu0 0.0
        %2071 = vmatprep.subr.mxu0 0.0
        %2072 = vmatpush1.msra.mxu0 0.0
        %2073 = vmatprep.subr.mxu0 0.0
        %2074 = vmatpush1.msra.mxu0 0.0
        %2075 = vmatprep.subr.mxu0 0.0
        %2076 = vmatpush1.msra.mxu0 0.0
        %2077 = vmatprep.subr.mxu0 0.0
        %2078 = vmatpush1.msra.mxu0 0.0
        %2079 = vmatprep.subr.mxu0 0.0
        %2080 = vmatpush1.msra.mxu0 0.0
        %2081 = vmatprep.subr.mxu0 0.0
        %2082 = vmatpush1.msra.mxu0 0.0
        %2083 = vmatprep.subr.mxu0 0.0
        %2084 = vmatpush1.msra.mxu0 0.0
        %2085 = vmatprep.subr.mxu0 0.0
        %2086 = vmatpush1.msra.mxu0 0.0
        %2087 = vmatprep.subr.mxu0 0.0
        %2088 = vmatpush1.msra.mxu0 0.0
        %2089 = vmatprep.subr.mxu0 0.0
        %2090 = vmatpush1.msra.mxu0 0.0
        %2091 = vmatprep.subr.mxu0 0.0
        %2092 = vmatpush1.msra.mxu0 %v1487
        %2093 = vmatprep.subr.mxu0 0.0
        %2094 = vmatpush2.msra.mxu0 0.0
        %2095 = vmatprep.subr.mxu0 0.0
        %2096 = vmatpush2.msra.mxu0 0.0
        %2097 = vmatprep.subr.mxu0 0.0
        %2098 = vmatpush2.msra.mxu0 0.0
        %2099 = vmatprep.subr.mxu0 0.0
        %2100 = vmatpush2.msra.mxu0 0.0
        %2101 = vmatprep.subr.mxu0 0.0
        %2102 = vmatpush2.msra.mxu0 0.0
        %2103 = vmatprep.subr.mxu0 0.0
        %2104 = vmatpush2.msra.mxu0 0.0
        %2105 = vmatprep.subr.mxu0 0.0
        %2106 = vmatpush2.msra.mxu0 0.0
        %2107 = vmatprep.subr.mxu0 0.0
        %2108 = vmatpush2.msra.mxu0 0.0
        %2109 = vmatprep.subr.mxu0 0.0
        %2110 = vmatpush2.msra.mxu0 0.0
        %2111 = vmatprep.subr.mxu0 0.0
        %2112 = vmatpush2.msra.mxu0 0.0
        %2113 = vmatprep.subr.mxu0 0.0
        %2114 = vmatpush2.msra.mxu0 0.0
        %2115 = vmatprep.subr.mxu0 0.0
        %2116 = vmatpush2.msra.mxu0 0.0
        %2117 = vmatprep.subr.mxu0 0.0
        %2118 = vmatpush2.msra.mxu0 0.0
        %2119 = vmatprep.subr.mxu0 0.0
        %2120 = vmatpush2.msra.mxu0 0.0
        %2121 = vmatprep.subr.mxu0 0.0
        %2122 = vmatpush2.msra.mxu0 0.0
        %2123 = vmatprep.subr.mxu0 0.0
        %2124 = vmatpush2.msra.mxu0 0.0
        %2125 = vmatprep.mubr.f32.mxu0 0.0
        %2126 = vmatmul.mubr.f32.gmra.mxu0 %v2059
        %v2127 = vpop.f32.mrf.mxu0
        %v2128 = vadd.f32 0.0, %v2127
        %v2129 = vpop.f32.mrf.mxu0
        %2130 = vdwg.mxu0
        %v2132 = vsel %vm1630, %v1983, 0
        %2134 = vmatprep.subr.mxu0 0.0
        %2135 = vmatpush1.msra.mxu0 0.0
        %2136 = vmatprep.subr.mxu0 0.0
        %2137 = vmatpush1.msra.mxu0 0.0
        %2138 = vmatprep.subr.mxu0 0.0
        %2139 = vmatpush1.msra.mxu0 0.0
        %2140 = vmatprep.subr.mxu0 0.0
        %2141 = vmatpush1.msra.mxu0 0.0
        %2142 = vmatprep.subr.mxu0 0.0
        %2143 = vmatpush1.msra.mxu0 0.0
        %2144 = vmatprep.subr.mxu0 0.0
        %2145 = vmatpush1.msra.mxu0 0.0
        %2146 = vmatprep.subr.mxu0 0.0
        %2147 = vmatpush1.msra.mxu0 0.0
        %2148 = vmatprep.subr.mxu0 0.0
        %2149 = vmatpush1.msra.mxu0 0.0
        %2150 = vmatprep.subr.mxu0 0.0
        %2151 = vmatpush1.msra.mxu0 0.0
        %2152 = vmatprep.subr.mxu0 0.0
        %2153 = vmatpush1.msra.mxu0 0.0
        %2154 = vmatprep.subr.mxu0 0.0
        %2155 = vmatpush1.msra.mxu0 0.0
        %2156 = vmatprep.subr.mxu0 0.0
        %2157 = vmatpush1.msra.mxu0 0.0
        %2158 = vmatprep.subr.mxu0 0.0
        %2159 = vmatpush1.msra.mxu0 0.0
        %2160 = vmatprep.subr.mxu0 0.0
        %2161 = vmatpush1.msra.mxu0 0.0
        %2162 = vmatprep.subr.mxu0 0.0
        %2163 = vmatpush1.msra.mxu0 0.0
        %2164 = vmatprep.subr.mxu0 0.0
        %2165 = vmatpush1.msra.mxu0 %v1557
        %2166 = vmatprep.subr.mxu0 0.0
        %2167 = vmatpush2.msra.mxu0 0.0
        %2168 = vmatprep.subr.mxu0 0.0
        %2169 = vmatpush2.msra.mxu0 0.0
        %2170 = vmatprep.subr.mxu0 0.0
        %2171 = vmatpush2.msra.mxu0 0.0
        %2172 = vmatprep.subr.mxu0 0.0
        %2173 = vmatpush2.msra.mxu0 0.0
        %2174 = vmatprep.subr.mxu0 0.0
        %2175 = vmatpush2.msra.mxu0 0.0
        %2176 = vmatprep.subr.mxu0 0.0
        %2177 = vmatpush2.msra.mxu0 0.0
        %2178 = vmatprep.subr.mxu0 0.0
        %2179 = vmatpush2.msra.mxu0 0.0
        %2180 = vmatprep.subr.mxu0 0.0
        %2181 = vmatpush2.msra.mxu0 0.0
        %2182 = vmatprep.subr.mxu0 0.0
        %2183 = vmatpush2.msra.mxu0 0.0
        %2184 = vmatprep.subr.mxu0 0.0
        %2185 = vmatpush2.msra.mxu0 0.0
        %2186 = vmatprep.subr.mxu0 0.0
        %2187 = vmatpush2.msra.mxu0 0.0
        %2188 = vmatprep.subr.mxu0 0.0
        %2189 = vmatpush2.msra.mxu0 0.0
        %2190 = vmatprep.subr.mxu0 0.0
        %2191 = vmatpush2.msra.mxu0 0.0
        %2192 = vmatprep.subr.mxu0 0.0
        %2193 = vmatpush2.msra.mxu0 0.0
        %2194 = vmatprep.subr.mxu0 0.0
        %2195 = vmatpush2.msra.mxu0 0.0
        %2196 = vmatprep.subr.mxu0 0.0
        %2197 = vmatpush2.msra.mxu0 0.0
        %2198 = vmatprep.mubr.f32.mxu0 0.0
        %2199 = vmatmul.mubr.f32.gmra.mxu0 %v2132
        %v2200 = vpop.f32.mrf.mxu0
        %v2201 = vadd.f32 0.0, %v2200
        %v2202 = vpop.f32.mrf.mxu0
        %2203 = vdwg.mxu0
        %v2205 = vsel %vm1630, %v1984, 0
        %2207 = vmatprep.subr.mxu0 0.0
        %2208 = vmatpush1.msra.mxu0 0.0
        %2209 = vmatprep.subr.mxu0 0.0
        %2210 = vmatpush1.msra.mxu0 0.0
        %2211 = vmatprep.subr.mxu0 0.0
        %2212 = vmatpush1.msra.mxu0 0.0
        %2213 = vmatprep.subr.mxu0 0.0
        %2214 = vmatpush1.msra.mxu0 0.0
        %2215 = vmatprep.subr.mxu0 0.0
        %2216 = vmatpush1.msra.mxu0 0.0
        %2217 = vmatprep.subr.mxu0 0.0
        %2218 = vmatpush1.msra.mxu0 0.0
        %2219 = vmatprep.subr.mxu0 0.0
        %2220 = vmatpush1.msra.mxu0 0.0
        %2221 = vmatprep.subr.mxu0 0.0
        %2222 = vmatpush1.msra.mxu0 0.0
        %2223 = vmatprep.subr.mxu0 0.0
        %2224 = vmatpush1.msra.mxu0 0.0
        %2225 = vmatprep.subr.mxu0 0.0
        %2226 = vmatpush1.msra.mxu0 0.0
        %2227 = vmatprep.subr.mxu0 0.0
        %2228 = vmatpush1.msra.mxu0 0.0
        %2229 = vmatprep.subr.mxu0 0.0
        %2230 = vmatpush1.msra.mxu0 0.0
        %2231 = vmatprep.subr.mxu0 0.0
        %2232 = vmatpush1.msra.mxu0 0.0
        %2233 = vmatprep.subr.mxu0 0.0
        %2234 = vmatpush1.msra.mxu0 0.0
        %2235 = vmatprep.subr.mxu0 0.0
        %2236 = vmatpush1.msra.mxu0 0.0
        %2237 = vmatprep.subr.mxu0 0.0
        %2238 = vmatpush1.msra.mxu0 %v1627
        %2239 = vmatprep.subr.mxu0 0.0
        %2240 = vmatpush2.msra.mxu0 0.0
        %2241 = vmatprep.subr.mxu0 0.0
        %2242 = vmatpush2.msra.mxu0 0.0
        %2243 = vmatprep.subr.mxu0 0.0
        %2244 = vmatpush2.msra.mxu0 0.0
        %2245 = vmatprep.subr.mxu0 0.0
        %2246 = vmatpush2.msra.mxu0 0.0
        %2247 = vmatprep.subr.mxu0 0.0
        %2248 = vmatpush2.msra.mxu0 0.0
        %2249 = vmatprep.subr.mxu0 0.0
        %2250 = vmatpush2.msra.mxu0 0.0
        %2251 = vmatprep.subr.mxu0 0.0
        %2252 = vmatpush2.msra.mxu0 0.0
        %2253 = vmatprep.subr.mxu0 0.0
        %2254 = vmatpush2.msra.mxu0 0.0
        %2255 = vmatprep.subr.mxu0 0.0
        %2256 = vmatpush2.msra.mxu0 0.0
        %2257 = vmatprep.subr.mxu0 0.0
        %2258 = vmatpush2.msra.mxu0 0.0
        %2259 = vmatprep.subr.mxu0 0.0
        %2260 = vmatpush2.msra.mxu0 0.0
        %2261 = vmatprep.subr.mxu0 0.0
        %2262 = vmatpush2.msra.mxu0 0.0
        %2263 = vmatprep.subr.mxu0 0.0
        %2264 = vmatpush2.msra.mxu0 0.0
        %2265 = vmatprep.subr.mxu0 0.0
        %2266 = vmatpush2.msra.mxu0 0.0
        %2267 = vmatprep.subr.mxu0 0.0
        %2268 = vmatpush2.msra.mxu0 0.0
        %2269 = vmatprep.subr.mxu0 0.0
        %2270 = vmatpush2.msra.mxu0 0.0
        %2271 = vmatprep.mubr.f32.mxu0 0.0
        %2272 = vmatmul.mubr.f32.gmra.mxu0 %v2205
        %v2273 = vpop.f32.mrf.mxu0
        %v2274 = vadd.f32 0.0, %v2273
        %v2275 = vpop.f32.mrf.mxu0
        %2276 = vdwg.mxu0
        %v2277 = vld [vmem:[%s7] sm:$0xff]
        %v2278 = vld [vmem:[%s7 + $0x8] sm:$0xff]
        %v2279 = vld [vmem:[%s7 + $0x10] sm:$0xff]
        %v2280 = vld [vmem:[%s7 + $0x18] sm:$0xff]
        %v2282 = vsel %vm1630, %v2055, 0
        %2284 = vmatprep.subr.mxu0 0.0
        %2285 = vmatpush1.msra.mxu0 0.0
        %2286 = vmatprep.subr.mxu0 0.0
        %2287 = vmatpush1.msra.mxu0 0.0
        %2288 = vmatprep.subr.mxu0 0.0
        %2289 = vmatpush1.msra.mxu0 0.0
        %2290 = vmatprep.subr.mxu0 0.0
        %2291 = vmatpush1.msra.mxu0 0.0
        %2292 = vmatprep.subr.mxu0 0.0
        %2293 = vmatpush1.msra.mxu0 0.0
        %2294 = vmatprep.subr.mxu0 0.0
        %2295 = vmatpush1.msra.mxu0 0.0
        %2296 = vmatprep.subr.mxu0 0.0
        %2297 = vmatpush1.msra.mxu0 0.0
        %2298 = vmatprep.subr.mxu0 0.0
        %2299 = vmatpush1.msra.mxu0 0.0
        %2300 = vmatprep.subr.mxu0 0.0
        %2301 = vmatpush1.msra.mxu0 0.0
        %2302 = vmatprep.subr.mxu0 0.0
        %2303 = vmatpush1.msra.mxu0 0.0
        %2304 = vmatprep.subr.mxu0 0.0
        %2305 = vmatpush1.msra.mxu0 0.0
        %2306 = vmatprep.subr.mxu0 0.0
        %2307 = vmatpush1.msra.mxu0 0.0
        %2308 = vmatprep.subr.mxu0 0.0
        %2309 = vmatpush1.msra.mxu0 0.0
        %2310 = vmatprep.subr.mxu0 0.0
        %2311 = vmatpush1.msra.mxu0 0.0
        %2312 = vmatprep.subr.mxu0 0.0
        %2313 = vmatpush1.msra.mxu0 0.0
        %2314 = vmatprep.subr.mxu0 0.0
        %2315 = vmatpush1.msra.mxu0 %v2277
        %2316 = vmatprep.subr.mxu0 0.0
        %2317 = vmatpush2.msra.mxu0 0.0
        %2318 = vmatprep.subr.mxu0 0.0
        %2319 = vmatpush2.msra.mxu0 0.0
        %2320 = vmatprep.subr.mxu0 0.0
        %2321 = vmatpush2.msra.mxu0 0.0
        %2322 = vmatprep.subr.mxu0 0.0
        %2323 = vmatpush2.msra.mxu0 0.0
        %2324 = vmatprep.subr.mxu0 0.0
        %2325 = vmatpush2.msra.mxu0 0.0
        %2326 = vmatprep.subr.mxu0 0.0
        %2327 = vmatpush2.msra.mxu0 0.0
        %2328 = vmatprep.subr.mxu0 0.0
        %2329 = vmatpush2.msra.mxu0 0.0
        %2330 = vmatprep.subr.mxu0 0.0
        %2331 = vmatpush2.msra.mxu0 0.0
        %2332 = vmatprep.subr.mxu0 0.0
        %2333 = vmatpush2.msra.mxu0 0.0
        %2334 = vmatprep.subr.mxu0 0.0
        %2335 = vmatpush2.msra.mxu0 0.0
        %2336 = vmatprep.subr.mxu0 0.0
        %2337 = vmatpush2.msra.mxu0 0.0
        %2338 = vmatprep.subr.mxu0 0.0
        %2339 = vmatpush2.msra.mxu0 0.0
        %2340 = vmatprep.subr.mxu0 0.0
        %2341 = vmatpush2.msra.mxu0 0.0
        %2342 = vmatprep.subr.mxu0 0.0
        %2343 = vmatpush2.msra.mxu0 0.0
        %2344 = vmatprep.subr.mxu0 0.0
        %2345 = vmatpush2.msra.mxu0 0.0
        %2346 = vmatprep.subr.mxu0 0.0
        %2347 = vmatpush2.msra.mxu0 0.0
        %2348 = vmatprep.mubr.f32.mxu0 0.0
        %2349 = vmatmul.mubr.f32.gmra.mxu0 %v2282
        %v2350 = vpop.f32.mrf.mxu0
        %v2351 = vadd.f32 0.0, %v2350
        %v2352 = vpop.f32.mrf.mxu0
        %2353 = vdwg.mxu0
        %v2355 = vsel %vm1630, %v2128, 0
        %2357 = vmatprep.subr.mxu0 0.0
        %2358 = vmatpush1.msra.mxu0 0.0
        %2359 = vmatprep.subr.mxu0 0.0
        %2360 = vmatpush1.msra.mxu0 0.0
        %2361 = vmatprep.subr.mxu0 0.0
        %2362 = vmatpush1.msra.mxu0 0.0
        %2363 = vmatprep.subr.mxu0 0.0
        %2364 = vmatpush1.msra.mxu0 0.0
        %2365 = vmatprep.subr.mxu0 0.0
        %2366 = vmatpush1.msra.mxu0 0.0
        %2367 = vmatprep.subr.mxu0 0.0
        %2368 = vmatpush1.msra.mxu0 0.0
        %2369 = vmatprep.subr.mxu0 0.0
        %2370 = vmatpush1.msra.mxu0 0.0
        %2371 = vmatprep.subr.mxu0 0.0
        %2372 = vmatpush1.msra.mxu0 0.0
        %2373 = vmatprep.subr.mxu0 0.0
        %2374 = vmatpush1.msra.mxu0 0.0
        %2375 = vmatprep.subr.mxu0 0.0
        %2376 = vmatpush1.msra.mxu0 0.0
        %2377 = vmatprep.subr.mxu0 0.0
        %2378 = vmatpush1.msra.mxu0 0.0
        %2379 = vmatprep.subr.mxu0 0.0
        %2380 = vmatpush1.msra.mxu0 0.0
        %2381 = vmatprep.subr.mxu0 0.0
        %2382 = vmatpush1.msra.mxu0 0.0
        %2383 = vmatprep.subr.mxu0 0.0
        %2384 = vmatpush1.msra.mxu0 0.0
        %2385 = vmatprep.subr.mxu0 0.0
        %2386 = vmatpush1.msra.mxu0 0.0
        %2387 = vmatprep.subr.mxu0 0.0
        %2388 = vmatpush1.msra.mxu0 %v2278
        %2389 = vmatprep.subr.mxu0 0.0
        %2390 = vmatpush2.msra.mxu0 0.0
        %2391 = vmatprep.subr.mxu0 0.0
        %2392 = vmatpush2.msra.mxu0 0.0
        %2393 = vmatprep.subr.mxu0 0.0
        %2394 = vmatpush2.msra.mxu0 0.0
        %2395 = vmatprep.subr.mxu0 0.0
        %2396 = vmatpush2.msra.mxu0 0.0
        %2397 = vmatprep.subr.mxu0 0.0
        %2398 = vmatpush2.msra.mxu0 0.0
        %2399 = vmatprep.subr.mxu0 0.0
        %2400 = vmatpush2.msra.mxu0 0.0
        %2401 = vmatprep.subr.mxu0 0.0
        %2402 = vmatpush2.msra.mxu0 0.0
        %2403 = vmatprep.subr.mxu0 0.0
        %2404 = vmatpush2.msra.mxu0 0.0
        %2405 = vmatprep.subr.mxu0 0.0
        %2406 = vmatpush2.msra.mxu0 0.0
        %2407 = vmatprep.subr.mxu0 0.0
        %2408 = vmatpush2.msra.mxu0 0.0
        %2409 = vmatprep.subr.mxu0 0.0
        %2410 = vmatpush2.msra.mxu0 0.0
        %2411 = vmatprep.subr.mxu0 0.0
        %2412 = vmatpush2.msra.mxu0 0.0
        %2413 = vmatprep.subr.mxu0 0.0
        %2414 = vmatpush2.msra.mxu0 0.0
        %2415 = vmatprep.subr.mxu0 0.0
        %2416 = vmatpush2.msra.mxu0 0.0
        %2417 = vmatprep.subr.mxu0 0.0
        %2418 = vmatpush2.msra.mxu0 0.0
        %2419 = vmatprep.subr.mxu0 0.0
        %2420 = vmatpush2.msra.mxu0 0.0
        %2421 = vmatprep.mubr.f32.mxu0 0.0
        %2422 = vmatmul.mubr.f32.gmra.mxu0 %v2355
        %v2423 = vpop.f32.mrf.mxu0
        %v2424 = vadd.f32 0.0, %v2423
        %v2425 = vpop.f32.mrf.mxu0
        %2426 = vdwg.mxu0
        %v2428 = vsel %vm1630, %v2201, 0
        %2430 = vmatprep.subr.mxu0 0.0
        %2431 = vmatpush1.msra.mxu0 0.0
        %2432 = vmatprep.subr.mxu0 0.0
        %2433 = vmatpush1.msra.mxu0 0.0
        %2434 = vmatprep.subr.mxu0 0.0
        %2435 = vmatpush1.msra.mxu0 0.0
        %2436 = vmatprep.subr.mxu0 0.0
        %2437 = vmatpush1.msra.mxu0 0.0
        %2438 = vmatprep.subr.mxu0 0.0
        %2439 = vmatpush1.msra.mxu0 0.0
        %2440 = vmatprep.subr.mxu0 0.0
        %2441 = vmatpush1.msra.mxu0 0.0
        %2442 = vmatprep.subr.mxu0 0.0
        %2443 = vmatpush1.msra.mxu0 0.0
        %2444 = vmatprep.subr.mxu0 0.0
        %2445 = vmatpush1.msra.mxu0 0.0
        %2446 = vmatprep.subr.mxu0 0.0
        %2447 = vmatpush1.msra.mxu0 0.0
        %2448 = vmatprep.subr.mxu0 0.0
        %2449 = vmatpush1.msra.mxu0 0.0
        %2450 = vmatprep.subr.mxu0 0.0
        %2451 = vmatpush1.msra.mxu0 0.0
        %2452 = vmatprep.subr.mxu0 0.0
        %2453 = vmatpush1.msra.mxu0 0.0
        %2454 = vmatprep.subr.mxu0 0.0
        %2455 = vmatpush1.msra.mxu0 0.0
        %2456 = vmatprep.subr.mxu0 0.0
        %2457 = vmatpush1.msra.mxu0 0.0
        %2458 = vmatprep.subr.mxu0 0.0
        %2459 = vmatpush1.msra.mxu0 0.0
        %2460 = vmatprep.subr.mxu0 0.0
        %2461 = vmatpush1.msra.mxu0 %v2279
        %2462 = vmatprep.subr.mxu0 0.0
        %2463 = vmatpush2.msra.mxu0 0.0
        %2464 = vmatprep.subr.mxu0 0.0
        %2465 = vmatpush2.msra.mxu0 0.0
        %2466 = vmatprep.subr.mxu0 0.0
        %2467 = vmatpush2.msra.mxu0 0.0
        %2468 = vmatprep.subr.mxu0 0.0
        %2469 = vmatpush2.msra.mxu0 0.0
        %2470 = vmatprep.subr.mxu0 0.0
        %2471 = vmatpush2.msra.mxu0 0.0
        %2472 = vmatprep.subr.mxu0 0.0
        %2473 = vmatpush2.msra.mxu0 0.0
        %2474 = vmatprep.subr.mxu0 0.0
        %2475 = vmatpush2.msra.mxu0 0.0
        %2476 = vmatprep.subr.mxu0 0.0
        %2477 = vmatpush2.msra.mxu0 0.0
        %2478 = vmatprep.subr.mxu0 0.0
        %2479 = vmatpush2.msra.mxu0 0.0
        %2480 = vmatprep.subr.mxu0 0.0
        %2481 = vmatpush2.msra.mxu0 0.0
        %2482 = vmatprep.subr.mxu0 0.0
        %2483 = vmatpush2.msra.mxu0 0.0
        %2484 = vmatprep.subr.mxu0 0.0
        %2485 = vmatpush2.msra.mxu0 0.0
        %2486 = vmatprep.subr.mxu0 0.0
        %2487 = vmatpush2.msra.mxu0 0.0
        %2488 = vmatprep.subr.mxu0 0.0
        %2489 = vmatpush2.msra.mxu0 0.0
        %2490 = vmatprep.subr.mxu0 0.0
        %2491 = vmatpush2.msra.mxu0 0.0
        %2492 = vmatprep.subr.mxu0 0.0
        %2493 = vmatpush2.msra.mxu0 0.0
        %2494 = vmatprep.mubr.f32.mxu0 0.0
        %2495 = vmatmul.mubr.f32.gmra.mxu0 %v2428
        %v2496 = vpop.f32.mrf.mxu0
        %v2497 = vadd.f32 0.0, %v2496
        %v2498 = vpop.f32.mrf.mxu0
        %2499 = vdwg.mxu0
        %v2501 = vsel %vm1630, %v2274, 0
        %2503 = vmatprep.subr.mxu0 0.0
        %2504 = vmatpush1.msra.mxu0 0.0
        %2505 = vmatprep.subr.mxu0 0.0
        %2506 = vmatpush1.msra.mxu0 0.0
        %2507 = vmatprep.subr.mxu0 0.0
        %2508 = vmatpush1.msra.mxu0 0.0
        %2509 = vmatprep.subr.mxu0 0.0
        %2510 = vmatpush1.msra.mxu0 0.0
        %2511 = vmatprep.subr.mxu0 0.0
        %2512 = vmatpush1.msra.mxu0 0.0
        %2513 = vmatprep.subr.mxu0 0.0
        %2514 = vmatpush1.msra.mxu0 0.0
        %2515 = vmatprep.subr.mxu0 0.0
        %2516 = vmatpush1.msra.mxu0 0.0
        %2517 = vmatprep.subr.mxu0 0.0
        %2518 = vmatpush1.msra.mxu0 0.0
        %2519 = vmatprep.subr.mxu0 0.0
        %2520 = vmatpush1.msra.mxu0 0.0
        %2521 = vmatprep.subr.mxu0 0.0
        %2522 = vmatpush1.msra.mxu0 0.0
        %2523 = vmatprep.subr.mxu0 0.0
        %2524 = vmatpush1.msra.mxu0 0.0
        %2525 = vmatprep.subr.mxu0 0.0
        %2526 = vmatpush1.msra.mxu0 0.0
        %2527 = vmatprep.subr.mxu0 0.0
        %2528 = vmatpush1.msra.mxu0 0.0
        %2529 = vmatprep.subr.mxu0 0.0
        %2530 = vmatpush1.msra.mxu0 0.0
        %2531 = vmatprep.subr.mxu0 0.0
        %2532 = vmatpush1.msra.mxu0 0.0
        %2533 = vmatprep.subr.mxu0 0.0
        %2534 = vmatpush1.msra.mxu0 %v2280
        %2535 = vmatprep.subr.mxu0 0.0
        %2536 = vmatpush2.msra.mxu0 0.0
        %2537 = vmatprep.subr.mxu0 0.0
        %2538 = vmatpush2.msra.mxu0 0.0
        %2539 = vmatprep.subr.mxu0 0.0
        %2540 = vmatpush2.msra.mxu0 0.0
        %2541 = vmatprep.subr.mxu0 0.0
        %2542 = vmatpush2.msra.mxu0 0.0
        %2543 = vmatprep.subr.mxu0 0.0
        %2544 = vmatpush2.msra.mxu0 0.0
        %2545 = vmatprep.subr.mxu0 0.0
        %2546 = vmatpush2.msra.mxu0 0.0
        %2547 = vmatprep.subr.mxu0 0.0
        %2548 = vmatpush2.msra.mxu0 0.0
        %2549 = vmatprep.subr.mxu0 0.0
        %2550 = vmatpush2.msra.mxu0 0.0
        %2551 = vmatprep.subr.mxu0 0.0
        %2552 = vmatpush2.msra.mxu0 0.0
        %2553 = vmatprep.subr.mxu0 0.0
        %2554 = vmatpush2.msra.mxu0 0.0
        %2555 = vmatprep.subr.mxu0 0.0
        %2556 = vmatpush2.msra.mxu0 0.0
        %2557 = vmatprep.subr.mxu0 0.0
        %2558 = vmatpush2.msra.mxu0 0.0
        %2559 = vmatprep.subr.mxu0 0.0
        %2560 = vmatpush2.msra.mxu0 0.0
        %2561 = vmatprep.subr.mxu0 0.0
        %2562 = vmatpush2.msra.mxu0 0.0
        %2563 = vmatprep.subr.mxu0 0.0
        %2564 = vmatpush2.msra.mxu0 0.0
        %2565 = vmatprep.subr.mxu0 0.0
        %2566 = vmatpush2.msra.mxu0 0.0
        %2567 = vmatprep.mubr.f32.mxu0 0.0
        %2568 = vmatmul.mubr.f32.gmra.mxu0 %v2501
        %v2569 = vpop.f32.mrf.mxu0
        %v2570 = vadd.f32 0.0, %v2569
        %v2571 = vpop.f32.mrf.mxu0
        %2572 = vdwg.mxu0
        %v2573 = vsel %vm750, %v2351, 0.0
        %v2574 = vsel %vm750, %v2424, 0.0
        %v2575 = vadd.f32 %v2573, %v2574
        %v2576 = vsel %vm750, %v2497, 0.0
        %v2577 = vadd.f32 %v2575, %v2576
        %v2578 = vsel %vm750, %v2570, 0.0
        %v2579 = vadd.f32 %v2577, %v2578
        %v2580 = vadd.f32 %v2579, %v730
        %v2581 = vsel %vm750, %v2580, 0.0
        %2582 = vadd.xlane.f32.xlu0 %v2581
        %v2583 = vpop.xlane.xlu0 %2582
        %v2584 = vmul.f32 %v2583, 0.03125
        %v2585 = vsub.f32 %v2580, %v2584
        %v2586 = vmul.f32 %v2585, %v2585
        %v2587 = vsel %vm750, %v2586, 0.0
        %2588 = vadd.xlane.f32.xlu0 %v2587
        %v2589 = vpop.xlane.xlu0 %2588
        %v2590 = vmul.f32 %v2589, 0.03125
        %v2591 = vadd.f32 %v2590, 1e-06
        %v2592 = vrsqrt.pop %v2591
        %v2593 = vmul.f32 %v2585, %v2592
        %v2594 = vld [vmem:[%s8] sm:$0x1]
        %v2596 = vlaneseq
        %v2597 = vshrl.u32 %v2596, 7
        %v2598 = vsub.s32 0, %v2597
        %v2599 = vrot.slane %v2594, %v2598
        %v2601 = vmul.f32 %v2593, %v2599
        %v2602 = vld [vmem:[%s9] sm:$0x1]
        %v2604 = vlaneseq
        %v2605 = vshrl.u32 %v2604, 7
        %v2606 = vsub.s32 0, %v2605
        %v2607 = vrot.slane %v2602, %v2606
        %v2609 = vadd.f32 %v2601, %v2607
        %v2610 = vld [vmem:[%s729] sm:$0xff]
        %vm2611 = vcmp.eq.f32.partialorder %v2610, 0.0
        %v2612 = vld [vmem:[%s10] sm:$0xff]
        %v2613 = vld [vmem:[%s10 + $0x8] sm:$0xff]
        %v2614 = vld [vmem:[%s10 + $0x10] sm:$0xff]
        %v2615 = vld [vmem:[%s10 + $0x18] sm:$0xff]
        %v2616 = vld [vmem:[%s10 + $0x20] sm:$0xff]
        %v2617 = vld [vmem:[%s10 + $0x28] sm:$0xff]
        %v2618 = vld [vmem:[%s10 + $0x30] sm:$0xff]
        %v2619 = vld [vmem:[%s10 + $0x38] sm:$0xff]
        %v2620 = vld [vmem:[%s10 + $0x40] sm:$0xff]
        %v2621 = vld [vmem:[%s10 + $0x48] sm:$0xff]
        %v2622 = vld [vmem:[%s10 + $0x50] sm:$0xff]
        %v2623 = vld [vmem:[%s10 + $0x58] sm:$0xff]
        %v2624 = vld [vmem:[%s10 + $0x60] sm:$0xff]
        %v2625 = vld [vmem:[%s10 + $0x68] sm:$0xff]
        %v2626 = vld [vmem:[%s10 + $0x70] sm:$0xff]
        %v2627 = vld [vmem:[%s10 + $0x78] sm:$0xff]
        %v2629 = vsel %vm750, %v2609, 0
        %2631 = vmatprep.subr.mxu0 0.0
        %2632 = vmatpush1.msra.mxu0 0.0
        %2633 = vmatprep.subr.mxu0 0.0
        %2634 = vmatpush1.msra.mxu0 0.0
        %2635 = vmatprep.subr.mxu0 0.0
        %2636 = vmatpush1.msra.mxu0 0.0
        %2637 = vmatprep.subr.mxu0 0.0
        %2638 = vmatpush1.msra.mxu0 0.0
        %2639 = vmatprep.subr.mxu0 0.0
        %2640 = vmatpush1.msra.mxu0 0.0
        %2641 = vmatprep.subr.mxu0 0.0
        %2642 = vmatpush1.msra.mxu0 0.0
        %2643 = vmatprep.subr.mxu0 0.0
        %2644 = vmatpush1.msra.mxu0 0.0
        %2645 = vmatprep.subr.mxu0 0.0
        %2646 = vmatpush1.msra.mxu0 0.0
        %2647 = vmatprep.subr.mxu0 0.0
        %2648 = vmatpush1.msra.mxu0 0.0
        %2649 = vmatprep.subr.mxu0 0.0
        %2650 = vmatpush1.msra.mxu0 0.0
        %2651 = vmatprep.subr.mxu0 0.0
        %2652 = vmatpush1.msra.mxu0 0.0
        %2653 = vmatprep.subr.mxu0 0.0
        %2654 = vmatpush1.msra.mxu0 0.0
        %2655 = vmatprep.subr.mxu0 0.0
        %2656 = vmatpush1.msra.mxu0 %v2615
        %2657 = vmatprep.subr.mxu0 0.0
        %2658 = vmatpush1.msra.mxu0 %v2614
        %2659 = vmatprep.subr.mxu0 0.0
        %2660 = vmatpush1.msra.mxu0 %v2613
        %2661 = vmatprep.subr.mxu0 0.0
        %2662 = vmatpush1.msra.mxu0 %v2612
        %2663 = vmatprep.subr.mxu0 0.0
        %2664 = vmatpush2.msra.mxu0 0.0
        %2665 = vmatprep.subr.mxu0 0.0
        %2666 = vmatpush2.msra.mxu0 0.0
        %2667 = vmatprep.subr.mxu0 0.0
        %2668 = vmatpush2.msra.mxu0 0.0
        %2669 = vmatprep.subr.mxu0 0.0
        %2670 = vmatpush2.msra.mxu0 0.0
        %2671 = vmatprep.subr.mxu0 0.0
        %2672 = vmatpush2.msra.mxu0 0.0
        %2673 = vmatprep.subr.mxu0 0.0
        %2674 = vmatpush2.msra.mxu0 0.0
        %2675 = vmatprep.subr.mxu0 0.0
        %2676 = vmatpush2.msra.mxu0 0.0
        %2677 = vmatprep.subr.mxu0 0.0
        %2678 = vmatpush2.msra.mxu0 0.0
        %2679 = vmatprep.subr.mxu0 0.0
        %2680 = vmatpush2.msra.mxu0 0.0
        %2681 = vmatprep.subr.mxu0 0.0
        %2682 = vmatpush2.msra.mxu0 0.0
        %2683 = vmatprep.subr.mxu0 0.0
        %2684 = vmatpush2.msra.mxu0 0.0
        %2685 = vmatprep.subr.mxu0 0.0
        %2686 = vmatpush2.msra.mxu0 0.0
        %2687 = vmatprep.subr.mxu0 0.0
        %2688 = vmatpush2.msra.mxu0 0.0
        %2689 = vmatprep.subr.mxu0 0.0
        %2690 = vmatpush2.msra.mxu0 0.0
        %2691 = vmatprep.subr.mxu0 0.0
        %2692 = vmatpush2.msra.mxu0 0.0
        %2693 = vmatprep.subr.mxu0 0.0
        %2694 = vmatpush2.msra.mxu0 0.0
        %2695 = vmatprep.mubr.f32.mxu0 0.0
        %2696 = vmatmul.mubr.f32.gmra.mxu0 %v2629
        %v2697 = vpop.f32.mrf.mxu0
        %v2698 = vadd.f32 0.0, %v2697
        %v2699 = vpop.f32.mrf.mxu0
        %2700 = vdwg.mxu0
        %2701 = vmatprep.subr.mxu0 0.0
        %2702 = vmatpush1.msra.mxu0 0.0
        %2703 = vmatprep.subr.mxu0 0.0
        %2704 = vmatpush1.msra.mxu0 0.0
        %2705 = vmatprep.subr.mxu0 0.0
        %2706 = vmatpush1.msra.mxu0 0.0
        %2707 = vmatprep.subr.mxu0 0.0
        %2708 = vmatpush1.msra.mxu0 0.0
        %2709 = vmatprep.subr.mxu0 0.0
        %2710 = vmatpush1.msra.mxu0 0.0
        %2711 = vmatprep.subr.mxu0 0.0
        %2712 = vmatpush1.msra.mxu0 0.0
        %2713 = vmatprep.subr.mxu0 0.0
        %2714 = vmatpush1.msra.mxu0 0.0
        %2715 = vmatprep.subr.mxu0 0.0
        %2716 = vmatpush1.msra.mxu0 0.0
        %2717 = vmatprep.subr.mxu0 0.0
        %2718 = vmatpush1.msra.mxu0 0.0
        %2719 = vmatprep.subr.mxu0 0.0
        %2720 = vmatpush1.msra.mxu0 0.0
        %2721 = vmatprep.subr.mxu0 0.0
        %2722 = vmatpush1.msra.mxu0 0.0
        %2723 = vmatprep.subr.mxu0 0.0
        %2724 = vmatpush1.msra.mxu0 0.0
        %2725 = vmatprep.subr.mxu0 0.0
        %2726 = vmatpush1.msra.mxu0 %v2619
        %2727 = vmatprep.subr.mxu0 0.0
        %2728 = vmatpush1.msra.mxu0 %v2618
        %2729 = vmatprep.subr.mxu0 0.0
        %2730 = vmatpush1.msra.mxu0 %v2617
        %2731 = vmatprep.subr.mxu0 0.0
        %2732 = vmatpush1.msra.mxu0 %v2616
        %2733 = vmatprep.subr.mxu0 0.0
        %2734 = vmatpush2.msra.mxu0 0.0
        %2735 = vmatprep.subr.mxu0 0.0
        %2736 = vmatpush2.msra.mxu0 0.0
        %2737 = vmatprep.subr.mxu0 0.0
        %2738 = vmatpush2.msra.mxu0 0.0
        %2739 = vmatprep.subr.mxu0 0.0
        %2740 = vmatpush2.msra.mxu0 0.0
        %2741 = vmatprep.subr.mxu0 0.0
        %2742 = vmatpush2.msra.mxu0 0.0
        %2743 = vmatprep.subr.mxu0 0.0
        %2744 = vmatpush2.msra.mxu0 0.0
        %2745 = vmatprep.subr.mxu0 0.0
        %2746 = vmatpush2.msra.mxu0 0.0
        %2747 = vmatprep.subr.mxu0 0.0
        %2748 = vmatpush2.msra.mxu0 0.0
        %2749 = vmatprep.subr.mxu0 0.0
        %2750 = vmatpush2.msra.mxu0 0.0
        %2751 = vmatprep.subr.mxu0 0.0
        %2752 = vmatpush2.msra.mxu0 0.0
        %2753 = vmatprep.subr.mxu0 0.0
        %2754 = vmatpush2.msra.mxu0 0.0
        %2755 = vmatprep.subr.mxu0 0.0
        %2756 = vmatpush2.msra.mxu0 0.0
        %2757 = vmatprep.subr.mxu0 0.0
        %2758 = vmatpush2.msra.mxu0 0.0
        %2759 = vmatprep.subr.mxu0 0.0
        %2760 = vmatpush2.msra.mxu0 0.0
        %2761 = vmatprep.subr.mxu0 0.0
        %2762 = vmatpush2.msra.mxu0 0.0
        %2763 = vmatprep.subr.mxu0 0.0
        %2764 = vmatpush2.msra.mxu0 0.0
        %2765 = vmatprep.mubr.f32.mxu0 0.0
        %2766 = vmatmul.mubr.f32.gmra.mxu0 %v2629
        %v2767 = vpop.f32.mrf.mxu0
        %v2768 = vadd.f32 0.0, %v2767
        %v2769 = vpop.f32.mrf.mxu0
        %2770 = vdwg.mxu0
        %2771 = vmatprep.subr.mxu0 0.0
        %2772 = vmatpush1.msra.mxu0 0.0
        %2773 = vmatprep.subr.mxu0 0.0
        %2774 = vmatpush1.msra.mxu0 0.0
        %2775 = vmatprep.subr.mxu0 0.0
        %2776 = vmatpush1.msra.mxu0 0.0
        %2777 = vmatprep.subr.mxu0 0.0
        %2778 = vmatpush1.msra.mxu0 0.0
        %2779 = vmatprep.subr.mxu0 0.0
        %2780 = vmatpush1.msra.mxu0 0.0
        %2781 = vmatprep.subr.mxu0 0.0
        %2782 = vmatpush1.msra.mxu0 0.0
        %2783 = vmatprep.subr.mxu0 0.0
        %2784 = vmatpush1.msra.mxu0 0.0
        %2785 = vmatprep.subr.mxu0 0.0
        %2786 = vmatpush1.msra.mxu0 0.0
        %2787 = vmatprep.subr.mxu0 0.0
        %2788 = vmatpush1.msra.mxu0 0.0
        %2789 = vmatprep.subr.mxu0 0.0
        %2790 = vmatpush1.msra.mxu0 0.0
        %2791 = vmatprep.subr.mxu0 0.0
        %2792 = vmatpush1.msra.mxu0 0.0
        %2793 = vmatprep.subr.mxu0 0.0
        %2794 = vmatpush1.msra.mxu0 0.0
        %2795 = vmatprep.subr.mxu0 0.0
        %2796 = vmatpush1.msra.mxu0 %v2623
        %2797 = vmatprep.subr.mxu0 0.0
        %2798 = vmatpush1.msra.mxu0 %v2622
        %2799 = vmatprep.subr.mxu0 0.0
        %2800 = vmatpush1.msra.mxu0 %v2621
        %2801 = vmatprep.subr.mxu0 0.0
        %2802 = vmatpush1.msra.mxu0 %v2620
        %2803 = vmatprep.subr.mxu0 0.0
        %2804 = vmatpush2.msra.mxu0 0.0
        %2805 = vmatprep.subr.mxu0 0.0
        %2806 = vmatpush2.msra.mxu0 0.0
        %2807 = vmatprep.subr.mxu0 0.0
        %2808 = vmatpush2.msra.mxu0 0.0
        %2809 = vmatprep.subr.mxu0 0.0
        %2810 = vmatpush2.msra.mxu0 0.0
        %2811 = vmatprep.subr.mxu0 0.0
        %2812 = vmatpush2.msra.mxu0 0.0
        %2813 = vmatprep.subr.mxu0 0.0
        %2814 = vmatpush2.msra.mxu0 0.0
        %2815 = vmatprep.subr.mxu0 0.0
        %2816 = vmatpush2.msra.mxu0 0.0
        %2817 = vmatprep.subr.mxu0 0.0
        %2818 = vmatpush2.msra.mxu0 0.0
        %2819 = vmatprep.subr.mxu0 0.0
        %2820 = vmatpush2.msra.mxu0 0.0
        %2821 = vmatprep.subr.mxu0 0.0
        %2822 = vmatpush2.msra.mxu0 0.0
        %2823 = vmatprep.subr.mxu0 0.0
        %2824 = vmatpush2.msra.mxu0 0.0
        %2825 = vmatprep.subr.mxu0 0.0
        %2826 = vmatpush2.msra.mxu0 0.0
        %2827 = vmatprep.subr.mxu0 0.0
        %2828 = vmatpush2.msra.mxu0 0.0
        %2829 = vmatprep.subr.mxu0 0.0
        %2830 = vmatpush2.msra.mxu0 0.0
        %2831 = vmatprep.subr.mxu0 0.0
        %2832 = vmatpush2.msra.mxu0 0.0
        %2833 = vmatprep.subr.mxu0 0.0
        %2834 = vmatpush2.msra.mxu0 0.0
        %2835 = vmatprep.mubr.f32.mxu0 0.0
        %2836 = vmatmul.mubr.f32.gmra.mxu0 %v2629
        %v2837 = vpop.f32.mrf.mxu0
        %v2838 = vadd.f32 0.0, %v2837
        %v2839 = vpop.f32.mrf.mxu0
        %2840 = vdwg.mxu0
        %2841 = vmatprep.subr.mxu0 0.0
        %2842 = vmatpush1.msra.mxu0 0.0
        %2843 = vmatprep.subr.mxu0 0.0
        %2844 = vmatpush1.msra.mxu0 0.0
        %2845 = vmatprep.subr.mxu0 0.0
        %2846 = vmatpush1.msra.mxu0 0.0
        %2847 = vmatprep.subr.mxu0 0.0
        %2848 = vmatpush1.msra.mxu0 0.0
        %2849 = vmatprep.subr.mxu0 0.0
        %2850 = vmatpush1.msra.mxu0 0.0
        %2851 = vmatprep.subr.mxu0 0.0
        %2852 = vmatpush1.msra.mxu0 0.0
        %2853 = vmatprep.subr.mxu0 0.0
        %2854 = vmatpush1.msra.mxu0 0.0
        %2855 = vmatprep.subr.mxu0 0.0
        %2856 = vmatpush1.msra.mxu0 0.0
        %2857 = vmatprep.subr.mxu0 0.0
        %2858 = vmatpush1.msra.mxu0 0.0
        %2859 = vmatprep.subr.mxu0 0.0
        %2860 = vmatpush1.msra.mxu0 0.0
        %2861 = vmatprep.subr.mxu0 0.0
        %2862 = vmatpush1.msra.mxu0 0.0
        %2863 = vmatprep.subr.mxu0 0.0
        %2864 = vmatpush1.msra.mxu0 0.0
        %2865 = vmatprep.subr.mxu0 0.0
        %2866 = vmatpush1.msra.mxu0 %v2627
        %2867 = vmatprep.subr.mxu0 0.0
        %2868 = vmatpush1.msra.mxu0 %v2626
        %2869 = vmatprep.subr.mxu0 0.0
        %2870 = vmatpush1.msra.mxu0 %v2625
        %2871 = vmatprep.subr.mxu0 0.0
        %2872 = vmatpush1.msra.mxu0 %v2624
        %2873 = vmatprep.subr.mxu0 0.0
        %2874 = vmatpush2.msra.mxu0 0.0
        %2875 = vmatprep.subr.mxu0 0.0
        %2876 = vmatpush2.msra.mxu0 0.0
        %2877 = vmatprep.subr.mxu0 0.0
        %2878 = vmatpush2.msra.mxu0 0.0
        %2879 = vmatprep.subr.mxu0 0.0
        %2880 = vmatpush2.msra.mxu0 0.0
        %2881 = vmatprep.subr.mxu0 0.0
        %2882 = vmatpush2.msra.mxu0 0.0
        %2883 = vmatprep.subr.mxu0 0.0
        %2884 = vmatpush2.msra.mxu0 0.0
        %2885 = vmatprep.subr.mxu0 0.0
        %2886 = vmatpush2.msra.mxu0 0.0
        %2887 = vmatprep.subr.mxu0 0.0
        %2888 = vmatpush2.msra.mxu0 0.0
        %2889 = vmatprep.subr.mxu0 0.0
        %2890 = vmatpush2.msra.mxu0 0.0
        %2891 = vmatprep.subr.mxu0 0.0
        %2892 = vmatpush2.msra.mxu0 0.0
        %2893 = vmatprep.subr.mxu0 0.0
        %2894 = vmatpush2.msra.mxu0 0.0
        %2895 = vmatprep.subr.mxu0 0.0
        %2896 = vmatpush2.msra.mxu0 0.0
        %2897 = vmatprep.subr.mxu0 0.0
        %2898 = vmatpush2.msra.mxu0 0.0
        %2899 = vmatprep.subr.mxu0 0.0
        %2900 = vmatpush2.msra.mxu0 0.0
        %2901 = vmatprep.subr.mxu0 0.0
        %2902 = vmatpush2.msra.mxu0 0.0
        %2903 = vmatprep.subr.mxu0 0.0
        %2904 = vmatpush2.msra.mxu0 0.0
        %2905 = vmatprep.mubr.f32.mxu0 0.0
        %2906 = vmatmul.mubr.f32.gmra.mxu0 %v2629
        %v2907 = vpop.f32.mrf.mxu0
        %v2908 = vadd.f32 0.0, %v2907
        %v2909 = vpop.f32.mrf.mxu0
        %2910 = vdwg.mxu0
        %v2911 = vmul.f32 %v2698, 0.35355338
        %v2912 = vmul.f32 %v2768, 0.35355338
        %v2913 = vmul.f32 %v2838, 0.35355338
        %v2914 = vmul.f32 %v2908, 0.35355338
        %v2915 = vld [vmem:[%s11] sm:$0xff]
        %v2916 = vld [vmem:[%s11 + $0x8] sm:$0xff]
        %v2917 = vld [vmem:[%s11 + $0x10] sm:$0xff]
        %v2918 = vld [vmem:[%s11 + $0x18] sm:$0xff]
        %v2919 = vld [vmem:[%s11 + $0x20] sm:$0xff]
        %v2920 = vld [vmem:[%s11 + $0x28] sm:$0xff]
        %v2921 = vld [vmem:[%s11 + $0x30] sm:$0xff]
        %v2922 = vld [vmem:[%s11 + $0x38] sm:$0xff]
        %v2923 = vld [vmem:[%s11 + $0x40] sm:$0xff]
        %v2924 = vld [vmem:[%s11 + $0x48] sm:$0xff]
        %v2925 = vld [vmem:[%s11 + $0x50] sm:$0xff]
        %v2926 = vld [vmem:[%s11 + $0x58] sm:$0xff]
        %v2927 = vld [vmem:[%s11 + $0x60] sm:$0xff]
        %v2928 = vld [vmem:[%s11 + $0x68] sm:$0xff]
        %v2929 = vld [vmem:[%s11 + $0x70] sm:$0xff]
        %v2930 = vld [vmem:[%s11 + $0x78] sm:$0xff]
        %v2932 = vsel %vm750, %v731, 0
        %2934 = vmatprep.subr.mxu0 0.0
        %2935 = vmatpush1.msra.mxu0 0.0
        %2936 = vmatprep.subr.mxu0 0.0
        %2937 = vmatpush1.msra.mxu0 0.0
        %2938 = vmatprep.subr.mxu0 0.0
        %2939 = vmatpush1.msra.mxu0 0.0
        %2940 = vmatprep.subr.mxu0 0.0
        %2941 = vmatpush1.msra.mxu0 0.0
        %2942 = vmatprep.subr.mxu0 0.0
        %2943 = vmatpush1.msra.mxu0 0.0
        %2944 = vmatprep.subr.mxu0 0.0
        %2945 = vmatpush1.msra.mxu0 0.0
        %2946 = vmatprep.subr.mxu0 0.0
        %2947 = vmatpush1.msra.mxu0 0.0
        %2948 = vmatprep.subr.mxu0 0.0
        %2949 = vmatpush1.msra.mxu0 0.0
        %2950 = vmatprep.subr.mxu0 0.0
        %2951 = vmatpush1.msra.mxu0 0.0
        %2952 = vmatprep.subr.mxu0 0.0
        %2953 = vmatpush1.msra.mxu0 0.0
        %2954 = vmatprep.subr.mxu0 0.0
        %2955 = vmatpush1.msra.mxu0 0.0
        %2956 = vmatprep.subr.mxu0 0.0
        %2957 = vmatpush1.msra.mxu0 0.0
        %2958 = vmatprep.subr.mxu0 0.0
        %2959 = vmatpush1.msra.mxu0 %v2918
        %2960 = vmatprep.subr.mxu0 0.0
        %2961 = vmatpush1.msra.mxu0 %v2917
        %2962 = vmatprep.subr.mxu0 0.0
        %2963 = vmatpush1.msra.mxu0 %v2916
        %2964 = vmatprep.subr.mxu0 0.0
        %2965 = vmatpush1.msra.mxu0 %v2915
        %2966 = vmatprep.subr.mxu0 0.0
        %2967 = vmatpush2.msra.mxu0 0.0
        %2968 = vmatprep.subr.mxu0 0.0
        %2969 = vmatpush2.msra.mxu0 0.0
        %2970 = vmatprep.subr.mxu0 0.0
        %2971 = vmatpush2.msra.mxu0 0.0
        %2972 = vmatprep.subr.mxu0 0.0
        %2973 = vmatpush2.msra.mxu0 0.0
        %2974 = vmatprep.subr.mxu0 0.0
        %2975 = vmatpush2.msra.mxu0 0.0
        %2976 = vmatprep.subr.mxu0 0.0
        %2977 = vmatpush2.msra.mxu0 0.0
        %2978 = vmatprep.subr.mxu0 0.0
        %2979 = vmatpush2.msra.mxu0 0.0
        %2980 = vmatprep.subr.mxu0 0.0
        %2981 = vmatpush2.msra.mxu0 0.0
        %2982 = vmatprep.subr.mxu0 0.0
        %2983 = vmatpush2.msra.mxu0 0.0
        %2984 = vmatprep.subr.mxu0 0.0
        %2985 = vmatpush2.msra.mxu0 0.0
        %2986 = vmatprep.subr.mxu0 0.0
        %2987 = vmatpush2.msra.mxu0 0.0
        %2988 = vmatprep.subr.mxu0 0.0
        %2989 = vmatpush2.msra.mxu0 0.0
        %2990 = vmatprep.subr.mxu0 0.0
        %2991 = vmatpush2.msra.mxu0 0.0
        %2992 = vmatprep.subr.mxu0 0.0
        %2993 = vmatpush2.msra.mxu0 0.0
        %2994 = vmatprep.subr.mxu0 0.0
        %2995 = vmatpush2.msra.mxu0 0.0
        %2996 = vmatprep.subr.mxu0 0.0
        %2997 = vmatpush2.msra.mxu0 0.0
        %2998 = vmatprep.mubr.f32.mxu0 0.0
        %2999 = vmatmul.mubr.f32.gmra.mxu0 %v2932
        %v3000 = vpop.f32.mrf.mxu0
        %v3001 = vadd.f32 0.0, %v3000
        %v3002 = vpop.f32.mrf.mxu0
        %3003 = vdwg.mxu0
        %3004 = vmatprep.subr.mxu0 0.0
        %3005 = vmatpush1.msra.mxu0 0.0
        %3006 = vmatprep.subr.mxu0 0.0
        %3007 = vmatpush1.msra.mxu0 0.0
        %3008 = vmatprep.subr.mxu0 0.0
        %3009 = vmatpush1.msra.mxu0 0.0
        %3010 = vmatprep.subr.mxu0 0.0
        %3011 = vmatpush1.msra.mxu0 0.0
        %3012 = vmatprep.subr.mxu0 0.0
        %3013 = vmatpush1.msra.mxu0 0.0
        %3014 = vmatprep.subr.mxu0 0.0
        %3015 = vmatpush1.msra.mxu0 0.0
        %3016 = vmatprep.subr.mxu0 0.0
        %3017 = vmatpush1.msra.mxu0 0.0
        %3018 = vmatprep.subr.mxu0 0.0
        %3019 = vmatpush1.msra.mxu0 0.0
        %3020 = vmatprep.subr.mxu0 0.0
        %3021 = vmatpush1.msra.mxu0 0.0
        %3022 = vmatprep.subr.mxu0 0.0
        %3023 = vmatpush1.msra.mxu0 0.0
        %3024 = vmatprep.subr.mxu0 0.0
        %3025 = vmatpush1.msra.mxu0 0.0
        %3026 = vmatprep.subr.mxu0 0.0
        %3027 = vmatpush1.msra.mxu0 0.0
        %3028 = vmatprep.subr.mxu0 0.0
        %3029 = vmatpush1.msra.mxu0 %v2922
        %3030 = vmatprep.subr.mxu0 0.0
        %3031 = vmatpush1.msra.mxu0 %v2921
        %3032 = vmatprep.subr.mxu0 0.0
        %3033 = vmatpush1.msra.mxu0 %v2920
        %3034 = vmatprep.subr.mxu0 0.0
        %3035 = vmatpush1.msra.mxu0 %v2919
        %3036 = vmatprep.subr.mxu0 0.0
        %3037 = vmatpush2.msra.mxu0 0.0
        %3038 = vmatprep.subr.mxu0 0.0
        %3039 = vmatpush2.msra.mxu0 0.0
        %3040 = vmatprep.subr.mxu0 0.0
        %3041 = vmatpush2.msra.mxu0 0.0
        %3042 = vmatprep.subr.mxu0 0.0
        %3043 = vmatpush2.msra.mxu0 0.0
        %3044 = vmatprep.subr.mxu0 0.0
        %3045 = vmatpush2.msra.mxu0 0.0
        %3046 = vmatprep.subr.mxu0 0.0
        %3047 = vmatpush2.msra.mxu0 0.0
        %3048 = vmatprep.subr.mxu0 0.0
        %3049 = vmatpush2.msra.mxu0 0.0
        %3050 = vmatprep.subr.mxu0 0.0
        %3051 = vmatpush2.msra.mxu0 0.0
        %3052 = vmatprep.subr.mxu0 0.0
        %3053 = vmatpush2.msra.mxu0 0.0
        %3054 = vmatprep.subr.mxu0 0.0
        %3055 = vmatpush2.msra.mxu0 0.0
        %3056 = vmatprep.subr.mxu0 0.0
        %3057 = vmatpush2.msra.mxu0 0.0
        %3058 = vmatprep.subr.mxu0 0.0
        %3059 = vmatpush2.msra.mxu0 0.0
        %3060 = vmatprep.subr.mxu0 0.0
        %3061 = vmatpush2.msra.mxu0 0.0
        %3062 = vmatprep.subr.mxu0 0.0
        %3063 = vmatpush2.msra.mxu0 0.0
        %3064 = vmatprep.subr.mxu0 0.0
        %3065 = vmatpush2.msra.mxu0 0.0
        %3066 = vmatprep.subr.mxu0 0.0
        %3067 = vmatpush2.msra.mxu0 0.0
        %3068 = vmatprep.mubr.f32.mxu0 0.0
        %3069 = vmatmul.mubr.f32.gmra.mxu0 %v2932
        %v3070 = vpop.f32.mrf.mxu0
        %v3071 = vadd.f32 0.0, %v3070
        %v3072 = vpop.f32.mrf.mxu0
        %3073 = vdwg.mxu0
        %3074 = vmatprep.subr.mxu0 0.0
        %3075 = vmatpush1.msra.mxu0 0.0
        %3076 = vmatprep.subr.mxu0 0.0
        %3077 = vmatpush1.msra.mxu0 0.0
        %3078 = vmatprep.subr.mxu0 0.0
        %3079 = vmatpush1.msra.mxu0 0.0
        %3080 = vmatprep.subr.mxu0 0.0
        %3081 = vmatpush1.msra.mxu0 0.0
        %3082 = vmatprep.subr.mxu0 0.0
        %3083 = vmatpush1.msra.mxu0 0.0
        %3084 = vmatprep.subr.mxu0 0.0
        %3085 = vmatpush1.msra.mxu0 0.0
        %3086 = vmatprep.subr.mxu0 0.0
        %3087 = vmatpush1.msra.mxu0 0.0
        %3088 = vmatprep.subr.mxu0 0.0
        %3089 = vmatpush1.msra.mxu0 0.0
        %3090 = vmatprep.subr.mxu0 0.0
        %3091 = vmatpush1.msra.mxu0 0.0
        %3092 = vmatprep.subr.mxu0 0.0
        %3093 = vmatpush1.msra.mxu0 0.0
        %3094 = vmatprep.subr.mxu0 0.0
        %3095 = vmatpush1.msra.mxu0 0.0
        %3096 = vmatprep.subr.mxu0 0.0
        %3097 = vmatpush1.msra.mxu0 0.0
        %3098 = vmatprep.subr.mxu0 0.0
        %3099 = vmatpush1.msra.mxu0 %v2926
        %3100 = vmatprep.subr.mxu0 0.0
        %3101 = vmatpush1.msra.mxu0 %v2925
        %3102 = vmatprep.subr.mxu0 0.0
        %3103 = vmatpush1.msra.mxu0 %v2924
        %3104 = vmatprep.subr.mxu0 0.0
        %3105 = vmatpush1.msra.mxu0 %v2923
        %3106 = vmatprep.subr.mxu0 0.0
        %3107 = vmatpush2.msra.mxu0 0.0
        %3108 = vmatprep.subr.mxu0 0.0
        %3109 = vmatpush2.msra.mxu0 0.0
        %3110 = vmatprep.subr.mxu0 0.0
        %3111 = vmatpush2.msra.mxu0 0.0
        %3112 = vmatprep.subr.mxu0 0.0
        %3113 = vmatpush2.msra.mxu0 0.0
        %3114 = vmatprep.subr.mxu0 0.0
        %3115 = vmatpush2.msra.mxu0 0.0
        %3116 = vmatprep.subr.mxu0 0.0
        %3117 = vmatpush2.msra.mxu0 0.0
        %3118 = vmatprep.subr.mxu0 0.0
        %3119 = vmatpush2.msra.mxu0 0.0
        %3120 = vmatprep.subr.mxu0 0.0
        %3121 = vmatpush2.msra.mxu0 0.0
        %3122 = vmatprep.subr.mxu0 0.0
        %3123 = vmatpush2.msra.mxu0 0.0
        %3124 = vmatprep.subr.mxu0 0.0
        %3125 = vmatpush2.msra.mxu0 0.0
        %3126 = vmatprep.subr.mxu0 0.0
        %3127 = vmatpush2.msra.mxu0 0.0
        %3128 = vmatprep.subr.mxu0 0.0
        %3129 = vmatpush2.msra.mxu0 0.0
        %3130 = vmatprep.subr.mxu0 0.0
        %3131 = vmatpush2.msra.mxu0 0.0
        %3132 = vmatprep.subr.mxu0 0.0
        %3133 = vmatpush2.msra.mxu0 0.0
        %3134 = vmatprep.subr.mxu0 0.0
        %3135 = vmatpush2.msra.mxu0 0.0
        %3136 = vmatprep.subr.mxu0 0.0
        %3137 = vmatpush2.msra.mxu0 0.0
        %3138 = vmatprep.mubr.f32.mxu0 0.0
        %3139 = vmatmul.mubr.f32.gmra.mxu0 %v2932
        %v3140 = vpop.f32.mrf.mxu0
        %v3141 = vadd.f32 0.0, %v3140
        %v3142 = vpop.f32.mrf.mxu0
        %3143 = vdwg.mxu0
        %3144 = vmatprep.subr.mxu0 0.0
        %3145 = vmatpush1.msra.mxu0 0.0
        %3146 = vmatprep.subr.mxu0 0.0
        %3147 = vmatpush1.msra.mxu0 0.0
        %3148 = vmatprep.subr.mxu0 0.0
        %3149 = vmatpush1.msra.mxu0 0.0
        %3150 = vmatprep.subr.mxu0 0.0
        %3151 = vmatpush1.msra.mxu0 0.0
        %3152 = vmatprep.subr.mxu0 0.0
        %3153 = vmatpush1.msra.mxu0 0.0
        %3154 = vmatprep.subr.mxu0 0.0
        %3155 = vmatpush1.msra.mxu0 0.0
        %3156 = vmatprep.subr.mxu0 0.0
        %3157 = vmatpush1.msra.mxu0 0.0
        %3158 = vmatprep.subr.mxu0 0.0
        %3159 = vmatpush1.msra.mxu0 0.0
        %3160 = vmatprep.subr.mxu0 0.0
        %3161 = vmatpush1.msra.mxu0 0.0
        %3162 = vmatprep.subr.mxu0 0.0
        %3163 = vmatpush1.msra.mxu0 0.0
        %3164 = vmatprep.subr.mxu0 0.0
        %3165 = vmatpush1.msra.mxu0 0.0
        %3166 = vmatprep.subr.mxu0 0.0
        %3167 = vmatpush1.msra.mxu0 0.0
        %3168 = vmatprep.subr.mxu0 0.0
        %3169 = vmatpush1.msra.mxu0 %v2930
        %3170 = vmatprep.subr.mxu0 0.0
        %3171 = vmatpush1.msra.mxu0 %v2929
        %3172 = vmatprep.subr.mxu0 0.0
        %3173 = vmatpush1.msra.mxu0 %v2928
        %3174 = vmatprep.subr.mxu0 0.0
        %3175 = vmatpush1.msra.mxu0 %v2927
        %3176 = vmatprep.subr.mxu0 0.0
        %3177 = vmatpush2.msra.mxu0 0.0
        %3178 = vmatprep.subr.mxu0 0.0
        %3179 = vmatpush2.msra.mxu0 0.0
        %3180 = vmatprep.subr.mxu0 0.0
        %3181 = vmatpush2.msra.mxu0 0.0
        %3182 = vmatprep.subr.mxu0 0.0
        %3183 = vmatpush2.msra.mxu0 0.0
        %3184 = vmatprep.subr.mxu0 0.0
        %3185 = vmatpush2.msra.mxu0 0.0
        %3186 = vmatprep.subr.mxu0 0.0
        %3187 = vmatpush2.msra.mxu0 0.0
        %3188 = vmatprep.subr.mxu0 0.0
        %3189 = vmatpush2.msra.mxu0 0.0
        %3190 = vmatprep.subr.mxu0 0.0
        %3191 = vmatpush2.msra.mxu0 0.0
        %3192 = vmatprep.subr.mxu0 0.0
        %3193 = vmatpush2.msra.mxu0 0.0
        %3194 = vmatprep.subr.mxu0 0.0
        %3195 = vmatpush2.msra.mxu0 0.0
        %3196 = vmatprep.subr.mxu0 0.0
        %3197 = vmatpush2.msra.mxu0 0.0
        %3198 = vmatprep.subr.mxu0 0.0
        %3199 = vmatpush2.msra.mxu0 0.0
        %3200 = vmatprep.subr.mxu0 0.0
        %3201 = vmatpush2.msra.mxu0 0.0
        %3202 = vmatprep.subr.mxu0 0.0
        %3203 = vmatpush2.msra.mxu0 0.0
        %3204 = vmatprep.subr.mxu0 0.0
        %3205 = vmatpush2.msra.mxu0 0.0
        %3206 = vmatprep.subr.mxu0 0.0
        %3207 = vmatpush2.msra.mxu0 0.0
        %3208 = vmatprep.mubr.f32.mxu0 0.0
        %3209 = vmatmul.mubr.f32.gmra.mxu0 %v2932
        %v3210 = vpop.f32.mrf.mxu0
        %v3211 = vadd.f32 0.0, %v3210
        %v3212 = vpop.f32.mrf.mxu0
        %3213 = vdwg.mxu0
        %v3214 = vld [vmem:[%s12] sm:$0xff]
        %v3215 = vld [vmem:[%s12 + $0x8] sm:$0xff]
        %v3216 = vld [vmem:[%s12 + $0x10] sm:$0xff]
        %v3217 = vld [vmem:[%s12 + $0x18] sm:$0xff]
        %v3218 = vld [vmem:[%s12 + $0x20] sm:$0xff]
        %v3219 = vld [vmem:[%s12 + $0x28] sm:$0xff]
        %v3220 = vld [vmem:[%s12 + $0x30] sm:$0xff]
        %v3221 = vld [vmem:[%s12 + $0x38] sm:$0xff]
        %v3222 = vld [vmem:[%s12 + $0x40] sm:$0xff]
        %v3223 = vld [vmem:[%s12 + $0x48] sm:$0xff]
        %v3224 = vld [vmem:[%s12 + $0x50] sm:$0xff]
        %v3225 = vld [vmem:[%s12 + $0x58] sm:$0xff]
        %v3226 = vld [vmem:[%s12 + $0x60] sm:$0xff]
        %v3227 = vld [vmem:[%s12 + $0x68] sm:$0xff]
        %v3228 = vld [vmem:[%s12 + $0x70] sm:$0xff]
        %v3229 = vld [vmem:[%s12 + $0x78] sm:$0xff]
        %3230 = vmatprep.subr.mxu0 0.0
        %3231 = vmatpush1.msra.mxu0 0.0
        %3232 = vmatprep.subr.mxu0 0.0
        %3233 = vmatpush1.msra.mxu0 0.0
        %3234 = vmatprep.subr.mxu0 0.0
        %3235 = vmatpush1.msra.mxu0 0.0
        %3236 = vmatprep.subr.mxu0 0.0
        %3237 = vmatpush1.msra.mxu0 0.0
        %3238 = vmatprep.subr.mxu0 0.0
        %3239 = vmatpush1.msra.mxu0 0.0
        %3240 = vmatprep.subr.mxu0 0.0
        %3241 = vmatpush1.msra.mxu0 0.0
        %3242 = vmatprep.subr.mxu0 0.0
        %3243 = vmatpush1.msra.mxu0 0.0
        %3244 = vmatprep.subr.mxu0 0.0
        %3245 = vmatpush1.msra.mxu0 0.0
        %3246 = vmatprep.subr.mxu0 0.0
        %3247 = vmatpush1.msra.mxu0 0.0
        %3248 = vmatprep.subr.mxu0 0.0
        %3249 = vmatpush1.msra.mxu0 0.0
        %3250 = vmatprep.subr.mxu0 0.0
        %3251 = vmatpush1.msra.mxu0 0.0
        %3252 = vmatprep.subr.mxu0 0.0
        %3253 = vmatpush1.msra.mxu0 0.0
        %3254 = vmatprep.subr.mxu0 0.0
        %3255 = vmatpush1.msra.mxu0 %v3217
        %3256 = vmatprep.subr.mxu0 0.0
        %3257 = vmatpush1.msra.mxu0 %v3216
        %3258 = vmatprep.subr.mxu0 0.0
        %3259 = vmatpush1.msra.mxu0 %v3215
        %3260 = vmatprep.subr.mxu0 0.0
        %3261 = vmatpush1.msra.mxu0 %v3214
        %3262 = vmatprep.subr.mxu0 0.0
        %3263 = vmatpush2.msra.mxu0 0.0
        %3264 = vmatprep.subr.mxu0 0.0
        %3265 = vmatpush2.msra.mxu0 0.0
        %3266 = vmatprep.subr.mxu0 0.0
        %3267 = vmatpush2.msra.mxu0 0.0
        %3268 = vmatprep.subr.mxu0 0.0
        %3269 = vmatpush2.msra.mxu0 0.0
        %3270 = vmatprep.subr.mxu0 0.0
        %3271 = vmatpush2.msra.mxu0 0.0
        %3272 = vmatprep.subr.mxu0 0.0
        %3273 = vmatpush2.msra.mxu0 0.0
        %3274 = vmatprep.subr.mxu0 0.0
        %3275 = vmatpush2.msra.mxu0 0.0
        %3276 = vmatprep.subr.mxu0 0.0
        %3277 = vmatpush2.msra.mxu0 0.0
        %3278 = vmatprep.subr.mxu0 0.0
        %3279 = vmatpush2.msra.mxu0 0.0
        %3280 = vmatprep.subr.mxu0 0.0
        %3281 = vmatpush2.msra.mxu0 0.0
        %3282 = vmatprep.subr.mxu0 0.0
        %3283 = vmatpush2.msra.mxu0 0.0
        %3284 = vmatprep.subr.mxu0 0.0
        %3285 = vmatpush2.msra.mxu0 0.0
        %3286 = vmatprep.subr.mxu0 0.0
        %3287 = vmatpush2.msra.mxu0 0.0
        %3288 = vmatprep.subr.mxu0 0.0
        %3289 = vmatpush2.msra.mxu0 0.0
        %3290 = vmatprep.subr.mxu0 0.0
        %3291 = vmatpush2.msra.mxu0 0.0
        %3292 = vmatprep.subr.mxu0 0.0
        %3293 = vmatpush2.msra.mxu0 0.0
        %3294 = vmatprep.mubr.f32.mxu0 0.0
        %3295 = vmatmul.mubr.f32.gmra.mxu0 %v2932
        %v3296 = vpop.f32.mrf.mxu0
        %v3297 = vadd.f32 0.0, %v3296
        %v3298 = vpop.f32.mrf.mxu0
        %3299 = vdwg.mxu0
        %3300 = vmatprep.subr.mxu0 0.0
        %3301 = vmatpush1.msra.mxu0 0.0
        %3302 = vmatprep.subr.mxu0 0.0
        %3303 = vmatpush1.msra.mxu0 0.0
        %3304 = vmatprep.subr.mxu0 0.0
        %3305 = vmatpush1.msra.mxu0 0.0
        %3306 = vmatprep.subr.mxu0 0.0
        %3307 = vmatpush1.msra.mxu0 0.0
        %3308 = vmatprep.subr.mxu0 0.0
        %3309 = vmatpush1.msra.mxu0 0.0
        %3310 = vmatprep.subr.mxu0 0.0
        %3311 = vmatpush1.msra.mxu0 0.0
        %3312 = vmatprep.subr.mxu0 0.0
        %3313 = vmatpush1.msra.mxu0 0.0
        %3314 = vmatprep.subr.mxu0 0.0
        %3315 = vmatpush1.msra.mxu0 0.0
        %3316 = vmatprep.subr.mxu0 0.0
        %3317 = vmatpush1.msra.mxu0 0.0
        %3318 = vmatprep.subr.mxu0 0.0
        %3319 = vmatpush1.msra.mxu0 0.0
        %3320 = vmatprep.subr.mxu0 0.0
        %3321 = vmatpush1.msra.mxu0 0.0
        %3322 = vmatprep.subr.mxu0 0.0
        %3323 = vmatpush1.msra.mxu0 0.0
        %3324 = vmatprep.subr.mxu0 0.0
        %3325 = vmatpush1.msra.mxu0 %v3221
        %3326 = vmatprep.subr.mxu0 0.0
        %3327 = vmatpush1.msra.mxu0 %v3220
        %3328 = vmatprep.subr.mxu0 0.0
        %3329 = vmatpush1.msra.mxu0 %v3219
        %3330 = vmatprep.subr.mxu0 0.0
        %3331 = vmatpush1.msra.mxu0 %v3218
        %3332 = vmatprep.subr.mxu0 0.0
        %3333 = vmatpush2.msra.mxu0 0.0
        %3334 = vmatprep.subr.mxu0 0.0
        %3335 = vmatpush2.msra.mxu0 0.0
        %3336 = vmatprep.subr.mxu0 0.0
        %3337 = vmatpush2.msra.mxu0 0.0
        %3338 = vmatprep.subr.mxu0 0.0
        %3339 = vmatpush2.msra.mxu0 0.0
        %3340 = vmatprep.subr.mxu0 0.0
        %3341 = vmatpush2.msra.mxu0 0.0
        %3342 = vmatprep.subr.mxu0 0.0
        %3343 = vmatpush2.msra.mxu0 0.0
        %3344 = vmatprep.subr.mxu0 0.0
        %3345 = vmatpush2.msra.mxu0 0.0
        %3346 = vmatprep.subr.mxu0 0.0
        %3347 = vmatpush2.msra.mxu0 0.0
        %3348 = vmatprep.subr.mxu0 0.0
        %3349 = vmatpush2.msra.mxu0 0.0
        %3350 = vmatprep.subr.mxu0 0.0
        %3351 = vmatpush2.msra.mxu0 0.0
        %3352 = vmatprep.subr.mxu0 0.0
        %3353 = vmatpush2.msra.mxu0 0.0
        %3354 = vmatprep.subr.mxu0 0.0
        %3355 = vmatpush2.msra.mxu0 0.0
        %3356 = vmatprep.subr.mxu0 0.0
        %3357 = vmatpush2.msra.mxu0 0.0
        %3358 = vmatprep.subr.mxu0 0.0
        %3359 = vmatpush2.msra.mxu0 0.0
        %3360 = vmatprep.subr.mxu0 0.0
        %3361 = vmatpush2.msra.mxu0 0.0
        %3362 = vmatprep.subr.mxu0 0.0
        %3363 = vmatpush2.msra.mxu0 0.0
        %3364 = vmatprep.mubr.f32.mxu0 0.0
        %3365 = vmatmul.mubr.f32.gmra.mxu0 %v2932
        %v3366 = vpop.f32.mrf.mxu0
        %v3367 = vadd.f32 0.0, %v3366
        %v3368 = vpop.f32.mrf.mxu0
        %3369 = vdwg.mxu0
        %3370 = vmatprep.subr.mxu0 0.0
        %3371 = vmatpush1.msra.mxu0 0.0
        %3372 = vmatprep.subr.mxu0 0.0
        %3373 = vmatpush1.msra.mxu0 0.0
        %3374 = vmatprep.subr.mxu0 0.0
        %3375 = vmatpush1.msra.mxu0 0.0
        %3376 = vmatprep.subr.mxu0 0.0
        %3377 = vmatpush1.msra.mxu0 0.0
        %3378 = vmatprep.subr.mxu0 0.0
        %3379 = vmatpush1.msra.mxu0 0.0
        %3380 = vmatprep.subr.mxu0 0.0
        %3381 = vmatpush1.msra.mxu0 0.0
        %3382 = vmatprep.subr.mxu0 0.0
        %3383 = vmatpush1.msra.mxu0 0.0
        %3384 = vmatprep.subr.mxu0 0.0
        %3385 = vmatpush1.msra.mxu0 0.0
        %3386 = vmatprep.subr.mxu0 0.0
        %3387 = vmatpush1.msra.mxu0 0.0
        %3388 = vmatprep.subr.mxu0 0.0
        %3389 = vmatpush1.msra.mxu0 0.0
        %3390 = vmatprep.subr.mxu0 0.0
        %3391 = vmatpush1.msra.mxu0 0.0
        %3392 = vmatprep.subr.mxu0 0.0
        %3393 = vmatpush1.msra.mxu0 0.0
        %3394 = vmatprep.subr.mxu0 0.0
        %3395 = vmatpush1.msra.mxu0 %v3225
        %3396 = vmatprep.subr.mxu0 0.0
        %3397 = vmatpush1.msra.mxu0 %v3224
        %3398 = vmatprep.subr.mxu0 0.0
        %3399 = vmatpush1.msra.mxu0 %v3223
        %3400 = vmatprep.subr.mxu0 0.0
        %3401 = vmatpush1.msra.mxu0 %v3222
        %3402 = vmatprep.subr.mxu0 0.0
        %3403 = vmatpush2.msra.mxu0 0.0
        %3404 = vmatprep.subr.mxu0 0.0
        %3405 = vmatpush2.msra.mxu0 0.0
        %3406 = vmatprep.subr.mxu0 0.0
        %3407 = vmatpush2.msra.mxu0 0.0
        %3408 = vmatprep.subr.mxu0 0.0
        %3409 = vmatpush2.msra.mxu0 0.0
        %3410 = vmatprep.subr.mxu0 0.0
        %3411 = vmatpush2.msra.mxu0 0.0
        %3412 = vmatprep.subr.mxu0 0.0
        %3413 = vmatpush2.msra.mxu0 0.0
        %3414 = vmatprep.subr.mxu0 0.0
        %3415 = vmatpush2.msra.mxu0 0.0
        %3416 = vmatprep.subr.mxu0 0.0
        %3417 = vmatpush2.msra.mxu0 0.0
        %3418 = vmatprep.subr.mxu0 0.0
        %3419 = vmatpush2.msra.mxu0 0.0
        %3420 = vmatprep.subr.mxu0 0.0
        %3421 = vmatpush2.msra.mxu0 0.0
        %3422 = vmatprep.subr.mxu0 0.0
        %3423 = vmatpush2.msra.mxu0 0.0
        %3424 = vmatprep.subr.mxu0 0.0
        %3425 = vmatpush2.msra.mxu0 0.0
        %3426 = vmatprep.subr.mxu0 0.0
        %3427 = vmatpush2.msra.mxu0 0.0
        %3428 = vmatprep.subr.mxu0 0.0
        %3429 = vmatpush2.msra.mxu0 0.0
        %3430 = vmatprep.subr.mxu0 0.0
        %3431 = vmatpush2.msra.mxu0 0.0
        %3432 = vmatprep.subr.mxu0 0.0
        %3433 = vmatpush2.msra.mxu0 0.0
        %3434 = vmatprep.mubr.f32.mxu0 0.0
        %3435 = vmatmul.mubr.f32.gmra.mxu0 %v2932
        %v3436 = vpop.f32.mrf.mxu0
        %v3437 = vadd.f32 0.0, %v3436
        %v3438 = vpop.f32.mrf.mxu0
        %3439 = vdwg.mxu0
        %3440 = vmatprep.subr.mxu0 0.0
        %3441 = vmatpush1.msra.mxu0 0.0
        %3442 = vmatprep.subr.mxu0 0.0
        %3443 = vmatpush1.msra.mxu0 0.0
        %3444 = vmatprep.subr.mxu0 0.0
        %3445 = vmatpush1.msra.mxu0 0.0
        %3446 = vmatprep.subr.mxu0 0.0
        %3447 = vmatpush1.msra.mxu0 0.0
        %3448 = vmatprep.subr.mxu0 0.0
        %3449 = vmatpush1.msra.mxu0 0.0
        %3450 = vmatprep.subr.mxu0 0.0
        %3451 = vmatpush1.msra.mxu0 0.0
        %3452 = vmatprep.subr.mxu0 0.0
        %3453 = vmatpush1.msra.mxu0 0.0
        %3454 = vmatprep.subr.mxu0 0.0
        %3455 = vmatpush1.msra.mxu0 0.0
        %3456 = vmatprep.subr.mxu0 0.0
        %3457 = vmatpush1.msra.mxu0 0.0
        %3458 = vmatprep.subr.mxu0 0.0
        %3459 = vmatpush1.msra.mxu0 0.0
        %3460 = vmatprep.subr.mxu0 0.0
        %3461 = vmatpush1.msra.mxu0 0.0
        %3462 = vmatprep.subr.mxu0 0.0
        %3463 = vmatpush1.msra.mxu0 0.0
        %3464 = vmatprep.subr.mxu0 0.0
        %3465 = vmatpush1.msra.mxu0 %v3229
        %3466 = vmatprep.subr.mxu0 0.0
        %3467 = vmatpush1.msra.mxu0 %v3228
        %3468 = vmatprep.subr.mxu0 0.0
        %3469 = vmatpush1.msra.mxu0 %v3227
        %3470 = vmatprep.subr.mxu0 0.0
        %3471 = vmatpush1.msra.mxu0 %v3226
        %3472 = vmatprep.subr.mxu0 0.0
        %3473 = vmatpush2.msra.mxu0 0.0
        %3474 = vmatprep.subr.mxu0 0.0
        %3475 = vmatpush2.msra.mxu0 0.0
        %3476 = vmatprep.subr.mxu0 0.0
        %3477 = vmatpush2.msra.mxu0 0.0
        %3478 = vmatprep.subr.mxu0 0.0
        %3479 = vmatpush2.msra.mxu0 0.0
        %3480 = vmatprep.subr.mxu0 0.0
        %3481 = vmatpush2.msra.mxu0 0.0
        %3482 = vmatprep.subr.mxu0 0.0
        %3483 = vmatpush2.msra.mxu0 0.0
        %3484 = vmatprep.subr.mxu0 0.0
        %3485 = vmatpush2.msra.mxu0 0.0
        %3486 = vmatprep.subr.mxu0 0.0
        %3487 = vmatpush2.msra.mxu0 0.0
        %3488 = vmatprep.subr.mxu0 0.0
        %3489 = vmatpush2.msra.mxu0 0.0
        %3490 = vmatprep.subr.mxu0 0.0
        %3491 = vmatpush2.msra.mxu0 0.0
        %3492 = vmatprep.subr.mxu0 0.0
        %3493 = vmatpush2.msra.mxu0 0.0
        %3494 = vmatprep.subr.mxu0 0.0
        %3495 = vmatpush2.msra.mxu0 0.0
        %3496 = vmatprep.subr.mxu0 0.0
        %3497 = vmatpush2.msra.mxu0 0.0
        %3498 = vmatprep.subr.mxu0 0.0
        %3499 = vmatpush2.msra.mxu0 0.0
        %3500 = vmatprep.subr.mxu0 0.0
        %3501 = vmatpush2.msra.mxu0 0.0
        %3502 = vmatprep.subr.mxu0 0.0
        %3503 = vmatpush2.msra.mxu0 0.0
        %3504 = vmatprep.mubr.f32.mxu0 0.0
        %3505 = vmatmul.mubr.f32.gmra.mxu0 %v2932
        %v3506 = vpop.f32.mrf.mxu0
        %v3507 = vadd.f32 0.0, %v3506
        %v3508 = vpop.f32.mrf.mxu0
        %3509 = vdwg.mxu0
        %v3511 = vsel %vm1630, %v2911, 0
        %v3514 = vsel %vm1630, %v3001, 0
        %3516 = vmatprep.subr.mxu0 0.0
        %3517 = vmatpush1.xpose.msra.mxu0 0.0
        %3518 = vmatprep.subr.mxu0 0.0
        %3519 = vmatpush1.xpose.msra.mxu0 0.0
        %3520 = vmatprep.subr.mxu0 0.0
        %3521 = vmatpush1.xpose.msra.mxu0 0.0
        %3522 = vmatprep.subr.mxu0 0.0
        %3523 = vmatpush1.xpose.msra.mxu0 0.0
        %3524 = vmatprep.subr.mxu0 0.0
        %3525 = vmatpush1.xpose.msra.mxu0 0.0
        %3526 = vmatprep.subr.mxu0 0.0
        %3527 = vmatpush1.xpose.msra.mxu0 0.0
        %3528 = vmatprep.subr.mxu0 0.0
        %3529 = vmatpush1.xpose.msra.mxu0 0.0
        %3530 = vmatprep.subr.mxu0 0.0
        %3531 = vmatpush1.xpose.msra.mxu0 0.0
        %3532 = vmatprep.subr.mxu0 0.0
        %3533 = vmatpush1.xpose.msra.mxu0 0.0
        %3534 = vmatprep.subr.mxu0 0.0
        %3535 = vmatpush1.xpose.msra.mxu0 0.0
        %3536 = vmatprep.subr.mxu0 0.0
        %3537 = vmatpush1.xpose.msra.mxu0 0.0
        %3538 = vmatprep.subr.mxu0 0.0
        %3539 = vmatpush1.xpose.msra.mxu0 0.0
        %3540 = vmatprep.subr.mxu0 0.0
        %3541 = vmatpush1.xpose.msra.mxu0 0.0
        %3542 = vmatprep.subr.mxu0 0.0
        %3543 = vmatpush1.xpose.msra.mxu0 0.0
        %3544 = vmatprep.subr.mxu0 0.0
        %3545 = vmatpush1.xpose.msra.mxu0 0.0
        %3546 = vmatprep.subr.mxu0 0.0
        %3547 = vmatpush1.xpose.msra.mxu0 %v3514
        %3548 = vmatprep.subr.mxu0 0.0
        %3549 = vmatpush2.xpose.msra.mxu0 0.0
        %3550 = vmatprep.subr.mxu0 0.0
        %3551 = vmatpush2.xpose.msra.mxu0 0.0
        %3552 = vmatprep.subr.mxu0 0.0
        %3553 = vmatpush2.xpose.msra.mxu0 0.0
        %3554 = vmatprep.subr.mxu0 0.0
        %3555 = vmatpush2.xpose.msra.mxu0 0.0
        %3556 = vmatprep.subr.mxu0 0.0
        %3557 = vmatpush2.xpose.msra.mxu0 0.0
        %3558 = vmatprep.subr.mxu0 0.0
        %3559 = vmatpush2.xpose.msra.mxu0 0.0
        %3560 = vmatprep.subr.mxu0 0.0
        %3561 = vmatpush2.xpose.msra.mxu0 0.0
        %3562 = vmatprep.subr.mxu0 0.0
        %3563 = vmatpush2.xpose.msra.mxu0 0.0
        %3564 = vmatprep.subr.mxu0 0.0
        %3565 = vmatpush2.xpose.msra.mxu0 0.0
        %3566 = vmatprep.subr.mxu0 0.0
        %3567 = vmatpush2.xpose.msra.mxu0 0.0
        %3568 = vmatprep.subr.mxu0 0.0
        %3569 = vmatpush2.xpose.msra.mxu0 0.0
        %3570 = vmatprep.subr.mxu0 0.0
        %3571 = vmatpush2.xpose.msra.mxu0 0.0
        %3572 = vmatprep.subr.mxu0 0.0
        %3573 = vmatpush2.xpose.msra.mxu0 0.0
        %3574 = vmatprep.subr.mxu0 0.0
        %3575 = vmatpush2.xpose.msra.mxu0 0.0
        %3576 = vmatprep.subr.mxu0 0.0
        %3577 = vmatpush2.xpose.msra.mxu0 0.0
        %3578 = vmatprep.subr.mxu0 0.0
        %3579 = vmatpush2.xpose.msra.mxu0 0.0
        %3580 = vmatprep.mubr.f32.mxu0 0.0
        %3581 = vmatmul.mubr.f32.gmra.mxu0 %v3511
        %v3582 = vpop.f32.mrf.mxu0
        %v3583 = vadd.f32 0.0, %v3582
        %v3584 = vpop.f32.mrf.mxu0
        %3585 = vdwg.mxu0
        %v3587 = vsel %vm1630, %v2912, 0
        %v3590 = vsel %vm1630, %v3071, 0
        %3592 = vmatprep.subr.mxu0 0.0
        %3593 = vmatpush1.xpose.msra.mxu0 0.0
        %3594 = vmatprep.subr.mxu0 0.0
        %3595 = vmatpush1.xpose.msra.mxu0 0.0
        %3596 = vmatprep.subr.mxu0 0.0
        %3597 = vmatpush1.xpose.msra.mxu0 0.0
        %3598 = vmatprep.subr.mxu0 0.0
        %3599 = vmatpush1.xpose.msra.mxu0 0.0
        %3600 = vmatprep.subr.mxu0 0.0
        %3601 = vmatpush1.xpose.msra.mxu0 0.0
        %3602 = vmatprep.subr.mxu0 0.0
        %3603 = vmatpush1.xpose.msra.mxu0 0.0
        %3604 = vmatprep.subr.mxu0 0.0
        %3605 = vmatpush1.xpose.msra.mxu0 0.0
        %3606 = vmatprep.subr.mxu0 0.0
        %3607 = vmatpush1.xpose.msra.mxu0 0.0
        %3608 = vmatprep.subr.mxu0 0.0
        %3609 = vmatpush1.xpose.msra.mxu0 0.0
        %3610 = vmatprep.subr.mxu0 0.0
        %3611 = vmatpush1.xpose.msra.mxu0 0.0
        %3612 = vmatprep.subr.mxu0 0.0
        %3613 = vmatpush1.xpose.msra.mxu0 0.0
        %3614 = vmatprep.subr.mxu0 0.0
        %3615 = vmatpush1.xpose.msra.mxu0 0.0
        %3616 = vmatprep.subr.mxu0 0.0
        %3617 = vmatpush1.xpose.msra.mxu0 0.0
        %3618 = vmatprep.subr.mxu0 0.0
        %3619 = vmatpush1.xpose.msra.mxu0 0.0
        %3620 = vmatprep.subr.mxu0 0.0
        %3621 = vmatpush1.xpose.msra.mxu0 0.0
        %3622 = vmatprep.subr.mxu0 0.0
        %3623 = vmatpush1.xpose.msra.mxu0 %v3590
        %3624 = vmatprep.subr.mxu0 0.0
        %3625 = vmatpush2.xpose.msra.mxu0 0.0
        %3626 = vmatprep.subr.mxu0 0.0
        %3627 = vmatpush2.xpose.msra.mxu0 0.0
        %3628 = vmatprep.subr.mxu0 0.0
        %3629 = vmatpush2.xpose.msra.mxu0 0.0
        %3630 = vmatprep.subr.mxu0 0.0
        %3631 = vmatpush2.xpose.msra.mxu0 0.0
        %3632 = vmatprep.subr.mxu0 0.0
        %3633 = vmatpush2.xpose.msra.mxu0 0.0
        %3634 = vmatprep.subr.mxu0 0.0
        %3635 = vmatpush2.xpose.msra.mxu0 0.0
        %3636 = vmatprep.subr.mxu0 0.0
        %3637 = vmatpush2.xpose.msra.mxu0 0.0
        %3638 = vmatprep.subr.mxu0 0.0
        %3639 = vmatpush2.xpose.msra.mxu0 0.0
        %3640 = vmatprep.subr.mxu0 0.0
        %3641 = vmatpush2.xpose.msra.mxu0 0.0
        %3642 = vmatprep.subr.mxu0 0.0
        %3643 = vmatpush2.xpose.msra.mxu0 0.0
        %3644 = vmatprep.subr.mxu0 0.0
        %3645 = vmatpush2.xpose.msra.mxu0 0.0
        %3646 = vmatprep.subr.mxu0 0.0
        %3647 = vmatpush2.xpose.msra.mxu0 0.0
        %3648 = vmatprep.subr.mxu0 0.0
        %3649 = vmatpush2.xpose.msra.mxu0 0.0
        %3650 = vmatprep.subr.mxu0 0.0
        %3651 = vmatpush2.xpose.msra.mxu0 0.0
        %3652 = vmatprep.subr.mxu0 0.0
        %3653 = vmatpush2.xpose.msra.mxu0 0.0
        %3654 = vmatprep.subr.mxu0 0.0
        %3655 = vmatpush2.xpose.msra.mxu0 0.0
        %3656 = vmatprep.mubr.f32.mxu0 0.0
        %3657 = vmatmul.mubr.f32.gmra.mxu0 %v3587
        %v3658 = vpop.f32.mrf.mxu0
        %v3659 = vadd.f32 0.0, %v3658
        %v3660 = vpop.f32.mrf.mxu0
        %3661 = vdwg.mxu0
        %v3663 = vsel %vm1630, %v2913, 0
        %v3666 = vsel %vm1630, %v3141, 0
        %3668 = vmatprep.subr.mxu0 0.0
        %3669 = vmatpush1.xpose.msra.mxu0 0.0
        %3670 = vmatprep.subr.mxu0 0.0
        %3671 = vmatpush1.xpose.msra.mxu0 0.0
        %3672 = vmatprep.subr.mxu0 0.0
        %3673 = vmatpush1.xpose.msra.mxu0 0.0
        %3674 = vmatprep.subr.mxu0 0.0
        %3675 = vmatpush1.xpose.msra.mxu0 0.0
        %3676 = vmatprep.subr.mxu0 0.0
        %3677 = vmatpush1.xpose.msra.mxu0 0.0
        %3678 = vmatprep.subr.mxu0 0.0
        %3679 = vmatpush1.xpose.msra.mxu0 0.0
        %3680 = vmatprep.subr.mxu0 0.0
        %3681 = vmatpush1.xpose.msra.mxu0 0.0
        %3682 = vmatprep.subr.mxu0 0.0
        %3683 = vmatpush1.xpose.msra.mxu0 0.0
        %3684 = vmatprep.subr.mxu0 0.0
        %3685 = vmatpush1.xpose.msra.mxu0 0.0
        %3686 = vmatprep.subr.mxu0 0.0
        %3687 = vmatpush1.xpose.msra.mxu0 0.0
        %3688 = vmatprep.subr.mxu0 0.0
        %3689 = vmatpush1.xpose.msra.mxu0 0.0
        %3690 = vmatprep.subr.mxu0 0.0
        %3691 = vmatpush1.xpose.msra.mxu0 0.0
        %3692 = vmatprep.subr.mxu0 0.0
        %3693 = vmatpush1.xpose.msra.mxu0 0.0
        %3694 = vmatprep.subr.mxu0 0.0
        %3695 = vmatpush1.xpose.msra.mxu0 0.0
        %3696 = vmatprep.subr.mxu0 0.0
        %3697 = vmatpush1.xpose.msra.mxu0 0.0
        %3698 = vmatprep.subr.mxu0 0.0
        %3699 = vmatpush1.xpose.msra.mxu0 %v3666
        %3700 = vmatprep.subr.mxu0 0.0
        %3701 = vmatpush2.xpose.msra.mxu0 0.0
        %3702 = vmatprep.subr.mxu0 0.0
        %3703 = vmatpush2.xpose.msra.mxu0 0.0
        %3704 = vmatprep.subr.mxu0 0.0
        %3705 = vmatpush2.xpose.msra.mxu0 0.0
        %3706 = vmatprep.subr.mxu0 0.0
        %3707 = vmatpush2.xpose.msra.mxu0 0.0
        %3708 = vmatprep.subr.mxu0 0.0
        %3709 = vmatpush2.xpose.msra.mxu0 0.0
        %3710 = vmatprep.subr.mxu0 0.0
        %3711 = vmatpush2.xpose.msra.mxu0 0.0
        %3712 = vmatprep.subr.mxu0 0.0
        %3713 = vmatpush2.xpose.msra.mxu0 0.0
        %3714 = vmatprep.subr.mxu0 0.0
        %3715 = vmatpush2.xpose.msra.mxu0 0.0
        %3716 = vmatprep.subr.mxu0 0.0
        %3717 = vmatpush2.xpose.msra.mxu0 0.0
        %3718 = vmatprep.subr.mxu0 0.0
        %3719 = vmatpush2.xpose.msra.mxu0 0.0
        %3720 = vmatprep.subr.mxu0 0.0
        %3721 = vmatpush2.xpose.msra.mxu0 0.0
        %3722 = vmatprep.subr.mxu0 0.0
        %3723 = vmatpush2.xpose.msra.mxu0 0.0
        %3724 = vmatprep.subr.mxu0 0.0
        %3725 = vmatpush2.xpose.msra.mxu0 0.0
        %3726 = vmatprep.subr.mxu0 0.0
        %3727 = vmatpush2.xpose.msra.mxu0 0.0
        %3728 = vmatprep.subr.mxu0 0.0
        %3729 = vmatpush2.xpose.msra.mxu0 0.0
        %3730 = vmatprep.subr.mxu0 0.0
        %3731 = vmatpush2.xpose.msra.mxu0 0.0
        %3732 = vmatprep.mubr.f32.mxu0 0.0
        %3733 = vmatmul.mubr.f32.gmra.mxu0 %v3663
        %v3734 = vpop.f32.mrf.mxu0
        %v3735 = vadd.f32 0.0, %v3734
        %v3736 = vpop.f32.mrf.mxu0
        %3737 = vdwg.mxu0
        %v3739 = vsel %vm1630, %v2914, 0
        %v3742 = vsel %vm1630, %v3211, 0
        %3744 = vmatprep.subr.mxu0 0.0
        %3745 = vmatpush1.xpose.msra.mxu0 0.0
        %3746 = vmatprep.subr.mxu0 0.0
        %3747 = vmatpush1.xpose.msra.mxu0 0.0
        %3748 = vmatprep.subr.mxu0 0.0
        %3749 = vmatpush1.xpose.msra.mxu0 0.0
        %3750 = vmatprep.subr.mxu0 0.0
        %3751 = vmatpush1.xpose.msra.mxu0 0.0
        %3752 = vmatprep.subr.mxu0 0.0
        %3753 = vmatpush1.xpose.msra.mxu0 0.0
        %3754 = vmatprep.subr.mxu0 0.0
        %3755 = vmatpush1.xpose.msra.mxu0 0.0
        %3756 = vmatprep.subr.mxu0 0.0
        %3757 = vmatpush1.xpose.msra.mxu0 0.0
        %3758 = vmatprep.subr.mxu0 0.0
        %3759 = vmatpush1.xpose.msra.mxu0 0.0
        %3760 = vmatprep.subr.mxu0 0.0
        %3761 = vmatpush1.xpose.msra.mxu0 0.0
        %3762 = vmatprep.subr.mxu0 0.0
        %3763 = vmatpush1.xpose.msra.mxu0 0.0
        %3764 = vmatprep.subr.mxu0 0.0
        %3765 = vmatpush1.xpose.msra.mxu0 0.0
        %3766 = vmatprep.subr.mxu0 0.0
        %3767 = vmatpush1.xpose.msra.mxu0 0.0
        %3768 = vmatprep.subr.mxu0 0.0
        %3769 = vmatpush1.xpose.msra.mxu0 0.0
        %3770 = vmatprep.subr.mxu0 0.0
        %3771 = vmatpush1.xpose.msra.mxu0 0.0
        %3772 = vmatprep.subr.mxu0 0.0
        %3773 = vmatpush1.xpose.msra.mxu0 0.0
        %3774 = vmatprep.subr.mxu0 0.0
        %3775 = vmatpush1.xpose.msra.mxu0 %v3742
        %3776 = vmatprep.subr.mxu0 0.0
        %3777 = vmatpush2.xpose.msra.mxu0 0.0
        %3778 = vmatprep.subr.mxu0 0.0
        %3779 = vmatpush2.xpose.msra.mxu0 0.0
        %3780 = vmatprep.subr.mxu0 0.0
        %3781 = vmatpush2.xpose.msra.mxu0 0.0
        %3782 = vmatprep.subr.mxu0 0.0
        %3783 = vmatpush2.xpose.msra.mxu0 0.0
        %3784 = vmatprep.subr.mxu0 0.0
        %3785 = vmatpush2.xpose.msra.mxu0 0.0
        %3786 = vmatprep.subr.mxu0 0.0
        %3787 = vmatpush2.xpose.msra.mxu0 0.0
        %3788 = vmatprep.subr.mxu0 0.0
        %3789 = vmatpush2.xpose.msra.mxu0 0.0
        %3790 = vmatprep.subr.mxu0 0.0
        %3791 = vmatpush2.xpose.msra.mxu0 0.0
        %3792 = vmatprep.subr.mxu0 0.0
        %3793 = vmatpush2.xpose.msra.mxu0 0.0
        %3794 = vmatprep.subr.mxu0 0.0
        %3795 = vmatpush2.xpose.msra.mxu0 0.0
        %3796 = vmatprep.subr.mxu0 0.0
        %3797 = vmatpush2.xpose.msra.mxu0 0.0
        %3798 = vmatprep.subr.mxu0 0.0
        %3799 = vmatpush2.xpose.msra.mxu0 0.0
        %3800 = vmatprep.subr.mxu0 0.0
        %3801 = vmatpush2.xpose.msra.mxu0 0.0
        %3802 = vmatprep.subr.mxu0 0.0
        %3803 = vmatpush2.xpose.msra.mxu0 0.0
        %3804 = vmatprep.subr.mxu0 0.0
        %3805 = vmatpush2.xpose.msra.mxu0 0.0
        %3806 = vmatprep.subr.mxu0 0.0
        %3807 = vmatpush2.xpose.msra.mxu0 0.0
        %3808 = vmatprep.mubr.f32.mxu0 0.0
        %3809 = vmatmul.mubr.f32.gmra.mxu0 %v3739
        %v3810 = vpop.f32.mrf.mxu0
        %v3811 = vadd.f32 0.0, %v3810
        %v3812 = vpop.f32.mrf.mxu0
        %3813 = vdwg.mxu0
        %v3814 = vsel %vm2611, 1, 0
        %vm3815 = vcmp.eq.s32.totalorder %v3814, 1
        %v3816 = vsel %vm3815, -1e+09, %v3583
        %v3817 = vsel %vm3815, -1e+09, %v3659
        %v3818 = vsel %vm3815, -1e+09, %v3735
        %v3819 = vsel %vm3815, -1e+09, %v3811
        %v3820 = vsel %vm1630, %v3816, -inf
        %3821 = vmax.xlane.f32.xlu0 %v3820
        %v3822 = vpop.xlane.xlu0 %3821
        %v3823 = vsel %vm1630, %v3817, -inf
        %3824 = vmax.xlane.f32.xlu0 %v3823
        %v3825 = vpop.xlane.xlu0 %3824
        %v3826 = vsel %vm1630, %v3818, -inf
        %3827 = vmax.xlane.f32.xlu0 %v3826
        %v3828 = vpop.xlane.xlu0 %3827
        %v3829 = vsel %vm1630, %v3819, -inf
        %3830 = vmax.xlane.f32.xlu0 %v3829
        %v3831 = vpop.xlane.xlu0 %3830
        %v3832 = vsub.f32 %v3816, %v3822
        %v3833 = vsub.f32 %v3817, %v3825
        %v3834 = vsub.f32 %v3818, %v3828
        %v3835 = vsub.f32 %v3819, %v3831
        %v3836 = vmul.f32 %v3832, 1.442695
        %v3837 = vpow.pop %v3836
        %v3838 = vmul.f32 %v3833, 1.442695
        %v3839 = vpow.pop %v3838
        %v3840 = vmul.f32 %v3834, 1.442695
        %v3841 = vpow.pop %v3840
        %v3842 = vmul.f32 %v3835, 1.442695
        %v3843 = vpow.pop %v3842
        %v3844 = vsel %vm1630, %v3837, 0.0
        %3845 = vadd.xlane.f32.xlu0 %v3844
        %v3846 = vpop.xlane.xlu0 %3845
        %v3847 = vsel %vm1630, %v3839, 0.0
        %3848 = vadd.xlane.f32.xlu0 %v3847
        %v3849 = vpop.xlane.xlu0 %3848
        %v3850 = vsel %vm1630, %v3841, 0.0
        %3851 = vadd.xlane.f32.xlu0 %v3850
        %v3852 = vpop.xlane.xlu0 %3851
        %v3853 = vsel %vm1630, %v3843, 0.0
        %3854 = vadd.xlane.f32.xlu0 %v3853
        %v3855 = vpop.xlane.xlu0 %3854
        %v3856 = vrcp.pop %v3846
        %v3857 = vrcp.pop %v3849
        %v3858 = vrcp.pop %v3852
        %v3859 = vrcp.pop %v3855
        %v3860 = vmul.f32 %v3837, %v3856
        %v3861 = vmul.f32 %v3839, %v3857
        %v3862 = vmul.f32 %v3841, %v3858
        %v3863 = vmul.f32 %v3843, %v3859
        %v3865 = vsel %vm1630, %v3860, 0
        %3867 = vmatprep.subr.mxu0 0.0
        %3868 = vmatpush1.msra.mxu0 0.0
        %3869 = vmatprep.subr.mxu0 0.0
        %3870 = vmatpush1.msra.mxu0 0.0
        %3871 = vmatprep.subr.mxu0 0.0
        %3872 = vmatpush1.msra.mxu0 0.0
        %3873 = vmatprep.subr.mxu0 0.0
        %3874 = vmatpush1.msra.mxu0 0.0
        %3875 = vmatprep.subr.mxu0 0.0
        %3876 = vmatpush1.msra.mxu0 0.0
        %3877 = vmatprep.subr.mxu0 0.0
        %3878 = vmatpush1.msra.mxu0 0.0
        %3879 = vmatprep.subr.mxu0 0.0
        %3880 = vmatpush1.msra.mxu0 0.0
        %3881 = vmatprep.subr.mxu0 0.0
        %3882 = vmatpush1.msra.mxu0 0.0
        %3883 = vmatprep.subr.mxu0 0.0
        %3884 = vmatpush1.msra.mxu0 0.0
        %3885 = vmatprep.subr.mxu0 0.0
        %3886 = vmatpush1.msra.mxu0 0.0
        %3887 = vmatprep.subr.mxu0 0.0
        %3888 = vmatpush1.msra.mxu0 0.0
        %3889 = vmatprep.subr.mxu0 0.0
        %3890 = vmatpush1.msra.mxu0 0.0
        %3891 = vmatprep.subr.mxu0 0.0
        %3892 = vmatpush1.msra.mxu0 0.0
        %3893 = vmatprep.subr.mxu0 0.0
        %3894 = vmatpush1.msra.mxu0 0.0
        %3895 = vmatprep.subr.mxu0 0.0
        %3896 = vmatpush1.msra.mxu0 0.0
        %3897 = vmatprep.subr.mxu0 0.0
        %3898 = vmatpush1.msra.mxu0 %v3297
        %3899 = vmatprep.subr.mxu0 0.0
        %3900 = vmatpush2.msra.mxu0 0.0
        %3901 = vmatprep.subr.mxu0 0.0
        %3902 = vmatpush2.msra.mxu0 0.0
        %3903 = vmatprep.subr.mxu0 0.0
        %3904 = vmatpush2.msra.mxu0 0.0
        %3905 = vmatprep.subr.mxu0 0.0
        %3906 = vmatpush2.msra.mxu0 0.0
        %3907 = vmatprep.subr.mxu0 0.0
        %3908 = vmatpush2.msra.mxu0 0.0
        %3909 = vmatprep.subr.mxu0 0.0
        %3910 = vmatpush2.msra.mxu0 0.0
        %3911 = vmatprep.subr.mxu0 0.0
        %3912 = vmatpush2.msra.mxu0 0.0
        %3913 = vmatprep.subr.mxu0 0.0
        %3914 = vmatpush2.msra.mxu0 0.0
        %3915 = vmatprep.subr.mxu0 0.0
        %3916 = vmatpush2.msra.mxu0 0.0
        %3917 = vmatprep.subr.mxu0 0.0
        %3918 = vmatpush2.msra.mxu0 0.0
        %3919 = vmatprep.subr.mxu0 0.0
        %3920 = vmatpush2.msra.mxu0 0.0
        %3921 = vmatprep.subr.mxu0 0.0
        %3922 = vmatpush2.msra.mxu0 0.0
        %3923 = vmatprep.subr.mxu0 0.0
        %3924 = vmatpush2.msra.mxu0 0.0
        %3925 = vmatprep.subr.mxu0 0.0
        %3926 = vmatpush2.msra.mxu0 0.0
        %3927 = vmatprep.subr.mxu0 0.0
        %3928 = vmatpush2.msra.mxu0 0.0
        %3929 = vmatprep.subr.mxu0 0.0
        %3930 = vmatpush2.msra.mxu0 0.0
        %3931 = vmatprep.mubr.f32.mxu0 0.0
        %3932 = vmatmul.mubr.f32.gmra.mxu0 %v3865
        %v3933 = vpop.f32.mrf.mxu0
        %v3934 = vadd.f32 0.0, %v3933
        %v3935 = vpop.f32.mrf.mxu0
        %3936 = vdwg.mxu0
        %v3938 = vsel %vm1630, %v3861, 0
        %3940 = vmatprep.subr.mxu0 0.0
        %3941 = vmatpush1.msra.mxu0 0.0
        %3942 = vmatprep.subr.mxu0 0.0
        %3943 = vmatpush1.msra.mxu0 0.0
        %3944 = vmatprep.subr.mxu0 0.0
        %3945 = vmatpush1.msra.mxu0 0.0
        %3946 = vmatprep.subr.mxu0 0.0
        %3947 = vmatpush1.msra.mxu0 0.0
        %3948 = vmatprep.subr.mxu0 0.0
        %3949 = vmatpush1.msra.mxu0 0.0
        %3950 = vmatprep.subr.mxu0 0.0
        %3951 = vmatpush1.msra.mxu0 0.0
        %3952 = vmatprep.subr.mxu0 0.0
        %3953 = vmatpush1.msra.mxu0 0.0
        %3954 = vmatprep.subr.mxu0 0.0
        %3955 = vmatpush1.msra.mxu0 0.0
        %3956 = vmatprep.subr.mxu0 0.0
        %3957 = vmatpush1.msra.mxu0 0.0
        %3958 = vmatprep.subr.mxu0 0.0
        %3959 = vmatpush1.msra.mxu0 0.0
        %3960 = vmatprep.subr.mxu0 0.0
        %3961 = vmatpush1.msra.mxu0 0.0
        %3962 = vmatprep.subr.mxu0 0.0
        %3963 = vmatpush1.msra.mxu0 0.0
        %3964 = vmatprep.subr.mxu0 0.0
        %3965 = vmatpush1.msra.mxu0 0.0
        %3966 = vmatprep.subr.mxu0 0.0
        %3967 = vmatpush1.msra.mxu0 0.0
        %3968 = vmatprep.subr.mxu0 0.0
        %3969 = vmatpush1.msra.mxu0 0.0
        %3970 = vmatprep.subr.mxu0 0.0
        %3971 = vmatpush1.msra.mxu0 %v3367
        %3972 = vmatprep.subr.mxu0 0.0
        %3973 = vmatpush2.msra.mxu0 0.0
        %3974 = vmatprep.subr.mxu0 0.0
        %3975 = vmatpush2.msra.mxu0 0.0
        %3976 = vmatprep.subr.mxu0 0.0
        %3977 = vmatpush2.msra.mxu0 0.0
        %3978 = vmatprep.subr.mxu0 0.0
        %3979 = vmatpush2.msra.mxu0 0.0
        %3980 = vmatprep.subr.mxu0 0.0
        %3981 = vmatpush2.msra.mxu0 0.0
        %3982 = vmatprep.subr.mxu0 0.0
        %3983 = vmatpush2.msra.mxu0 0.0
        %3984 = vmatprep.subr.mxu0 0.0
        %3985 = vmatpush2.msra.mxu0 0.0
        %3986 = vmatprep.subr.mxu0 0.0
        %3987 = vmatpush2.msra.mxu0 0.0
        %3988 = vmatprep.subr.mxu0 0.0
        %3989 = vmatpush2.msra.mxu0 0.0
        %3990 = vmatprep.subr.mxu0 0.0
        %3991 = vmatpush2.msra.mxu0 0.0
        %3992 = vmatprep.subr.mxu0 0.0
        %3993 = vmatpush2.msra.mxu0 0.0
        %3994 = vmatprep.subr.mxu0 0.0
        %3995 = vmatpush2.msra.mxu0 0.0
        %3996 = vmatprep.subr.mxu0 0.0
        %3997 = vmatpush2.msra.mxu0 0.0
        %3998 = vmatprep.subr.mxu0 0.0
        %3999 = vmatpush2.msra.mxu0 0.0
        %4000 = vmatprep.subr.mxu0 0.0
        %4001 = vmatpush2.msra.mxu0 0.0
        %4002 = vmatprep.subr.mxu0 0.0
        %4003 = vmatpush2.msra.mxu0 0.0
        %4004 = vmatprep.mubr.f32.mxu0 0.0
        %4005 = vmatmul.mubr.f32.gmra.mxu0 %v3938
        %v4006 = vpop.f32.mrf.mxu0
        %v4007 = vadd.f32 0.0, %v4006
        %v4008 = vpop.f32.mrf.mxu0
        %4009 = vdwg.mxu0
        %v4011 = vsel %vm1630, %v3862, 0
        %4013 = vmatprep.subr.mxu0 0.0
        %4014 = vmatpush1.msra.mxu0 0.0
        %4015 = vmatprep.subr.mxu0 0.0
        %4016 = vmatpush1.msra.mxu0 0.0
        %4017 = vmatprep.subr.mxu0 0.0
        %4018 = vmatpush1.msra.mxu0 0.0
        %4019 = vmatprep.subr.mxu0 0.0
        %4020 = vmatpush1.msra.mxu0 0.0
        %4021 = vmatprep.subr.mxu0 0.0
        %4022 = vmatpush1.msra.mxu0 0.0
        %4023 = vmatprep.subr.mxu0 0.0
        %4024 = vmatpush1.msra.mxu0 0.0
        %4025 = vmatprep.subr.mxu0 0.0
        %4026 = vmatpush1.msra.mxu0 0.0
        %4027 = vmatprep.subr.mxu0 0.0
        %4028 = vmatpush1.msra.mxu0 0.0
        %4029 = vmatprep.subr.mxu0 0.0
        %4030 = vmatpush1.msra.mxu0 0.0
        %4031 = vmatprep.subr.mxu0 0.0
        %4032 = vmatpush1.msra.mxu0 0.0
        %4033 = vmatprep.subr.mxu0 0.0
        %4034 = vmatpush1.msra.mxu0 0.0
        %4035 = vmatprep.subr.mxu0 0.0
        %4036 = vmatpush1.msra.mxu0 0.0
        %4037 = vmatprep.subr.mxu0 0.0
        %4038 = vmatpush1.msra.mxu0 0.0
        %4039 = vmatprep.subr.mxu0 0.0
        %4040 = vmatpush1.msra.mxu0 0.0
        %4041 = vmatprep.subr.mxu0 0.0
        %4042 = vmatpush1.msra.mxu0 0.0
        %4043 = vmatprep.subr.mxu0 0.0
        %4044 = vmatpush1.msra.mxu0 %v3437
        %4045 = vmatprep.subr.mxu0 0.0
        %4046 = vmatpush2.msra.mxu0 0.0
        %4047 = vmatprep.subr.mxu0 0.0
        %4048 = vmatpush2.msra.mxu0 0.0
        %4049 = vmatprep.subr.mxu0 0.0
        %4050 = vmatpush2.msra.mxu0 0.0
        %4051 = vmatprep.subr.mxu0 0.0
        %4052 = vmatpush2.msra.mxu0 0.0
        %4053 = vmatprep.subr.mxu0 0.0
        %4054 = vmatpush2.msra.mxu0 0.0
        %4055 = vmatprep.subr.mxu0 0.0
        %4056 = vmatpush2.msra.mxu0 0.0
        %4057 = vmatprep.subr.mxu0 0.0
        %4058 = vmatpush2.msra.mxu0 0.0
        %4059 = vmatprep.subr.mxu0 0.0
        %4060 = vmatpush2.msra.mxu0 0.0
        %4061 = vmatprep.subr.mxu0 0.0
        %4062 = vmatpush2.msra.mxu0 0.0
        %4063 = vmatprep.subr.mxu0 0.0
        %4064 = vmatpush2.msra.mxu0 0.0
        %4065 = vmatprep.subr.mxu0 0.0
        %4066 = vmatpush2.msra.mxu0 0.0
        %4067 = vmatprep.subr.mxu0 0.0
        %4068 = vmatpush2.msra.mxu0 0.0
        %4069 = vmatprep.subr.mxu0 0.0
        %4070 = vmatpush2.msra.mxu0 0.0
        %4071 = vmatprep.subr.mxu0 0.0
        %4072 = vmatpush2.msra.mxu0 0.0
        %4073 = vmatprep.subr.mxu0 0.0
        %4074 = vmatpush2.msra.mxu0 0.0
        %4075 = vmatprep.subr.mxu0 0.0
        %4076 = vmatpush2.msra.mxu0 0.0
        %4077 = vmatprep.mubr.f32.mxu0 0.0
        %4078 = vmatmul.mubr.f32.gmra.mxu0 %v4011
        %v4079 = vpop.f32.mrf.mxu0
        %v4080 = vadd.f32 0.0, %v4079
        %v4081 = vpop.f32.mrf.mxu0
        %4082 = vdwg.mxu0
        %v4084 = vsel %vm1630, %v3863, 0
        %4086 = vmatprep.subr.mxu0 0.0
        %4087 = vmatpush1.msra.mxu0 0.0
        %4088 = vmatprep.subr.mxu0 0.0
        %4089 = vmatpush1.msra.mxu0 0.0
        %4090 = vmatprep.subr.mxu0 0.0
        %4091 = vmatpush1.msra.mxu0 0.0
        %4092 = vmatprep.subr.mxu0 0.0
        %4093 = vmatpush1.msra.mxu0 0.0
        %4094 = vmatprep.subr.mxu0 0.0
        %4095 = vmatpush1.msra.mxu0 0.0
        %4096 = vmatprep.subr.mxu0 0.0
        %4097 = vmatpush1.msra.mxu0 0.0
        %4098 = vmatprep.subr.mxu0 0.0
        %4099 = vmatpush1.msra.mxu0 0.0
        %4100 = vmatprep.subr.mxu0 0.0
        %4101 = vmatpush1.msra.mxu0 0.0
        %4102 = vmatprep.subr.mxu0 0.0
        %4103 = vmatpush1.msra.mxu0 0.0
        %4104 = vmatprep.subr.mxu0 0.0
        %4105 = vmatpush1.msra.mxu0 0.0
        %4106 = vmatprep.subr.mxu0 0.0
        %4107 = vmatpush1.msra.mxu0 0.0
        %4108 = vmatprep.subr.mxu0 0.0
        %4109 = vmatpush1.msra.mxu0 0.0
        %4110 = vmatprep.subr.mxu0 0.0
        %4111 = vmatpush1.msra.mxu0 0.0
        %4112 = vmatprep.subr.mxu0 0.0
        %4113 = vmatpush1.msra.mxu0 0.0
        %4114 = vmatprep.subr.mxu0 0.0
        %4115 = vmatpush1.msra.mxu0 0.0
        %4116 = vmatprep.subr.mxu0 0.0
        %4117 = vmatpush1.msra.mxu0 %v3507
        %4118 = vmatprep.subr.mxu0 0.0
        %4119 = vmatpush2.msra.mxu0 0.0
        %4120 = vmatprep.subr.mxu0 0.0
        %4121 = vmatpush2.msra.mxu0 0.0
        %4122 = vmatprep.subr.mxu0 0.0
        %4123 = vmatpush2.msra.mxu0 0.0
        %4124 = vmatprep.subr.mxu0 0.0
        %4125 = vmatpush2.msra.mxu0 0.0
        %4126 = vmatprep.subr.mxu0 0.0
        %4127 = vmatpush2.msra.mxu0 0.0
        %4128 = vmatprep.subr.mxu0 0.0
        %4129 = vmatpush2.msra.mxu0 0.0
        %4130 = vmatprep.subr.mxu0 0.0
        %4131 = vmatpush2.msra.mxu0 0.0
        %4132 = vmatprep.subr.mxu0 0.0
        %4133 = vmatpush2.msra.mxu0 0.0
        %4134 = vmatprep.subr.mxu0 0.0
        %4135 = vmatpush2.msra.mxu0 0.0
        %4136 = vmatprep.subr.mxu0 0.0
        %4137 = vmatpush2.msra.mxu0 0.0
        %4138 = vmatprep.subr.mxu0 0.0
        %4139 = vmatpush2.msra.mxu0 0.0
        %4140 = vmatprep.subr.mxu0 0.0
        %4141 = vmatpush2.msra.mxu0 0.0
        %4142 = vmatprep.subr.mxu0 0.0
        %4143 = vmatpush2.msra.mxu0 0.0
        %4144 = vmatprep.subr.mxu0 0.0
        %4145 = vmatpush2.msra.mxu0 0.0
        %4146 = vmatprep.subr.mxu0 0.0
        %4147 = vmatpush2.msra.mxu0 0.0
        %4148 = vmatprep.subr.mxu0 0.0
        %4149 = vmatpush2.msra.mxu0 0.0
        %4150 = vmatprep.mubr.f32.mxu0 0.0
        %4151 = vmatmul.mubr.f32.gmra.mxu0 %v4084
        %v4152 = vpop.f32.mrf.mxu0
        %v4153 = vadd.f32 0.0, %v4152
        %v4154 = vpop.f32.mrf.mxu0
        %4155 = vdwg.mxu0
        %v4156 = vld [vmem:[%s13] sm:$0xff]
        %v4157 = vld [vmem:[%s13 + $0x8] sm:$0xff]
        %v4158 = vld [vmem:[%s13 + $0x10] sm:$0xff]
        %v4159 = vld [vmem:[%s13 + $0x18] sm:$0xff]
        %v4161 = vsel %vm1630, %v3934, 0
        %4163 = vmatprep.subr.mxu0 0.0
        %4164 = vmatpush1.msra.mxu0 0.0
        %4165 = vmatprep.subr.mxu0 0.0
        %4166 = vmatpush1.msra.mxu0 0.0
        %4167 = vmatprep.subr.mxu0 0.0
        %4168 = vmatpush1.msra.mxu0 0.0
        %4169 = vmatprep.subr.mxu0 0.0
        %4170 = vmatpush1.msra.mxu0 0.0
        %4171 = vmatprep.subr.mxu0 0.0
        %4172 = vmatpush1.msra.mxu0 0.0
        %4173 = vmatprep.subr.mxu0 0.0
        %4174 = vmatpush1.msra.mxu0 0.0
        %4175 = vmatprep.subr.mxu0 0.0
        %4176 = vmatpush1.msra.mxu0 0.0
        %4177 = vmatprep.subr.mxu0 0.0
        %4178 = vmatpush1.msra.mxu0 0.0
        %4179 = vmatprep.subr.mxu0 0.0
        %4180 = vmatpush1.msra.mxu0 0.0
        %4181 = vmatprep.subr.mxu0 0.0
        %4182 = vmatpush1.msra.mxu0 0.0
        %4183 = vmatprep.subr.mxu0 0.0
        %4184 = vmatpush1.msra.mxu0 0.0
        %4185 = vmatprep.subr.mxu0 0.0
        %4186 = vmatpush1.msra.mxu0 0.0
        %4187 = vmatprep.subr.mxu0 0.0
        %4188 = vmatpush1.msra.mxu0 0.0
        %4189 = vmatprep.subr.mxu0 0.0
        %4190 = vmatpush1.msra.mxu0 0.0
        %4191 = vmatprep.subr.mxu0 0.0
        %4192 = vmatpush1.msra.mxu0 0.0
        %4193 = vmatprep.subr.mxu0 0.0
        %4194 = vmatpush1.msra.mxu0 %v4156
        %4195 = vmatprep.subr.mxu0 0.0
        %4196 = vmatpush2.msra.mxu0 0.0
        %4197 = vmatprep.subr.mxu0 0.0
        %4198 = vmatpush2.msra.mxu0 0.0
        %4199 = vmatprep.subr.mxu0 0.0
        %4200 = vmatpush2.msra.mxu0 0.0
        %4201 = vmatprep.subr.mxu0 0.0
        %4202 = vmatpush2.msra.mxu0 0.0
        %4203 = vmatprep.subr.mxu0 0.0
        %4204 = vmatpush2.msra.mxu0 0.0
        %4205 = vmatprep.subr.mxu0 0.0
        %4206 = vmatpush2.msra.mxu0 0.0
        %4207 = vmatprep.subr.mxu0 0.0
        %4208 = vmatpush2.msra.mxu0 0.0
        %4209 = vmatprep.subr.mxu0 0.0
        %4210 = vmatpush2.msra.mxu0 0.0
        %4211 = vmatprep.subr.mxu0 0.0
        %4212 = vmatpush2.msra.mxu0 0.0
        %4213 = vmatprep.subr.mxu0 0.0
        %4214 = vmatpush2.msra.mxu0 0.0
        %4215 = vmatprep.subr.mxu0 0.0
        %4216 = vmatpush2.msra.mxu0 0.0
        %4217 = vmatprep.subr.mxu0 0.0
        %4218 = vmatpush2.msra.mxu0 0.0
        %4219 = vmatprep.subr.mxu0 0.0
        %4220 = vmatpush2.msra.mxu0 0.0
        %4221 = vmatprep.subr.mxu0 0.0
        %4222 = vmatpush2.msra.mxu0 0.0
        %4223 = vmatprep.subr.mxu0 0.0
        %4224 = vmatpush2.msra.mxu0 0.0
        %4225 = vmatprep.subr.mxu0 0.0
        %4226 = vmatpush2.msra.mxu0 0.0
        %4227 = vmatprep.mubr.f32.mxu0 0.0
        %4228 = vmatmul.mubr.f32.gmra.mxu0 %v4161
        %v4229 = vpop.f32.mrf.mxu0
        %v4230 = vadd.f32 0.0, %v4229
        %v4231 = vpop.f32.mrf.mxu0
        %4232 = vdwg.mxu0
        %v4234 = vsel %vm1630, %v4007, 0
        %4236 = vmatprep.subr.mxu0 0.0
        %4237 = vmatpush1.msra.mxu0 0.0
        %4238 = vmatprep.subr.mxu0 0.0
        %4239 = vmatpush1.msra.mxu0 0.0
        %4240 = vmatprep.subr.mxu0 0.0
        %4241 = vmatpush1.msra.mxu0 0.0
        %4242 = vmatprep.subr.mxu0 0.0
        %4243 = vmatpush1.msra.mxu0 0.0
        %4244 = vmatprep.subr.mxu0 0.0
        %4245 = vmatpush1.msra.mxu0 0.0
        %4246 = vmatprep.subr.mxu0 0.0
        %4247 = vmatpush1.msra.mxu0 0.0
        %4248 = vmatprep.subr.mxu0 0.0
        %4249 = vmatpush1.msra.mxu0 0.0
        %4250 = vmatprep.subr.mxu0 0.0
        %4251 = vmatpush1.msra.mxu0 0.0
        %4252 = vmatprep.subr.mxu0 0.0
        %4253 = vmatpush1.msra.mxu0 0.0
        %4254 = vmatprep.subr.mxu0 0.0
        %4255 = vmatpush1.msra.mxu0 0.0
        %4256 = vmatprep.subr.mxu0 0.0
        %4257 = vmatpush1.msra.mxu0 0.0
        %4258 = vmatprep.subr.mxu0 0.0
        %4259 = vmatpush1.msra.mxu0 0.0
        %4260 = vmatprep.subr.mxu0 0.0
        %4261 = vmatpush1.msra.mxu0 0.0
        %4262 = vmatprep.subr.mxu0 0.0
        %4263 = vmatpush1.msra.mxu0 0.0
        %4264 = vmatprep.subr.mxu0 0.0
        %4265 = vmatpush1.msra.mxu0 0.0
        %4266 = vmatprep.subr.mxu0 0.0
        %4267 = vmatpush1.msra.mxu0 %v4157
        %4268 = vmatprep.subr.mxu0 0.0
        %4269 = vmatpush2.msra.mxu0 0.0
        %4270 = vmatprep.subr.mxu0 0.0
        %4271 = vmatpush2.msra.mxu0 0.0
        %4272 = vmatprep.subr.mxu0 0.0
        %4273 = vmatpush2.msra.mxu0 0.0
        %4274 = vmatprep.subr.mxu0 0.0
        %4275 = vmatpush2.msra.mxu0 0.0
        %4276 = vmatprep.subr.mxu0 0.0
        %4277 = vmatpush2.msra.mxu0 0.0
        %4278 = vmatprep.subr.mxu0 0.0
        %4279 = vmatpush2.msra.mxu0 0.0
        %4280 = vmatprep.subr.mxu0 0.0
        %4281 = vmatpush2.msra.mxu0 0.0
        %4282 = vmatprep.subr.mxu0 0.0
        %4283 = vmatpush2.msra.mxu0 0.0
        %4284 = vmatprep.subr.mxu0 0.0
        %4285 = vmatpush2.msra.mxu0 0.0
        %4286 = vmatprep.subr.mxu0 0.0
        %4287 = vmatpush2.msra.mxu0 0.0
        %4288 = vmatprep.subr.mxu0 0.0
        %4289 = vmatpush2.msra.mxu0 0.0
        %4290 = vmatprep.subr.mxu0 0.0
        %4291 = vmatpush2.msra.mxu0 0.0
        %4292 = vmatprep.subr.mxu0 0.0
        %4293 = vmatpush2.msra.mxu0 0.0
        %4294 = vmatprep.subr.mxu0 0.0
        %4295 = vmatpush2.msra.mxu0 0.0
        %4296 = vmatprep.subr.mxu0 0.0
        %4297 = vmatpush2.msra.mxu0 0.0
        %4298 = vmatprep.subr.mxu0 0.0
        %4299 = vmatpush2.msra.mxu0 0.0
        %4300 = vmatprep.mubr.f32.mxu0 0.0
        %4301 = vmatmul.mubr.f32.gmra.mxu0 %v4234
        %v4302 = vpop.f32.mrf.mxu0
        %v4303 = vadd.f32 0.0, %v4302
        %v4304 = vpop.f32.mrf.mxu0
        %4305 = vdwg.mxu0
        %v4307 = vsel %vm1630, %v4080, 0
        %4309 = vmatprep.subr.mxu0 0.0
        %4310 = vmatpush1.msra.mxu0 0.0
        %4311 = vmatprep.subr.mxu0 0.0
        %4312 = vmatpush1.msra.mxu0 0.0
        %4313 = vmatprep.subr.mxu0 0.0
        %4314 = vmatpush1.msra.mxu0 0.0
        %4315 = vmatprep.subr.mxu0 0.0
        %4316 = vmatpush1.msra.mxu0 0.0
        %4317 = vmatprep.subr.mxu0 0.0
        %4318 = vmatpush1.msra.mxu0 0.0
        %4319 = vmatprep.subr.mxu0 0.0
        %4320 = vmatpush1.msra.mxu0 0.0
        %4321 = vmatprep.subr.mxu0 0.0
        %4322 = vmatpush1.msra.mxu0 0.0
        %4323 = vmatprep.subr.mxu0 0.0
        %4324 = vmatpush1.msra.mxu0 0.0
        %4325 = vmatprep.subr.mxu0 0.0
        %4326 = vmatpush1.msra.mxu0 0.0
        %4327 = vmatprep.subr.mxu0 0.0
        %4328 = vmatpush1.msra.mxu0 0.0
        %4329 = vmatprep.subr.mxu0 0.0
        %4330 = vmatpush1.msra.mxu0 0.0
        %4331 = vmatprep.subr.mxu0 0.0
        %4332 = vmatpush1.msra.mxu0 0.0
        %4333 = vmatprep.subr.mxu0 0.0
        %4334 = vmatpush1.msra.mxu0 0.0
        %4335 = vmatprep.subr.mxu0 0.0
        %4336 = vmatpush1.msra.mxu0 0.0
        %4337 = vmatprep.subr.mxu0 0.0
        %4338 = vmatpush1.msra.mxu0 0.0
        %4339 = vmatprep.subr.mxu0 0.0
        %4340 = vmatpush1.msra.mxu0 %v4158
        %4341 = vmatprep.subr.mxu0 0.0
        %4342 = vmatpush2.msra.mxu0 0.0
        %4343 = vmatprep.subr.mxu0 0.0
        %4344 = vmatpush2.msra.mxu0 0.0
        %4345 = vmatprep.subr.mxu0 0.0
        %4346 = vmatpush2.msra.mxu0 0.0
        %4347 = vmatprep.subr.mxu0 0.0
        %4348 = vmatpush2.msra.mxu0 0.0
        %4349 = vmatprep.subr.mxu0 0.0
        %4350 = vmatpush2.msra.mxu0 0.0
        %4351 = vmatprep.subr.mxu0 0.0
        %4352 = vmatpush2.msra.mxu0 0.0
        %4353 = vmatprep.subr.mxu0 0.0
        %4354 = vmatpush2.msra.mxu0 0.0
        %4355 = vmatprep.subr.mxu0 0.0
        %4356 = vmatpush2.msra.mxu0 0.0
        %4357 = vmatprep.subr.mxu0 0.0
        %4358 = vmatpush2.msra.mxu0 0.0
        %4359 = vmatprep.subr.mxu0 0.0
        %4360 = vmatpush2.msra.mxu0 0.0
        %4361 = vmatprep.subr.mxu0 0.0
        %4362 = vmatpush2.msra.mxu0 0.0
        %4363 = vmatprep.subr.mxu0 0.0
        %4364 = vmatpush2.msra.mxu0 0.0
        %4365 = vmatprep.subr.mxu0 0.0
        %4366 = vmatpush2.msra.mxu0 0.0
        %4367 = vmatprep.subr.mxu0 0.0
        %4368 = vmatpush2.msra.mxu0 0.0
        %4369 = vmatprep.subr.mxu0 0.0
        %4370 = vmatpush2.msra.mxu0 0.0
        %4371 = vmatprep.subr.mxu0 0.0
        %4372 = vmatpush2.msra.mxu0 0.0
        %4373 = vmatprep.mubr.f32.mxu0 0.0
        %4374 = vmatmul.mubr.f32.gmra.mxu0 %v4307
        %v4375 = vpop.f32.mrf.mxu0
        %v4376 = vadd.f32 0.0, %v4375
        %v4377 = vpop.f32.mrf.mxu0
        %4378 = vdwg.mxu0
        %v4380 = vsel %vm1630, %v4153, 0
        %4382 = vmatprep.subr.mxu0 0.0
        %4383 = vmatpush1.msra.mxu0 0.0
        %4384 = vmatprep.subr.mxu0 0.0
        %4385 = vmatpush1.msra.mxu0 0.0
        %4386 = vmatprep.subr.mxu0 0.0
        %4387 = vmatpush1.msra.mxu0 0.0
        %4388 = vmatprep.subr.mxu0 0.0
        %4389 = vmatpush1.msra.mxu0 0.0
        %4390 = vmatprep.subr.mxu0 0.0
        %4391 = vmatpush1.msra.mxu0 0.0
        %4392 = vmatprep.subr.mxu0 0.0
        %4393 = vmatpush1.msra.mxu0 0.0
        %4394 = vmatprep.subr.mxu0 0.0
        %4395 = vmatpush1.msra.mxu0 0.0
        %4396 = vmatprep.subr.mxu0 0.0
        %4397 = vmatpush1.msra.mxu0 0.0
        %4398 = vmatprep.subr.mxu0 0.0
        %4399 = vmatpush1.msra.mxu0 0.0
        %4400 = vmatprep.subr.mxu0 0.0
        %4401 = vmatpush1.msra.mxu0 0.0
        %4402 = vmatprep.subr.mxu0 0.0
        %4403 = vmatpush1.msra.mxu0 0.0
        %4404 = vmatprep.subr.mxu0 0.0
        %4405 = vmatpush1.msra.mxu0 0.0
        %4406 = vmatprep.subr.mxu0 0.0
        %4407 = vmatpush1.msra.mxu0 0.0
        %4408 = vmatprep.subr.mxu0 0.0
        %4409 = vmatpush1.msra.mxu0 0.0
        %4410 = vmatprep.subr.mxu0 0.0
        %4411 = vmatpush1.msra.mxu0 0.0
        %4412 = vmatprep.subr.mxu0 0.0
        %4413 = vmatpush1.msra.mxu0 %v4159
        %4414 = vmatprep.subr.mxu0 0.0
        %4415 = vmatpush2.msra.mxu0 0.0
        %4416 = vmatprep.subr.mxu0 0.0
        %4417 = vmatpush2.msra.mxu0 0.0
        %4418 = vmatprep.subr.mxu0 0.0
        %4419 = vmatpush2.msra.mxu0 0.0
        %4420 = vmatprep.subr.mxu0 0.0
        %4421 = vmatpush2.msra.mxu0 0.0
        %4422 = vmatprep.subr.mxu0 0.0
        %4423 = vmatpush2.msra.mxu0 0.0
        %4424 = vmatprep.subr.mxu0 0.0
        %4425 = vmatpush2.msra.mxu0 0.0
        %4426 = vmatprep.subr.mxu0 0.0
        %4427 = vmatpush2.msra.mxu0 0.0
        %4428 = vmatprep.subr.mxu0 0.0
        %4429 = vmatpush2.msra.mxu0 0.0
        %4430 = vmatprep.subr.mxu0 0.0
        %4431 = vmatpush2.msra.mxu0 0.0
        %4432 = vmatprep.subr.mxu0 0.0
        %4433 = vmatpush2.msra.mxu0 0.0
        %4434 = vmatprep.subr.mxu0 0.0
        %4435 = vmatpush2.msra.mxu0 0.0
        %4436 = vmatprep.subr.mxu0 0.0
        %4437 = vmatpush2.msra.mxu0 0.0
        %4438 = vmatprep.subr.mxu0 0.0
        %4439 = vmatpush2.msra.mxu0 0.0
        %4440 = vmatprep.subr.mxu0 0.0
        %4441 = vmatpush2.msra.mxu0 0.0
        %4442 = vmatprep.subr.mxu0 0.0
        %4443 = vmatpush2.msra.mxu0 0.0
        %4444 = vmatprep.subr.mxu0 0.0
        %4445 = vmatpush2.msra.mxu0 0.0
        %4446 = vmatprep.mubr.f32.mxu0 0.0
        %4447 = vmatmul.mubr.f32.gmra.mxu0 %v4380
        %v4448 = vpop.f32.mrf.mxu0
        %v4449 = vadd.f32 0.0, %v4448
        %v4450 = vpop.f32.mrf.mxu0
        %4451 = vdwg.mxu0
        %v4452 = vsel %vm750, %v4230, 0.0
        %v4453 = vsel %vm750, %v4303, 0.0
        %v4454 = vadd.f32 %v4452, %v4453
        %v4455 = vsel %vm750, %v4376, 0.0
        %v4456 = vadd.f32 %v4454, %v4455
        %v4457 = vsel %vm750, %v4449, 0.0
        %v4458 = vadd.f32 %v4456, %v4457
        %v4459 = vadd.f32 %v4458, %v2609
        %v4460 = vsel %vm750, %v4459, 0.0
        %4461 = vadd.xlane.f32.xlu0 %v4460
        %v4462 = vpop.xlane.xlu0 %4461
        %v4463 = vmul.f32 %v4462, 0.03125
        %v4464 = vsub.f32 %v4459, %v4463
        %v4465 = vmul.f32 %v4464, %v4464
        %v4466 = vsel %vm750, %v4465, 0.0
        %4467 = vadd.xlane.f32.xlu0 %v4466
        %v4468 = vpop.xlane.xlu0 %4467
        %v4469 = vmul.f32 %v4468, 0.03125
        %v4470 = vadd.f32 %v4469, 1e-06
        %v4471 = vrsqrt.pop %v4470
        %v4472 = vmul.f32 %v4464, %v4471
        %v4473 = vld [vmem:[%s14] sm:$0x1]
        %v4475 = vlaneseq
        %v4476 = vshrl.u32 %v4475, 7
        %v4477 = vsub.s32 0, %v4476
        %v4478 = vrot.slane %v4473, %v4477
        %v4480 = vmul.f32 %v4472, %v4478
        %v4481 = vld [vmem:[%s15] sm:$0x1]
        %v4483 = vlaneseq
        %v4484 = vshrl.u32 %v4483, 7
        %v4485 = vsub.s32 0, %v4484
        %v4486 = vrot.slane %v4481, %v4485
        %v4488 = vadd.f32 %v4480, %v4486
        %v4489 = vld [vmem:[%s16] sm:$0xff]
        %v4490 = vld [vmem:[%s16 + $0x8] sm:$0xff]
        %v4491 = vld [vmem:[%s16 + $0x10] sm:$0xff]
        %v4492 = vld [vmem:[%s16 + $0x18] sm:$0xff]
        %v4493 = vld [vmem:[%s17] sm:$0x1]
        %v4495 = vlaneseq
        %v4496 = vshrl.u32 %v4495, 7
        %v4497 = vsub.s32 0, %v4496
        %v4498 = vrot.slane %v4493, %v4497
        %v4501 = vsel %vm750, %v4488, 0
        %4503 = vmatprep.subr.mxu0 0.0
        %4504 = vmatpush1.msra.mxu0 0.0
        %4505 = vmatprep.subr.mxu0 0.0
        %4506 = vmatpush1.msra.mxu0 0.0
        %4507 = vmatprep.subr.mxu0 0.0
        %4508 = vmatpush1.msra.mxu0 0.0
        %4509 = vmatprep.subr.mxu0 0.0
        %4510 = vmatpush1.msra.mxu0 0.0
        %4511 = vmatprep.subr.mxu0 0.0
        %4512 = vmatpush1.msra.mxu0 0.0
        %4513 = vmatprep.subr.mxu0 0.0
        %4514 = vmatpush1.msra.mxu0 0.0
        %4515 = vmatprep.subr.mxu0 0.0
        %4516 = vmatpush1.msra.mxu0 0.0
        %4517 = vmatprep.subr.mxu0 0.0
        %4518 = vmatpush1.msra.mxu0 0.0
        %4519 = vmatprep.subr.mxu0 0.0
        %4520 = vmatpush1.msra.mxu0 0.0
        %4521 = vmatprep.subr.mxu0 0.0
        %4522 = vmatpush1.msra.mxu0 0.0
        %4523 = vmatprep.subr.mxu0 0.0
        %4524 = vmatpush1.msra.mxu0 0.0
        %4525 = vmatprep.subr.mxu0 0.0
        %4526 = vmatpush1.msra.mxu0 0.0
        %4527 = vmatprep.subr.mxu0 0.0
        %4528 = vmatpush1.msra.mxu0 %v4492
        %4529 = vmatprep.subr.mxu0 0.0
        %4530 = vmatpush1.msra.mxu0 %v4491
        %4531 = vmatprep.subr.mxu0 0.0
        %4532 = vmatpush1.msra.mxu0 %v4490
        %4533 = vmatprep.subr.mxu0 0.0
        %4534 = vmatpush1.msra.mxu0 %v4489
        %4535 = vmatprep.subr.mxu0 0.0
        %4536 = vmatpush2.msra.mxu0 0.0
        %4537 = vmatprep.subr.mxu0 0.0
        %4538 = vmatpush2.msra.mxu0 0.0
        %4539 = vmatprep.subr.mxu0 0.0
        %4540 = vmatpush2.msra.mxu0 0.0
        %4541 = vmatprep.subr.mxu0 0.0
        %4542 = vmatpush2.msra.mxu0 0.0
        %4543 = vmatprep.subr.mxu0 0.0
        %4544 = vmatpush2.msra.mxu0 0.0
        %4545 = vmatprep.subr.mxu0 0.0
        %4546 = vmatpush2.msra.mxu0 0.0
        %4547 = vmatprep.subr.mxu0 0.0
        %4548 = vmatpush2.msra.mxu0 0.0
        %4549 = vmatprep.subr.mxu0 0.0
        %4550 = vmatpush2.msra.mxu0 0.0
        %4551 = vmatprep.subr.mxu0 0.0
        %4552 = vmatpush2.msra.mxu0 0.0
        %4553 = vmatprep.subr.mxu0 0.0
        %4554 = vmatpush2.msra.mxu0 0.0
        %4555 = vmatprep.subr.mxu0 0.0
        %4556 = vmatpush2.msra.mxu0 0.0
        %4557 = vmatprep.subr.mxu0 0.0
        %4558 = vmatpush2.msra.mxu0 0.0
        %4559 = vmatprep.subr.mxu0 0.0
        %4560 = vmatpush2.msra.mxu0 0.0
        %4561 = vmatprep.subr.mxu0 0.0
        %4562 = vmatpush2.msra.mxu0 0.0
        %4563 = vmatprep.subr.mxu0 0.0
        %4564 = vmatpush2.msra.mxu0 0.0
        %4565 = vmatprep.subr.mxu0 0.0
        %4566 = vmatpush2.msra.mxu0 0.0
        %4567 = vmatprep.mubr.f32.mxu0 0.0
        %4568 = vmatmul.mubr.f32.gmra.mxu0 %v4501
        %v4569 = vpop.f32.mrf.mxu0
        %v4570 = vadd.f32 %v4498, %v4569
        %v4571 = vpop.f32.mrf.mxu0
        %4572 = vdwg.mxu0
        %v4573 = vmax.f32 %v4570, 0.0
        %v4574 = vld [vmem:[%s18] sm:$0xff]
        %v4575 = vld [vmem:[%s18 + $0x8] sm:$0xff]
        %v4576 = vld [vmem:[%s18 + $0x10] sm:$0xff]
        %v4577 = vld [vmem:[%s18 + $0x18] sm:$0xff]
        %v4578 = vld [vmem:[%s18 + $0x20] sm:$0xff]
        %v4579 = vld [vmem:[%s18 + $0x28] sm:$0xff]
        %v4580 = vld [vmem:[%s18 + $0x30] sm:$0xff]
        %v4581 = vld [vmem:[%s18 + $0x38] sm:$0xff]
        %v4582 = vld [vmem:[%s19] sm:$0x1]
        %v4584 = vlaneseq
        %v4585 = vshrl.u32 %v4584, 7
        %v4586 = vsub.s32 0, %v4585
        %v4587 = vrot.slane %v4582, %v4586
        %vm4589 = vcmask 523264
        %v4591 = vsel %vm4589, %v4573, 0
        %4593 = vmatprep.subr.mxu0 0.0
        %4594 = vmatpush1.msra.mxu0 0.0
        %4595 = vmatprep.subr.mxu0 0.0
        %4596 = vmatpush1.msra.mxu0 0.0
        %4597 = vmatprep.subr.mxu0 0.0
        %4598 = vmatpush1.msra.mxu0 0.0
        %4599 = vmatprep.subr.mxu0 0.0
        %4600 = vmatpush1.msra.mxu0 0.0
        %4601 = vmatprep.subr.mxu0 0.0
        %4602 = vmatpush1.msra.mxu0 0.0
        %4603 = vmatprep.subr.mxu0 0.0
        %4604 = vmatpush1.msra.mxu0 0.0
        %4605 = vmatprep.subr.mxu0 0.0
        %4606 = vmatpush1.msra.mxu0 0.0
        %4607 = vmatprep.subr.mxu0 0.0
        %4608 = vmatpush1.msra.mxu0 0.0
        %4609 = vmatprep.subr.mxu0 0.0
        %4610 = vmatpush1.msra.mxu0 %v4581
        %4611 = vmatprep.subr.mxu0 0.0
        %4612 = vmatpush1.msra.mxu0 %v4580
        %4613 = vmatprep.subr.mxu0 0.0
        %4614 = vmatpush1.msra.mxu0 %v4579
        %4615 = vmatprep.subr.mxu0 0.0
        %4616 = vmatpush1.msra.mxu0 %v4578
        %4617 = vmatprep.subr.mxu0 0.0
        %4618 = vmatpush1.msra.mxu0 %v4577
        %4619 = vmatprep.subr.mxu0 0.0
        %4620 = vmatpush1.msra.mxu0 %v4576
        %4621 = vmatprep.subr.mxu0 0.0
        %4622 = vmatpush1.msra.mxu0 %v4575
        %4623 = vmatprep.subr.mxu0 0.0
        %4624 = vmatpush1.msra.mxu0 %v4574
        %4625 = vmatprep.subr.mxu0 0.0
        %4626 = vmatpush2.msra.mxu0 0.0
        %4627 = vmatprep.subr.mxu0 0.0
        %4628 = vmatpush2.msra.mxu0 0.0
        %4629 = vmatprep.subr.mxu0 0.0
        %4630 = vmatpush2.msra.mxu0 0.0
        %4631 = vmatprep.subr.mxu0 0.0
        %4632 = vmatpush2.msra.mxu0 0.0
        %4633 = vmatprep.subr.mxu0 0.0
        %4634 = vmatpush2.msra.mxu0 0.0
        %4635 = vmatprep.subr.mxu0 0.0
        %4636 = vmatpush2.msra.mxu0 0.0
        %4637 = vmatprep.subr.mxu0 0.0
        %4638 = vmatpush2.msra.mxu0 0.0
        %4639 = vmatprep.subr.mxu0 0.0
        %4640 = vmatpush2.msra.mxu0 0.0
        %4641 = vmatprep.subr.mxu0 0.0
        %4642 = vmatpush2.msra.mxu0 0.0
        %4643 = vmatprep.subr.mxu0 0.0
        %4644 = vmatpush2.msra.mxu0 0.0
        %4645 = vmatprep.subr.mxu0 0.0
        %4646 = vmatpush2.msra.mxu0 0.0
        %4647 = vmatprep.subr.mxu0 0.0
        %4648 = vmatpush2.msra.mxu0 0.0
        %4649 = vmatprep.subr.mxu0 0.0
        %4650 = vmatpush2.msra.mxu0 0.0
        %4651 = vmatprep.subr.mxu0 0.0
        %4652 = vmatpush2.msra.mxu0 0.0
        %4653 = vmatprep.subr.mxu0 0.0
        %4654 = vmatpush2.msra.mxu0 0.0
        %4655 = vmatprep.subr.mxu0 0.0
        %4656 = vmatpush2.msra.mxu0 0.0
        %4657 = vmatprep.mubr.f32.mxu0 0.0
        %4658 = vmatmul.mubr.f32.gmra.mxu0 %v4591
        %v4659 = vpop.f32.mrf.mxu0
        %v4660 = vadd.f32 %v4587, %v4659
        %v4661 = vpop.f32.mrf.mxu0
        %4662 = vdwg.mxu0
        %v4663 = vadd.f32 %v4660, %v4488
        %v4664 = vsel %vm750, %v4663, 0.0
        %4665 = vadd.xlane.f32.xlu0 %v4664
        %v4666 = vpop.xlane.xlu0 %4665
        %v4667 = vmul.f32 %v4666, 0.03125
        %v4668 = vsub.f32 %v4663, %v4667
        %v4669 = vmul.f32 %v4668, %v4668
        %v4670 = vsel %vm750, %v4669, 0.0
        %4671 = vadd.xlane.f32.xlu0 %v4670
        %v4672 = vpop.xlane.xlu0 %4671
        %v4673 = vmul.f32 %v4672, 0.03125
        %v4674 = vadd.f32 %v4673, 1e-06
        %v4675 = vrsqrt.pop %v4674
        %v4676 = vmul.f32 %v4668, %v4675
        %v4677 = vld [vmem:[%s20] sm:$0x1]
        %v4679 = vlaneseq
        %v4680 = vshrl.u32 %v4679, 7
        %v4681 = vsub.s32 0, %v4680
        %v4682 = vrot.slane %v4677, %v4681
        %v4684 = vmul.f32 %v4676, %v4682
        %v4685 = vld [vmem:[%s21] sm:$0x1]
        %v4687 = vlaneseq
        %v4688 = vshrl.u32 %v4687, 7
        %v4689 = vsub.s32 0, %v4688
        %v4690 = vrot.slane %v4685, %v4689
        %v4692 = vadd.f32 %v4684, %v4690
        %4693 = vst.msk [vmem:[%s713] sm:$0xff] %vm750, %v4692
        %s4694 = sand.u32 %s526, 1
        %s4695 = scalar_lea.sflag [#allocation3], %s4694
        %s4696 = sand.u32 %s526, 1
        %s4697 = smul.addr %s4696, 8
        %s4698 = scalar_lea.vmem [#allocation2], %s4697
        // Predicated region
        $region109: #{tpu_custom_call.1} parent=107 // pred_check
          %p4699 = pneg %p536
        $region110: #{tpu_custom_call.1} parent=107 // pred_check_branch
          %4701 = sbr.rel (%p4699) target = $region112
        $region111: #{tpu_custom_call.1} parent=107 // pred_region
          %s4703 = ssub.s32 128, 128
          %4704 = vsyncadd %s4695, %s4703
          %s4705 = smul.addr %s36, 128
          %s4706 = scalar_lea.hbm %s22, %s4705
          %s4708 = sshll.u32 %s4698, 4
          %s4709 = int_to_ptr.vmem [resolvable:$true] %s4708
          %4711 = dma.vmem_to_hbm [thread:$0]  %s4709, 128, %s4706, %s4695
        $region112: #{tpu_custom_call.1} parent=107 // pred_fallthru
          _
      $region108: #{tpu_custom_call.1} parent=5 // pred_fallthru
        _
      %p4712 = scmp.le.s32.totalorder 2, %s31
      // Predicated region
      $region113: #{tpu_custom_call.1} parent=5 // pred_check
        %p4713 = pneg %p4712
      $region114: #{tpu_custom_call.1} parent=5 // pred_check_branch
        %4715 = sbr.rel (%p4713) target = $region116
      $region115: #{tpu_custom_call.1} parent=5 // pred_region
        %s4716 = ssub.s32 %s31, 2
        // Predicated region
        $region117: #{tpu_custom_call.1} parent=115 // pred_check
          %p4717 = pneg %p542
        $region118: #{tpu_custom_call.1} parent=115 // pred_check_branch
          %4719 = sbr.rel (%p4717) target = $region120
        $region119: #{tpu_custom_call.1} parent=115 // pred_region
          %s4720 = sand.u32 %s527, 1
          %s4721 = scalar_lea.sflag [#allocation3], %s4720
          %s4722 = sand.u32 %s527, 1
          %s4723 = smul.addr %s4722, 8
          %s4724 = scalar_lea.vmem [#allocation2], %s4723
          %4725 = dma.done %s4721, 128
        $region120: #{tpu_custom_call.1} parent=115 // pred_fallthru
          _
      $region116: #{tpu_custom_call.1} parent=5 // pred_fallthru
        _
    $region6: #{tpu_custom_call.1} parent=1 // loop_footer
      %s35 = sadd.s32 1, %s31
    $region7: #{tpu_custom_call.1} parent=1 // loop_footer_branch
      %30 = sbr.rel target = $region3
    $region8: #{tpu_custom_call.1} parent=1 // loop_exit
      _
    %4726 = vsyncpa [#allocation3], 1
    %s4727 = scalar_lea.sflag [#allocation3], 1
    %4728 = vsyncpa %s4727, 1

</llo_original>
